<compile_context>
chip_gen: v5e
topology: v5e:2x2
jax: 0.10.0
libtpu: 0.0.40
codegen_flags: <defaults>
</compile_context>

<pallas_src>
import functools

import jax
import jax.numpy as jnp
from jax.experimental import pallas as pl
from jax.experimental.pallas import tpu as pltpu


_CHUNK = 640      # pixel lanes per grid step (multiple of 128)
_LANE = 128
_SUBLANE = 8


# ------------------------------- fused Pallas kernel --------------------------------

def _coordconv_fused_kernel(x_ref, w_lc_ref, b_lc_ref, w_row_ref, b_conv_ref,
                            o_ref, y_ref, *, width, kh, kw, chunk, n_chunks, slab_w):
    """Grid step (b, k): LC-1x1 for pixel chunk k, 3x3 VALID conv for chunk k-1.

    x_ref:      (1, C_in, chunk)        real input channels for chunk k
    w_lc_ref:   (C_in, C_pad, chunk)    per-pixel 1x1 weights (coord rows folded away)
    b_lc_ref:   (C_pad, chunk)          effective LC bias (coord channels folded in)
    w_row_ref:  (KH, C_out, KW*C_pad)   conv weights, taps of each row stacked along K
    b_conv_ref: (C_out, 1)              conv bias
    o_ref:      (1, C_out, chunk)       dense conv output for chunk k-1 (lane-dense)
    y_ref:      VMEM scratch (C_pad, n_chunks*chunk + halo) holding the LC activation
    """
    k = pl.program_id(1)
    c_in = x_ref.shape[1]
    c_pad = y_ref.shape[0]
    p_in = n_chunks * chunk

    # Zero only the lane halo tail once per batch element; the C_pad pad rows and the
    # padded pixel lanes come out zero from stage 1 because w_lc / b_lc / x were
    # zero-padded at prep time (saves the former full-scratch zeroing).
    @pl.when(k == 0)
    def _():
        y_ref[:, p_in:] = jnp.zeros((c_pad, slab_w - chunk), y_ref.dtype)

    # ---- stage 1: per-pixel 1x1 locally-connected layer (VPU MACs) for chunk k.
    #      (c_pad, chunk) accumulator stays register resident; store is tile-aligned.
    @pl.when(k < n_chunks)
    def _():
        acc = b_lc_ref[...]                                   # (c_pad, chunk)
        for ci in range(c_in):                                # static, c_in == 5
            acc = acc + w_lc_ref[ci] * x_ref[:, ci, :]        # sublane-broadcast MAC
        start = pl.multiple_of(k * chunk, chunk)
        y_ref[:, pl.ds(start, chunk)] = acc

    # ---- stage 2: VALID KHxKW conv for chunk k-1.  Its flat halo of (KH-1)*W + KW-1
    #      lanes was produced by stage 1 of THIS step, so y is fully available.
    #      One lane-aligned slab read per chunk; the taps are value slices of it, the
    #      KW taps of each kernel row stacked along the contraction dim -> KH matmuls
    #      of K = KW * C_pad instead of KH*KW misaligned K=C_pad matmuls.
    @pl.when(k >= 1)
    def _():
        c0 = pl.multiple_of((k - 1) * chunk, chunk)
        slab = y_ref[:, pl.ds(c0, slab_w)]                    # (c_pad, slab_w), aligned
        acc = None
        for dh in range(kh):                                  # static, 3 iterations
            base = dh * width
            row_op = jnp.concatenate(
                [slab[:, base + dw: base + dw + chunk] for dw in range(kw)], axis=0)
            part = jnp.dot(w_row_ref[dh], row_op,             # (c_out, K) @ (K, chunk)
                           preferred_element_type=jnp.float32,
                           precision=jax.lax.Precision.HIGHEST)
            acc = part if acc is None else acc + part
        o_ref[0, :, :] = (acc + b_conv_ref[...]).astype(o_ref.dtype)


# ------------------------------- param prep + wrapper --------------------------------

def prepare_params(params, *, input_channels, input_size, chunk=_CHUNK):
    """One-time parameter prep (exact rewrites of the PyTorch parameters):
       * fold the constant coordinate channels into the LocallyConnected bias,
       * pad channels to the sublane tile (14 -> 16) and pixels to a chunk multiple,
       * lay the Conv2d weights out row-stacked as (KH, C_out, KW*C_pad) matmul LHS."""
    H, W = input_size
    P = H * W
    c_in = input_channels
    w_lc = params["w_lc"].astype(jnp.float32)                   # (c_in+2, C_mid, P)
    b_lc = params["b_lc"].astype(jnp.float32)                   # (C_mid, P)
    c_mid = b_lc.shape[0]

    # batch>1 CoordConv path: channel c_in varies along H, channel c_in+1 along W.
    ii = jnp.arange(H, dtype=jnp.float32) / (H - 1) * 2.0 - 1.0
    jj = jnp.arange(W, dtype=jnp.float32) / (W - 1) * 2.0 - 1.0
    xx = jnp.broadcast_to(ii[:, None], (H, W)).reshape(P)
    yy = jnp.broadcast_to(jj[None, :], (H, W)).reshape(P)
    b_eff = b_lc + w_lc[c_in] * xx[None, :] + w_lc[c_in + 1] * yy[None, :]

    p_in = -(-P // chunk) * chunk
    c_pad = -(-c_mid // _SUBLANE) * _SUBLANE
    pad_p = p_in - P
    pad_c = c_pad - c_mid
    w_real = jnp.pad(w_lc[:c_in], ((0, 0), (0, pad_c), (0, pad_p)))   # (c_in, c_pad, p_in)
    b_eff = jnp.pad(b_eff, ((0, pad_c), (0, pad_p)))                  # (c_pad, p_in)

    w_conv = params["w_conv"].astype(jnp.float32)                # (C_out, C_mid, KH, KW)
    c_out, _, KH, KW = w_conv.shape
    w_conv_p = jnp.pad(w_conv, ((0, 0), (0, pad_c), (0, 0), (0, 0)))
    # Row-stacked conv weights: column dw*c_pad + c multiplies y[c, p + dh*W + dw].
    w_rows = jnp.stack(
        [jnp.concatenate([w_conv_p[:, :, dh, dw] for dw in range(KW)], axis=1)
         for dh in range(KH)], axis=0)                           # (KH, C_out, KW*c_pad)
    b_conv = params["b_conv"].astype(jnp.float32).reshape(c_out, 1)

    return {"w_lc": w_real, "b_lc": b_eff, "w_rows": w_rows, "b_conv": b_conv}


def coordconv_forward(x, prepped, *, kernel_size, strides, chunk=_CHUNK):
    B, c_in, H, W = x.shape
    P = H * W
    KH, KW = kernel_size
    SH, SW = strides

    c_pad, p_in = prepped["b_lc"].shape
    kh, c_out, kcp = prepped["w_rows"].shape
    assert kh == KH and kcp == KW * c_pad
    assert p_in % chunk == 0 and chunk % _LANE == 0 and p_in >= P
    n_chunks = p_in // chunk
    last = n_chunks - 1

    halo = (KH - 1) * W + (KW - 1)                      # largest flat tap offset
    slab_w = chunk + (-(-halo // _LANE)) * _LANE        # lane-aligned stage-2 read width

    x_flat = jnp.pad(x.reshape(B, c_in, P), ((0, 0), (0, 0), (0, p_in - P)))

    kernel = functools.partial(_coordconv_fused_kernel, width=W, kh=KH, kw=KW,
                               chunk=chunk, n_chunks=n_chunks, slab_w=slab_w)
    out_flat = pl.pallas_call(
        kernel,
        out_shape=jax.ShapeDtypeStruct((B, c_out, p_in), jnp.float32),
        grid=(B, n_chunks + 1),                          # delay-by-one: conv lags LC by 1
        in_specs=[
            pl.BlockSpec((1, c_in, chunk),
                         lambda b, k: (b, 0, jnp.minimum(k, last))),     # x chunk
            pl.BlockSpec((c_in, c_pad, chunk),
                         lambda b, k: (0, 0, jnp.minimum(k, last))),     # LC weights chunk
            pl.BlockSpec((c_pad, chunk),
                         lambda b, k: (0, jnp.minimum(k, last))),        # LC eff. bias chunk
            pl.BlockSpec((KH, c_out, kcp), lambda b, k: (0, 0, 0)),      # conv row taps
            pl.BlockSpec((c_out, 1), lambda b, k: (0, 0)),               # conv bias
        ],
        out_specs=pl.BlockSpec((1, c_out, chunk),
                               lambda b, k: (b, 0, jnp.maximum(k - 1, 0))),
        scratch_shapes=[pltpu.VMEM((c_pad, p_in + slab_w - chunk), jnp.float32)],
        compiler_params=pltpu.CompilerParams(
            dimension_semantics=("parallel", "arbitrary")),
    )(x_flat, prepped["w_lc"], prepped["b_lc"], prepped["w_rows"], prepped["b_conv"])

    OH = (H - KH) // SH + 1
    OW = (W - KW) // SW + 1
    out = out_flat[:, :, :P].reshape(B, c_out, H, W)     # already NCHW-flat, lane-dense
    # TODO(synk): for strides > 1 this computes the dense HxW output and slices on the
    #             host; shrink the stage-2 store region if strided configs ever matter.
    return out[:, :, :OH * SH:SH, :OW * SW:SW]


# --------------------------------- pure-JAX reference --------------------------------

def _add_coord_channels(x):
    """Batch>1 path of CoordConv.forward: xx varies along dim 2 (H), yy along dim 3 (W)."""
    B, _, H, W = x.shape
    ii = jnp.arange(H, dtype=jnp.float32) / (H - 1) * 2.0 - 1.0
    jj = jnp.arange(W, dtype=jnp.float32) / (W - 1) * 2.0 - 1.0
    xx = jnp.broadcast_to(jnp.broadcast_to(ii[:, None], (H, W))[None, None], (B, 1, H, W))
    yy = jnp.broadcast_to(jnp.broadcast_to(jj[None, :], (H, W))[None, None], (B, 1, H, W))
    return jnp.concatenate([x, xx, yy], axis=1)


def coordconv_reference(x, params, kernel_size, strides):
    """Reference on the ORIGINAL (unprepared) parameters — also validates coord folding."""
    B, C, H, W = x.shape
    x_aug = _add_coord_channels(x)
    C1 = C + 2
    xf = x_aug.reshape(B, C1, H * W)
    y = jnp.einsum("icp,bip->bcp", params["w_lc"], xf,
                   precision=jax.lax.Precision.HIGHEST) + params["b_lc"][None]
    C2 = params["w_lc"].shape[1]
    y = y.reshape(B, C2, H, W)
    out = jax.lax.conv_general_dilated(
        y, params["w_conv"], window_strides=strides, padding="VALID",
        dimension_numbers=("NCHW", "OIHW", "NCHW"),
        precision=jax.lax.Precision.HIGHEST)
    return out + params["b_conv"][None, :, None, None]


# --------------------------------------- main ----------------------------------------

if __name__ == "__main__":
    B = 2
    input_channels = 5            # conv1 hardcodes 7 = input_channels + 2
    num_channels = 8
    input_size = (60, 60)         # conv1 hardcodes the (60, 60) grid
    kernel_size = (3, 3)
    strides = (1, 1)

    H, W = input_size
    C1 = input_channels + 2       # 7  (LocallyConnected2d input channels)
    C2 = 2 * C1                   # 14 (LocallyConnected2d output channels)

    key = jax.random.PRNGKey(0)
    kx, k1, k2, k3, k4 = jax.random.split(key, 5)
    x = jax.random.normal(kx, (B, input_channels, H, W), dtype=jnp.float32)
    params = {
        # per-pixel 1x1 weights of the LocallyConnected2d layer: w_lc[ci, co, pixel]
        "w_lc": 0.1 * jax.random.normal(k1, (C1, C2, H * W), dtype=jnp.float32),
        "b_lc": 0.1 * jax.random.normal(k2, (C2, H * W), dtype=jnp.float32),
        # standard Conv2d weights (OIHW) and bias
        "w_conv": 0.1 * jax.random.normal(k3, (num_channels, C2, *kernel_size), dtype=jnp.float32),
        "b_conv": 0.1 * jax.random.normal(k4, (num_channels,), dtype=jnp.float32),
    }

    prepped = prepare_params(params, input_channels=input_channels, input_size=input_size)
    fwd = jax.jit(functools.partial(coordconv_forward,
                                    kernel_size=kernel_size, strides=strides))
    out = jax.block_until_ready(fwd(x, prepped))

    ref = jax.block_until_ready(coordconv_reference(x, params, kernel_size, strides))

    OH = (H - kernel_size[0]) // strides[0] + 1
    OW = (W - kernel_size[1]) // strides[1] + 1
    assert out.shape == (B, num_channels, OH, OW), out.shape
    err = float(jnp.max(jnp.abs(out - ref)))
    # Stage 1 is exact f32 VPU math and stage 2 uses precision=HIGHEST on the MXU, so the
    # remaining difference vs the f32 reference is summation-order level (~1e-5);
    # structural/indexing bugs would produce O(0.1 .. 1) errors.
    assert err < 1e-3, f"max abs error too large: {err}"
    print("KERNEL_OK")
</pallas_src>

<mosaic_0001>
module attributes {stable_mosaic.version = 11 : i64} {
  func.func @_coordconv_fused_kernel(%arg0: i32, %arg1: i32, %arg2: memref<1x5x640xf32, #tpu.memory_space<vmem>>, %arg3: memref<5x16x640xf32, #tpu.memory_space<vmem>>, %arg4: memref<16x640xf32, #tpu.memory_space<vmem>>, %arg5: memref<3x8x48xf32, #tpu.memory_space<vmem>>, %arg6: memref<8x1xf32, #tpu.memory_space<vmem>>, %arg7: memref<1x8x640xf32, #tpu.memory_space<vmem>>, %arg8: memref<16x3968xf32, #tpu.memory_space<vmem>>) attributes {dimension_semantics = [#tpu.dimension_semantics<parallel>, #tpu.dimension_semantics<arbitrary>], iteration_bounds = array<i64: 2, 7>, scalar_prefetch = 0 : i64, scratch_operands = 1 : i64, tpu.core_type = #tpu.core_type<tc>, window_params = [{transform_indices = @transform_0, window_bounds = array<i64: 1, 5, 640>}, {transform_indices = @transform_1, window_bounds = array<i64: 5, 16, 640>}, {transform_indices = @transform_2, window_bounds = array<i64: 16, 640>}, {pipeline_mode = #tpu.pipeline_mode<synchronous>, transform_indices = @transform_3, window_bounds = array<i64: 3, 8, 48>}, {pipeline_mode = #tpu.pipeline_mode<synchronous>, transform_indices = @transform_4, window_bounds = array<i64: 8, 1>}, {transform_indices = @transform_5, window_bounds = array<i64: 1, 8, 640>}]} {
    %c0_i32 = arith.constant 0 : i32
    %0 = arith.cmpi eq, %arg1, %c0_i32 : i32
    %1 = arith.extui %0 : i1 to i32
    %c0_i32_0 = arith.constant 0 : i32
    %2 = arith.cmpi ne, %1, %c0_i32_0 : i32
    scf.if %2 {
      %cst = arith.constant 0.000000e+00 : f32
      %9 = vector.broadcast %cst : f32 to vector<16x128xf32>
      %c0 = arith.constant 0 : index
      %c3840 = arith.constant 3840 : index
      %10 = vector.load %arg8[%c0, %c3840] : memref<16x3968xf32, #tpu.memory_space<vmem>>, vector<16x128xf32>
      tpu.vector_store %arg8[%c0, %c3840], %9 {strides = array<i32>} : memref<16x3968xf32, #tpu.memory_space<vmem>>, vector<16x128xf32>,
    } else {
    }
    %c6_i32 = arith.constant 6 : i32
    %3 = arith.cmpi slt, %arg1, %c6_i32 : i32
    %4 = arith.extui %3 : i1 to i32
    %c0_i32_1 = arith.constant 0 : i32
    %5 = arith.cmpi ne, %4, %c0_i32_1 : i32
    scf.if %5 {
      %c0 = arith.constant 0 : index
      %c0_3 = arith.constant 0 : index
      %9 = vector.load %arg4[%c0, %c0_3] : memref<16x640xf32, #tpu.memory_space<vmem>>, vector<16x640xf32>
      %c0_4 = arith.constant 0 : index
      %c0_5 = arith.constant 0 : index
      %c0_6 = arith.constant 0 : index
      %10 = vector.load %arg3[%c0_4, %c0_5, %c0_6] : memref<5x16x640xf32, #tpu.memory_space<vmem>>, vector<1x16x640xf32>
      %11 = vector.shape_cast %10 : vector<1x16x640xf32> to vector<16x640xf32>
      %c0_7 = arith.constant 0 : index
      %c0_8 = arith.constant 0 : index
      %c0_9 = arith.constant 0 : index
      %12 = vector.load %arg2[%c0_7, %c0_8, %c0_9] : memref<1x5x640xf32, #tpu.memory_space<vmem>>, vector<1x1x640xf32>
      %13 = vector.shape_cast %12 : vector<1x1x640xf32> to vector<1x640xf32>
      %14 = vector.broadcast %13 : vector<1x640xf32> to vector<16x640xf32>
      %15 = arith.mulf %11, %14 : vector<16x640xf32>
      %16 = arith.addf %9, %15 : vector<16x640xf32>
      %c1 = arith.constant 1 : index
      %c0_10 = arith.constant 0 : index
      %c0_11 = arith.constant 0 : index
      %17 = vector.load %arg3[%c1, %c0_10, %c0_11] : memref<5x16x640xf32, #tpu.memory_space<vmem>>, vector<1x16x640xf32>
      %18 = vector.shape_cast %17 : vector<1x16x640xf32> to vector<16x640xf32>
      %c0_12 = arith.constant 0 : index
      %c1_13 = arith.constant 1 : index
      %c0_14 = arith.constant 0 : index
      %19 = vector.load %arg2[%c0_12, %c1_13, %c0_14] : memref<1x5x640xf32, #tpu.memory_space<vmem>>, vector<1x1x640xf32>
      %20 = vector.shape_cast %19 : vector<1x1x640xf32> to vector<1x640xf32>
      %21 = vector.broadcast %20 : vector<1x640xf32> to vector<16x640xf32>
      %22 = arith.mulf %18, %21 : vector<16x640xf32>
      %23 = arith.addf %16, %22 : vector<16x640xf32>
      %c2 = arith.constant 2 : index
      %c0_15 = arith.constant 0 : index
      %c0_16 = arith.constant 0 : index
      %24 = vector.load %arg3[%c2, %c0_15, %c0_16] : memref<5x16x640xf32, #tpu.memory_space<vmem>>, vector<1x16x640xf32>
      %25 = vector.shape_cast %24 : vector<1x16x640xf32> to vector<16x640xf32>
      %c0_17 = arith.constant 0 : index
      %c2_18 = arith.constant 2 : index
      %c0_19 = arith.constant 0 : index
      %26 = vector.load %arg2[%c0_17, %c2_18, %c0_19] : memref<1x5x640xf32, #tpu.memory_space<vmem>>, vector<1x1x640xf32>
      %27 = vector.shape_cast %26 : vector<1x1x640xf32> to vector<1x640xf32>
      %28 = vector.broadcast %27 : vector<1x640xf32> to vector<16x640xf32>
      %29 = arith.mulf %25, %28 : vector<16x640xf32>
      %30 = arith.addf %23, %29 : vector<16x640xf32>
      %c3 = arith.constant 3 : index
      %c0_20 = arith.constant 0 : index
      %c0_21 = arith.constant 0 : index
      %31 = vector.load %arg3[%c3, %c0_20, %c0_21] : memref<5x16x640xf32, #tpu.memory_space<vmem>>, vector<1x16x640xf32>
      %32 = vector.shape_cast %31 : vector<1x16x640xf32> to vector<16x640xf32>
      %c0_22 = arith.constant 0 : index
      %c3_23 = arith.constant 3 : index
      %c0_24 = arith.constant 0 : index
      %33 = vector.load %arg2[%c0_22, %c3_23, %c0_24] : memref<1x5x640xf32, #tpu.memory_space<vmem>>, vector<1x1x640xf32>
      %34 = vector.shape_cast %33 : vector<1x1x640xf32> to vector<1x640xf32>
      %35 = vector.broadcast %34 : vector<1x640xf32> to vector<16x640xf32>
      %36 = arith.mulf %32, %35 : vector<16x640xf32>
      %37 = arith.addf %30, %36 : vector<16x640xf32>
      %c4 = arith.constant 4 : index
      %c0_25 = arith.constant 0 : index
      %c0_26 = arith.constant 0 : index
      %38 = vector.load %arg3[%c4, %c0_25, %c0_26] : memref<5x16x640xf32, #tpu.memory_space<vmem>>, vector<1x16x640xf32>
      %39 = vector.shape_cast %38 : vector<1x16x640xf32> to vector<16x640xf32>
      %c0_27 = arith.constant 0 : index
      %c4_28 = arith.constant 4 : index
      %c0_29 = arith.constant 0 : index
      %40 = vector.load %arg2[%c0_27, %c4_28, %c0_29] : memref<1x5x640xf32, #tpu.memory_space<vmem>>, vector<1x1x640xf32>
      %41 = vector.shape_cast %40 : vector<1x1x640xf32> to vector<1x640xf32>
      %42 = vector.broadcast %41 : vector<1x640xf32> to vector<16x640xf32>
      %43 = arith.mulf %39, %42 : vector<16x640xf32>
      %44 = arith.addf %37, %43 : vector<16x640xf32>
      %c640_i32 = arith.constant 640 : i32
      %45 = arith.muli %arg1, %c640_i32 : i32
      %46 = tpu.assume_multiple %45, 640 : i32
      %c0_30 = arith.constant 0 : index
      %47 = arith.index_cast %46 : i32 to index
      %48 = vector.load %arg8[%c0_30, %47] : memref<16x3968xf32, #tpu.memory_space<vmem>>, vector<16x640xf32>
      tpu.vector_store %arg8[%c0_30, %47], %44 {strides = array<i32>} : memref<16x3968xf32, #tpu.memory_space<vmem>>, vector<16x640xf32>,
    } else {
    }
    %c1_i32 = arith.constant 1 : i32
    %6 = arith.cmpi sge, %arg1, %c1_i32 : i32
    %7 = arith.extui %6 : i1 to i32
    %c0_i32_2 = arith.constant 0 : i32
    %8 = arith.cmpi ne, %7, %c0_i32_2 : i32
    scf.if %8 {
      %c1_i32_3 = arith.constant 1 : i32
      %9 = arith.subi %arg1, %c1_i32_3 : i32
      %c640_i32 = arith.constant 640 : i32
      %10 = arith.muli %9, %c640_i32 : i32
      %11 = tpu.assume_multiple %10, 640 : i32
      %c0 = arith.constant 0 : index
      %12 = arith.index_cast %11 : i32 to index
      %13 = vector.load %arg8[%c0, %12] : memref<16x3968xf32, #tpu.memory_space<vmem>>, vector<16x768xf32>
      %14 = vector.extract_strided_slice %13 {offsets = [0, 0], sizes = [16, 640], strides = [1, 1]} : vector<16x768xf32> to vector<16x640xf32>
      %15 = vector.extract_strided_slice %13 {offsets = [0, 1], sizes = [16, 640], strides = [1, 1]} : vector<16x768xf32> to vector<16x640xf32>
      %16 = vector.extract_strided_slice %13 {offsets = [0, 2], sizes = [16, 640], strides = [1, 1]} : vector<16x768xf32> to vector<16x640xf32>
      %17 = tpu.concatenate %14, %15, %16 in 0 : vector<16x640xf32>, vector<16x640xf32>, vector<16x640xf32> -> vector<48x640xf32>
      %c0_4 = arith.constant 0 : index
      %c0_5 = arith.constant 0 : index
      %c0_6 = arith.constant 0 : index
      %18 = vector.load %arg5[%c0_4, %c0_5, %c0_6] : memref<3x8x48xf32, #tpu.memory_space<vmem>>, vector<1x8x48xf32>
      %19 = vector.shape_cast %18 : vector<1x8x48xf32> to vector<8x48xf32>
      %cst = arith.constant dense<0.000000e+00> : vector<8x640xf32>
      %20 = tpu.matmul %19, %17, %cst {dimension_numbers = #tpu.dot_dimension_numbers<[1], [0], [0], [1], [0, 0, 1, 1], [], []>, precision = #tpu.contract_precision<fp32>} : vector<8x48xf32>, vector<48x640xf32>, vector<8x640xf32> -> vector<8x640xf32>
      %21 = vector.extract_strided_slice %13 {offsets = [0, 60], sizes = [16, 640], strides = [1, 1]} : vector<16x768xf32> to vector<16x640xf32>
      %22 = vector.extract_strided_slice %13 {offsets = [0, 61], sizes = [16, 640], strides = [1, 1]} : vector<16x768xf32> to vector<16x640xf32>
      %23 = vector.extract_strided_slice %13 {offsets = [0, 62], sizes = [16, 640], strides = [1, 1]} : vector<16x768xf32> to vector<16x640xf32>
      %24 = tpu.concatenate %21, %22, %23 in 0 : vector<16x640xf32>, vector<16x640xf32>, vector<16x640xf32> -> vector<48x640xf32>
      %c1 = arith.constant 1 : index
      %c0_7 = arith.constant 0 : index
      %c0_8 = arith.constant 0 : index
      %25 = vector.load %arg5[%c1, %c0_7, %c0_8] : memref<3x8x48xf32, #tpu.memory_space<vmem>>, vector<1x8x48xf32>
      %26 = vector.shape_cast %25 : vector<1x8x48xf32> to vector<8x48xf32>
      %cst_9 = arith.constant dense<0.000000e+00> : vector<8x640xf32>
      %27 = tpu.matmul %26, %24, %cst_9 {dimension_numbers = #tpu.dot_dimension_numbers<[1], [0], [0], [1], [0, 0, 1, 1], [], []>, precision = #tpu.contract_precision<fp32>} : vector<8x48xf32>, vector<48x640xf32>, vector<8x640xf32> -> vector<8x640xf32>
      %28 = arith.addf %20, %27 : vector<8x640xf32>
      %29 = vector.extract_strided_slice %13 {offsets = [0, 120], sizes = [16, 640], strides = [1, 1]} : vector<16x768xf32> to vector<16x640xf32>
      %30 = vector.extract_strided_slice %13 {offsets = [0, 121], sizes = [16, 640], strides = [1, 1]} : vector<16x768xf32> to vector<16x640xf32>
      %31 = vector.extract_strided_slice %13 {offsets = [0, 122], sizes = [16, 640], strides = [1, 1]} : vector<16x768xf32> to vector<16x640xf32>
      %32 = tpu.concatenate %29, %30, %31 in 0 : vector<16x640xf32>, vector<16x640xf32>, vector<16x640xf32> -> vector<48x640xf32>
      %c2 = arith.constant 2 : index
      %c0_10 = arith.constant 0 : index
      %c0_11 = arith.constant 0 : index
      %33 = vector.load %arg5[%c2, %c0_10, %c0_11] : memref<3x8x48xf32, #tpu.memory_space<vmem>>, vector<1x8x48xf32>
      %34 = vector.shape_cast %33 : vector<1x8x48xf32> to vector<8x48xf32>
      %cst_12 = arith.constant dense<0.000000e+00> : vector<8x640xf32>
      %35 = tpu.matmul %34, %32, %cst_12 {dimension_numbers = #tpu.dot_dimension_numbers<[1], [0], [0], [1], [0, 0, 1, 1], [], []>, precision = #tpu.contract_precision<fp32>} : vector<8x48xf32>, vector<48x640xf32>, vector<8x640xf32> -> vector<8x640xf32>
      %36 = arith.addf %28, %35 : vector<8x640xf32>
      %c0_13 = arith.constant 0 : index
      %c0_14 = arith.constant 0 : index
      %37 = vector.load %arg6[%c0_13, %c0_14] : memref<8x1xf32, #tpu.memory_space<vmem>>, vector<8x1xf32>
      %38 = vector.broadcast %37 : vector<8x1xf32> to vector<8x640xf32>
      %39 = arith.addf %36, %38 : vector<8x640xf32>
      %c0_15 = arith.constant 0 : index
      %c0_16 = arith.constant 0 : index
      %c0_17 = arith.constant 0 : index
      %40 = vector.load %arg7[%c0_15, %c0_16, %c0_17] : memref<1x8x640xf32, #tpu.memory_space<vmem>>, vector<1x8x640xf32>
      %41 = vector.shape_cast %40 : vector<1x8x640xf32> to vector<8x640xf32>
      %42 = vector.shape_cast %39 : vector<8x640xf32> to vector<1x8x640xf32>
      tpu.vector_store %arg7[%c0_15, %c0_16, %c0_17], %42 {strides = array<i32>} : memref<1x8x640xf32, #tpu.memory_space<vmem>>, vector<1x8x640xf32>,
    } else {
    }
    return
  }
  func.func @transform_0(%arg0: i32, %arg1: i32) -> (i32, i32, i32) {
    %c5_i32 = arith.constant 5 : i32
    %0 = arith.minsi %arg1, %c5_i32 : i32
    %c0_i32 = arith.constant 0 : i32
    %c0_i32_0 = arith.constant 0 : i32
    return %arg0, %c0_i32, %0 : i32, i32, i32
  }
  func.func @transform_1(%arg0: i32, %arg1: i32) -> (i32, i32, i32) {
    %c5_i32 = arith.constant 5 : i32
    %0 = arith.minsi %arg1, %c5_i32 : i32
    %c0_i32 = arith.constant 0 : i32
    %c0_i32_0 = arith.constant 0 : i32
    %c0_i32_1 = arith.constant 0 : i32
    return %c0_i32, %c0_i32_0, %0 : i32, i32, i32
  }
  func.func @transform_2(%arg0: i32, %arg1: i32) -> (i32, i32) {
    %c5_i32 = arith.constant 5 : i32
    %0 = arith.minsi %arg1, %c5_i32 : i32
    %c0_i32 = arith.constant 0 : i32
    %c0_i32_0 = arith.constant 0 : i32
    return %c0_i32, %0 : i32, i32
  }
  func.func @transform_3(%arg0: i32, %arg1: i32) -> (i32, i32, i32) {
    %c0_i32 = arith.constant 0 : i32
    %c0_i32_0 = arith.constant 0 : i32
    %c0_i32_1 = arith.constant 0 : i32
    %c0_i32_2 = arith.constant 0 : i32
    return %c0_i32, %c0_i32_0, %c0_i32_1 : i32, i32, i32
  }
  func.func @transform_4(%arg0: i32, %arg1: i32) -> (i32, i32) {
    %c0_i32 = arith.constant 0 : i32
    %c0_i32_0 = arith.constant 0 : i32
    %c0_i32_1 = arith.constant 0 : i32
    return %c0_i32, %c0_i32_0 : i32, i32
  }
  func.func @transform_5(%arg0: i32, %arg1: i32) -> (i32, i32, i32) {
    %c1_i32 = arith.constant 1 : i32
    %0 = arith.subi %arg1, %c1_i32 : i32
    %c0_i32 = arith.constant 0 : i32
    %1 = arith.maxsi %0, %c0_i32 : i32
    %c0_i32_0 = arith.constant 0 : i32
    %c0_i32_1 = arith.constant 0 : i32
    return %arg0, %c0_i32_0, %1 : i32, i32, i32
  }
}

</mosaic_0001>

<llo_original>
// kernel: coordconv_forward.1
$region0: #{coordconv_forward.1}
  #allocation0 [shape = 'u32[]', space=smem, size = 0x4, offset = 0x4, fixed_abs, tag = 'smem constant byte address 0x4 - core index']
  #allocation1 [shape = 'u32[72,128]{1,0:T(1,128)}', space=vmem, size = 0x9000, scoped, tag = 'internal scratch']
  #allocation2 [shape = 'f32[16,3968]{1,0:T(8,128)}', space=vmem, size = 0x3e000, scoped, tag = 'scratch operand']
  %s0 = inlined_call_operand.vmem [shape: f32[2,5,3840], index: 0, kind: input, shape index: {}]
  %s1 = inlined_call_operand.vmem [shape: f32[5,16,3840], index: 1, kind: input, shape index: {}]
  %s2 = inlined_call_operand.vmem [shape: f32[16,3840], index: 2, kind: input, shape index: {}]
  %s3 = inlined_call_operand.vmem [shape: f32[3,8,48], index: 3, kind: input, shape index: {}]
  %s4 = inlined_call_operand.vmem [shape: f32[8,1], index: 4, kind: input, shape index: {}]
  %s5 = inlined_call_operand.vmem [shape: f32[2,8,3840], index: 5, kind: output, shape index: {}]
  %s6 = sld [smem:[#allocation0]]
  $region111: #{coordconv_forward.1} parent=0
    _
  %s8 = ssub.s32 1, %s6
  %s9 = scalar_select 0, %s8, %s6
  $region1: #{coordconv_forward.1} parent=0
    #allocation3 [shape = 'u8[409600]{0}', space=vmem, size = 0x64000, scoped, tag = 'input window, operand 1']
    #allocation4 [shape = 'u8[81920]{0}', space=vmem, size = 0x14000, scoped, tag = 'input window, operand 2']
    loop: start=0, step=1, limit=16
    $region2: #{coordconv_forward.1} parent=1 // loop_pre_header
      _
    $region3: #{coordconv_forward.1} parent=1 // loop_header
      %s11 = sphi 0, %s15
      %p12 = scmp.ge.s32.totalorder %s11, 16
      %s18 = sphi 0, %s30
      %s19 = sphi 0, %s26
      %s20 = sphi 0, %s18
      %s21 = sphi 0, %s19
      %s22 = sphi 0, %s20
      %s23 = sphi 0, %s21
      %s39 = sphi 0, %s41
      %s42 = sphi 0, %s39
      %s43 = sphi 0, %s42
      %s59 = sphi 0, %s43
      %s69 = sphi 0, %s71
      %s72 = sphi 0, %s69
      %s73 = sphi 0, %s72
      %s89 = sphi 0, %s73
      %s99 = sphi 0, %s101
      %s102 = sphi 0, %s99
      %s103 = sphi 0, %s102
      %s119 = sphi 0, %s103
      %s123 = sphi 0, %s123
      %s125 = sphi 0, %s123
      %s126 = sphi 0, %s125
      %s140 = sphi 0, %s126
      %s144 = sphi 0, %s144
      %s146 = sphi 0, %s144
      %s147 = sphi 0, %s146
      %s161 = sphi 0, %s147
      %s175 = sphi 0, %s177
      %s178 = sphi 0, %s175
      %s179 = sphi 0, %s178
      %s195 = sphi 0, %s179
    $region4: #{coordconv_forward.1} parent=1 // loop_header_branch
      %14 = sbr.rel (%p12) target = $region8
    $region5: #{coordconv_forward.1} parent=1 // loop_body
      %s16 = ssub.s32 %s11, 1
      %s17 = ssub.s32 %s11, 2
      %s24 = sadd.s32 1, %s19
      %p25 = scmp.ge.s32.totalorder %s24, 7
      %s26 = scalar_select %p25, 0, %s24
      %s27 = sadd.s32 1, %s18
      %s28 = scalar_select %p25, %s27, %s18
      %p29 = scmp.ge.s32.totalorder %s28, 2
      %s30 = scalar_select %p29, 0, %s28
      %p31 = scmp.lt.s32.totalorder %s19, 5
      %s32 = scalar_select %p31, %s19, 5
      %p33 = scmp.lt.s32.totalorder %s26, 5
      %s34 = scalar_select %p33, %s26, 5
      %s35 = ssub.s32 %s18, %s30
      %s36 = ssub.s32 %s32, %s34
      %s37 = sor.u32 %s35, %s36
      %p38 = scmp.eq.s32.totalorder %s37, 0
      %s40 = sadd.s32 %s39, 1
      %s41 = scalar_select %p38, %s39, %s40
      %p44 = pneg %p38
      %p45 = scmp.eq.s32.totalorder %s11, 13
      %p46 = por %p44, %p45
      %p47 = scmp.ne.s32.totalorder %s39, %s42
      %p48 = scmp.eq.s32.totalorder %s11, 0
      %p49 = por %p47, %p48
      %p50 = scmp.ne.s32.totalorder %s39, %s42
      %p51 = scmp.eq.s32.totalorder %s16, 13
      %p52 = por %p50, %p51
      %p53 = scmp.ne.s32.totalorder %s42, %s43
      %p54 = scmp.eq.s32.totalorder %s16, 0
      %p55 = por %p53, %p54
      %p56 = scmp.ne.s32.totalorder %s42, %s43
      %p57 = scmp.eq.s32.totalorder %s17, 13
      %p58 = por %p56, %p57
      %p60 = scmp.ne.s32.totalorder %s43, %s59
      %p61 = scmp.eq.s32.totalorder %s17, 0
      %p62 = por %p60, %p61
      %p63 = scmp.lt.s32.totalorder %s19, 5
      %s64 = scalar_select %p63, %s19, 5
      %p65 = scmp.lt.s32.totalorder %s26, 5
      %s66 = scalar_select %p65, %s26, 5
      %s67 = ssub.s32 %s64, %s66
      %p68 = scmp.eq.s32.totalorder %s67, 0
      %s70 = sadd.s32 %s69, 1
      %s71 = scalar_select %p68, %s69, %s70
      %p74 = pneg %p68
      %p75 = scmp.eq.s32.totalorder %s11, 13
      %p76 = por %p74, %p75
      %p77 = scmp.ne.s32.totalorder %s69, %s72
      %p78 = scmp.eq.s32.totalorder %s11, 0
      %p79 = por %p77, %p78
      %p80 = scmp.ne.s32.totalorder %s69, %s72
      %p81 = scmp.eq.s32.totalorder %s16, 13
      %p82 = por %p80, %p81
      %p83 = scmp.ne.s32.totalorder %s72, %s73
      %p84 = scmp.eq.s32.totalorder %s16, 0
      %p85 = por %p83, %p84
      %p86 = scmp.ne.s32.totalorder %s72, %s73
      %p87 = scmp.eq.s32.totalorder %s17, 13
      %p88 = por %p86, %p87
      %p90 = scmp.ne.s32.totalorder %s73, %s89
      %p91 = scmp.eq.s32.totalorder %s17, 0
      %p92 = por %p90, %p91
      %p93 = scmp.lt.s32.totalorder %s19, 5
      %s94 = scalar_select %p93, %s19, 5
      %p95 = scmp.lt.s32.totalorder %s26, 5
      %s96 = scalar_select %p95, %s26, 5
      %s97 = ssub.s32 %s94, %s96
      %p98 = scmp.eq.s32.totalorder %s97, 0
      %s100 = sadd.s32 %s99, 1
      %s101 = scalar_select %p98, %s99, %s100
      %p104 = pneg %p98
      %p105 = scmp.eq.s32.totalorder %s11, 13
      %p106 = por %p104, %p105
      %p107 = scmp.ne.s32.totalorder %s99, %s102
      %p108 = scmp.eq.s32.totalorder %s11, 0
      %p109 = por %p107, %p108
      %p110 = scmp.ne.s32.totalorder %s99, %s102
      %p111 = scmp.eq.s32.totalorder %s16, 13
      %p112 = por %p110, %p111
      %p113 = scmp.ne.s32.totalorder %s102, %s103
      %p114 = scmp.eq.s32.totalorder %s16, 0
      %p115 = por %p113, %p114
      %p116 = scmp.ne.s32.totalorder %s102, %s103
      %p117 = scmp.eq.s32.totalorder %s17, 13
      %p118 = por %p116, %p117
      %p120 = scmp.ne.s32.totalorder %s103, %s119
      %p121 = scmp.eq.s32.totalorder %s17, 0
      %p122 = por %p120, %p121
      %s124 = sadd.s32 %s123, 1
      %p127 = scmp.eq.s32.totalorder %s11, 13
      %p128 = scmp.ne.s32.totalorder %s123, %s125
      %p129 = scmp.eq.s32.totalorder %s11, 0
      %p130 = por %p128, %p129
      %p131 = scmp.ne.s32.totalorder %s123, %s125
      %p132 = scmp.eq.s32.totalorder %s16, 13
      %p133 = por %p131, %p132
      %p134 = scmp.ne.s32.totalorder %s125, %s126
      %p135 = scmp.eq.s32.totalorder %s16, 0
      %p136 = por %p134, %p135
      %p137 = scmp.ne.s32.totalorder %s125, %s126
      %p138 = scmp.eq.s32.totalorder %s17, 13
      %p139 = por %p137, %p138
      %p141 = scmp.ne.s32.totalorder %s126, %s140
      %p142 = scmp.eq.s32.totalorder %s17, 0
      %p143 = por %p141, %p142
      %s145 = sadd.s32 %s144, 1
      %p148 = scmp.eq.s32.totalorder %s11, 13
      %p149 = scmp.ne.s32.totalorder %s144, %s146
      %p150 = scmp.eq.s32.totalorder %s11, 0
      %p151 = por %p149, %p150
      %p152 = scmp.ne.s32.totalorder %s144, %s146
      %p153 = scmp.eq.s32.totalorder %s16, 13
      %p154 = por %p152, %p153
      %p155 = scmp.ne.s32.totalorder %s146, %s147
      %p156 = scmp.eq.s32.totalorder %s16, 0
      %p157 = por %p155, %p156
      %p158 = scmp.ne.s32.totalorder %s146, %s147
      %p159 = scmp.eq.s32.totalorder %s17, 13
      %p160 = por %p158, %p159
      %p162 = scmp.ne.s32.totalorder %s147, %s161
      %p163 = scmp.eq.s32.totalorder %s17, 0
      %p164 = por %p162, %p163
      %s165 = ssub.s32 %s19, 1
      %p166 = scmp.gt.s32.totalorder %s165, 0
      %s167 = scalar_select %p166, %s165, 0
      %s168 = ssub.s32 %s26, 1
      %p169 = scmp.gt.s32.totalorder %s168, 0
      %s170 = scalar_select %p169, %s168, 0
      %s171 = ssub.s32 %s18, %s30
      %s172 = ssub.s32 %s167, %s170
      %s173 = sor.u32 %s171, %s172
      %p174 = scmp.eq.s32.totalorder %s173, 0
      %s176 = sadd.s32 %s175, 1
      %s177 = scalar_select %p174, %s175, %s176
      %p180 = pneg %p174
      %p181 = scmp.eq.s32.totalorder %s11, 13
      %p182 = por %p180, %p181
      %p183 = scmp.ne.s32.totalorder %s175, %s178
      %p184 = scmp.eq.s32.totalorder %s11, 0
      %p185 = por %p183, %p184
      %p186 = scmp.ne.s32.totalorder %s175, %s178
      %p187 = scmp.eq.s32.totalorder %s16, 13
      %p188 = por %p186, %p187
      %p189 = scmp.ne.s32.totalorder %s178, %s179
      %p190 = scmp.eq.s32.totalorder %s16, 0
      %p191 = por %p189, %p190
      %p192 = scmp.ne.s32.totalorder %s178, %s179
      %p193 = scmp.eq.s32.totalorder %s17, 13
      %p194 = por %p192, %p193
      %p196 = scmp.ne.s32.totalorder %s179, %s195
      %p197 = scmp.eq.s32.totalorder %s17, 0
      %p198 = por %p196, %p197
      %p199 = scmp.le.s32.totalorder 1, %s11
      %p200 = scmp.lt.s32.totalorder %s11, 15
      %p201 = pnand %p199, %p200
      %p202 = pneg %p201
      // Predicated region
      $region9: #{coordconv_forward.1} parent=5 // pred_check
        _
      $region10: #{coordconv_forward.1} parent=5 // pred_check_branch
        %204 = sbr.rel (%p201) target = $region12
      $region11: #{coordconv_forward.1} parent=5 // pred_region
        %s205 = ssub.s32 %s11, 1
        // Predicated region
        $region13: #{coordconv_forward.1} parent=11 // pred_check
          %p206 = pneg %p136
        $region14: #{coordconv_forward.1} parent=11 // pred_check_branch
          %208 = sbr.rel (%p206) target = $region16
        $region15: #{coordconv_forward.1} parent=11 // pred_region
          _
        $region16: #{coordconv_forward.1} parent=11 // pred_fallthru
          _
        // Predicated region
        $region17: #{coordconv_forward.1} parent=11 // pred_check
          %p209 = pneg %p157
        $region18: #{coordconv_forward.1} parent=11 // pred_check_branch
          %211 = sbr.rel (%p209) target = $region20
        $region19: #{coordconv_forward.1} parent=11 // pred_region
          _
        $region20: #{coordconv_forward.1} parent=11 // pred_fallthru
          _
      $region12: #{coordconv_forward.1} parent=5 // pred_fallthru
        _
      %p212 = scmp.lt.s32.totalorder %s11, 14
      // Predicated region
      $region21: #{coordconv_forward.1} parent=5 // pred_check
        %p213 = pneg %p212
      $region22: #{coordconv_forward.1} parent=5 // pred_check_branch
        %215 = sbr.rel (%p213) target = $region24
      $region23: #{coordconv_forward.1} parent=5 // pred_region
        // Predicated region
        $region25: #{coordconv_forward.1} parent=23 // pred_check
          %p216 = pneg %p49
        $region26: #{coordconv_forward.1} parent=23 // pred_check_branch
          %218 = sbr.rel (%p216) target = $region28
        $region27: #{coordconv_forward.1} parent=23 // pred_region
          %p219 = scmp.lt.s32.totalorder %s19, 5
          %s220 = scalar_select %p219, %s19, 5
          %s221 = smul.u32 5, %s220
          %p222 = scmp.lt.s32.totalorder %s18, 1
          %s223 = scalar_select %p222, %s18, 1
          %p224 = scmp.lt.s32.totalorder %s221, 29
          %s225 = scalar_select %p224, %s221, 29
          %s226 = smul.addr %s223, 30
          %s227 = sadd.s32 %s225, %s226
          %s228 = smul.addr %s227, 8
          %s229 = scalar_lea.vmem %s0, %s228
          %p230 = scmp.lt.s32.totalorder %s19, 5
          %s231 = scalar_select %p230, %s19, 5
          %s232 = smul.u32 5, %s231
        $region28: #{coordconv_forward.1} parent=23 // pred_fallthru
          _
        // Predicated region
        $region29: #{coordconv_forward.1} parent=23 // pred_check
          %p233 = pneg %p79
        $region30: #{coordconv_forward.1} parent=23 // pred_check_branch
          %235 = sbr.rel (%p233) target = $region32
        $region31: #{coordconv_forward.1} parent=23 // pred_region
          %s236 = sand.u32 %s69, 1
          %s237 = sand.u32 %s69, 1
          %s238 = smul.addr %s237, 400
          %s239 = scalar_lea.vmem [#allocation3], %s238
          %p240 = scmp.lt.s32.totalorder %s19, 5
          %s241 = scalar_select %p240, %s19, 5
          %s242 = smul.u32 5, %s241
          %s243 = smul.addr %s242, 8
          %s244 = scalar_lea.vmem %s1, %s243
          // Predicated region
          $region33: #{coordconv_forward.1} parent=31 // pred_check
            _
          $region34: #{coordconv_forward.1} parent=31 // pred_check_branch
            %246 = sbr.rel (0) target = $region36
          $region35: #{coordconv_forward.1} parent=31 // pred_region
            // Predicated region
            $region37: #{coordconv_forward.1} parent=35 // pred_check
              _
            $region38: #{coordconv_forward.1} parent=35 // pred_check_branch
              %248 = sbr.rel (0) target = $region40
            $region39: #{coordconv_forward.1} parent=35 // pred_region
              loop: start=0, step=1, limit=1
              $region41: #{coordconv_forward.1} parent=39 // loop_pre_header
                _
              $region42: #{coordconv_forward.1} parent=39 // loop_header
                %s250 = sphi 0, %s254
                %p251 = scmp.ge.s32.totalorder %s250, 1
                %s255 = sphi %s244, %s244
                %s256 = sphi %s239, %s239
              $region43: #{coordconv_forward.1} parent=39 // loop_header_branch
                %253 = sbr.rel (%p251) target = $region47
              $region44: #{coordconv_forward.1} parent=39 // loop_body
                %v257 = vld [vmem:[%s255] sm:$0xff]
                %258 = vst [vmem:[%s256] sm:$0xff] %v257
                %v259 = vld [vmem:[%s255 + $0x8] sm:$0xff]
                %260 = vst [vmem:[%s256 + $0x8] sm:$0xff] %v259
                %v261 = vld [vmem:[%s255 + $0x10] sm:$0xff]
                %262 = vst [vmem:[%s256 + $0x10] sm:$0xff] %v261
                %v263 = vld [vmem:[%s255 + $0x18] sm:$0xff]
                %264 = vst [vmem:[%s256 + $0x18] sm:$0xff] %v263
                %v265 = vld [vmem:[%s255 + $0x20] sm:$0xff]
                %266 = vst [vmem:[%s256 + $0x20] sm:$0xff] %v265
                %v267 = vld [vmem:[%s255 + $0xf0] sm:$0xff]
                %268 = vst [vmem:[%s256 + $0x28] sm:$0xff] %v267
                %v269 = vld [vmem:[%s255 + $0xf8] sm:$0xff]
                %270 = vst [vmem:[%s256 + $0x30] sm:$0xff] %v269
                %v271 = vld [vmem:[%s255 + $0x100] sm:$0xff]
                %272 = vst [vmem:[%s256 + $0x38] sm:$0xff] %v271
                %v273 = vld [vmem:[%s255 + $0x108] sm:$0xff]
                %274 = vst [vmem:[%s256 + $0x40] sm:$0xff] %v273
                %v275 = vld [vmem:[%s255 + $0x110] sm:$0xff]
                %276 = vst [vmem:[%s256 + $0x48] sm:$0xff] %v275
                %v277 = vld [vmem:[%s255 + $0x1e0] sm:$0xff]
                %278 = vst [vmem:[%s256 + $0x50] sm:$0xff] %v277
                %v279 = vld [vmem:[%s255 + $0x1e8] sm:$0xff]
                %280 = vst [vmem:[%s256 + $0x58] sm:$0xff] %v279
                %v281 = vld [vmem:[%s255 + $0x1f0] sm:$0xff]
                %282 = vst [vmem:[%s256 + $0x60] sm:$0xff] %v281
                %v283 = vld [vmem:[%s255 + $0x1f8] sm:$0xff]
                %284 = vst [vmem:[%s256 + $0x68] sm:$0xff] %v283
                %v285 = vld [vmem:[%s255 + $0x200] sm:$0xff]
                %286 = vst [vmem:[%s256 + $0x70] sm:$0xff] %v285
                %v287 = vld [vmem:[%s255 + $0x2d0] sm:$0xff]
                %288 = vst [vmem:[%s256 + $0x78] sm:$0xff] %v287
                %v289 = vld [vmem:[%s255 + $0x2d8] sm:$0xff]
                %290 = vst [vmem:[%s256 + $0x80] sm:$0xff] %v289
                %v291 = vld [vmem:[%s255 + $0x2e0] sm:$0xff]
                %292 = vst [vmem:[%s256 + $0x88] sm:$0xff] %v291
                %v293 = vld [vmem:[%s255 + $0x2e8] sm:$0xff]
                %294 = vst [vmem:[%s256 + $0x90] sm:$0xff] %v293
                %v295 = vld [vmem:[%s255 + $0x2f0] sm:$0xff]
                %296 = vst [vmem:[%s256 + $0x98] sm:$0xff] %v295
                %v297 = vld [vmem:[%s255 + $0x3c0] sm:$0xff]
                %298 = vst [vmem:[%s256 + $0xa0] sm:$0xff] %v297
                %v299 = vld [vmem:[%s255 + $0x3c8] sm:$0xff]
                %300 = vst [vmem:[%s256 + $0xa8] sm:$0xff] %v299
                %v301 = vld [vmem:[%s255 + $0x3d0] sm:$0xff]
                %302 = vst [vmem:[%s256 + $0xb0] sm:$0xff] %v301
                %v303 = vld [vmem:[%s255 + $0x3d8] sm:$0xff]
                %304 = vst [vmem:[%s256 + $0xb8] sm:$0xff] %v303
                %v305 = vld [vmem:[%s255 + $0x3e0] sm:$0xff]
                %306 = vst [vmem:[%s256 + $0xc0] sm:$0xff] %v305
                %v307 = vld [vmem:[%s255 + $0x4b0] sm:$0xff]
                %308 = vst [vmem:[%s256 + $0xc8] sm:$0xff] %v307
                %v309 = vld [vmem:[%s255 + $0x4b8] sm:$0xff]
                %310 = vst [vmem:[%s256 + $0xd0] sm:$0xff] %v309
                %v311 = vld [vmem:[%s255 + $0x4c0] sm:$0xff]
                %312 = vst [vmem:[%s256 + $0xd8] sm:$0xff] %v311
                %v313 = vld [vmem:[%s255 + $0x4c8] sm:$0xff]
                %314 = vst [vmem:[%s256 + $0xe0] sm:$0xff] %v313
                %v315 = vld [vmem:[%s255 + $0x4d0] sm:$0xff]
                %316 = vst [vmem:[%s256 + $0xe8] sm:$0xff] %v315
                %v317 = vld [vmem:[%s255 + $0x5a0] sm:$0xff]
                %318 = vst [vmem:[%s256 + $0xf0] sm:$0xff] %v317
                %v319 = vld [vmem:[%s255 + $0x5a8] sm:$0xff]
                %320 = vst [vmem:[%s256 + $0xf8] sm:$0xff] %v319
                %v321 = vld [vmem:[%s255 + $0x5b0] sm:$0xff]
                %322 = vst [vmem:[%s256 + $0x100] sm:$0xff] %v321
                %v323 = vld [vmem:[%s255 + $0x5b8] sm:$0xff]
                %324 = vst [vmem:[%s256 + $0x108] sm:$0xff] %v323
                %v325 = vld [vmem:[%s255 + $0x5c0] sm:$0xff]
                %326 = vst [vmem:[%s256 + $0x110] sm:$0xff] %v325
                %v327 = vld [vmem:[%s255 + $0x690] sm:$0xff]
                %328 = vst [vmem:[%s256 + $0x118] sm:$0xff] %v327
                %v329 = vld [vmem:[%s255 + $0x698] sm:$0xff]
                %330 = vst [vmem:[%s256 + $0x120] sm:$0xff] %v329
                %v331 = vld [vmem:[%s255 + $0x6a0] sm:$0xff]
                %332 = vst [vmem:[%s256 + $0x128] sm:$0xff] %v331
                %v333 = vld [vmem:[%s255 + $0x6a8] sm:$0xff]
                %334 = vst [vmem:[%s256 + $0x130] sm:$0xff] %v333
                %v335 = vld [vmem:[%s255 + $0x6b0] sm:$0xff]
                %336 = vst [vmem:[%s256 + $0x138] sm:$0xff] %v335
                %v337 = vld [vmem:[%s255 + $0x780] sm:$0xff]
                %338 = vst [vmem:[%s256 + $0x140] sm:$0xff] %v337
                %v339 = vld [vmem:[%s255 + $0x788] sm:$0xff]
                %340 = vst [vmem:[%s256 + $0x148] sm:$0xff] %v339
                %v341 = vld [vmem:[%s255 + $0x790] sm:$0xff]
                %342 = vst [vmem:[%s256 + $0x150] sm:$0xff] %v341
                %v343 = vld [vmem:[%s255 + $0x798] sm:$0xff]
                %344 = vst [vmem:[%s256 + $0x158] sm:$0xff] %v343
                %v345 = vld [vmem:[%s255 + $0x7a0] sm:$0xff]
                %346 = vst [vmem:[%s256 + $0x160] sm:$0xff] %v345
                %v347 = vld [vmem:[%s255 + $0x870] sm:$0xff]
                %348 = vst [vmem:[%s256 + $0x168] sm:$0xff] %v347
                %v349 = vld [vmem:[%s255 + $0x878] sm:$0xff]
                %350 = vst [vmem:[%s256 + $0x170] sm:$0xff] %v349
                %v351 = vld [vmem:[%s255 + $0x880] sm:$0xff]
                %352 = vst [vmem:[%s256 + $0x178] sm:$0xff] %v351
                %v353 = vld [vmem:[%s255 + $0x888] sm:$0xff]
                %354 = vst [vmem:[%s256 + $0x180] sm:$0xff] %v353
                %v355 = vld [vmem:[%s255 + $0x890] sm:$0xff]
                %356 = vst [vmem:[%s256 + $0x188] sm:$0xff] %v355
              $region45: #{coordconv_forward.1} parent=39 // loop_footer
                %s254 = sadd.s32 1, %s250
              $region46: #{coordconv_forward.1} parent=39 // loop_footer_branch
                %249 = sbr.rel target = $region42
              $region47: #{coordconv_forward.1} parent=39 // loop_exit
                _
            $region40: #{coordconv_forward.1} parent=35 // pred_fallthru
              _
            // Predicated region
            $region48: #{coordconv_forward.1} parent=35 // pred_check
              _
            $region49: #{coordconv_forward.1} parent=35 // pred_check_branch
              %358 = sbr.rel target = $region51
            $region50: #{coordconv_forward.1} parent=35 // pred_region
              _
            $region51: #{coordconv_forward.1} parent=35 // pred_fallthru
              _
          $region36: #{coordconv_forward.1} parent=31 // pred_fallthru
            _
          %359 = vnop
        $region32: #{coordconv_forward.1} parent=23 // pred_fallthru
          _
        // Predicated region
        $region52: #{coordconv_forward.1} parent=23 // pred_check
          %p360 = pneg %p109
        $region53: #{coordconv_forward.1} parent=23 // pred_check_branch
          %362 = sbr.rel (%p360) target = $region55
        $region54: #{coordconv_forward.1} parent=23 // pred_region
          %s363 = sand.u32 %s99, 1
          %s364 = sand.u32 %s99, 1
          %s365 = smul.addr %s364, 80
          %s366 = scalar_lea.vmem [#allocation4], %s365
          %p367 = scmp.lt.s32.totalorder %s19, 5
          %s368 = scalar_select %p367, %s19, 5
          %s369 = smul.u32 5, %s368
          %s370 = smul.addr %s369, 8
          %s371 = scalar_lea.vmem %s2, %s370
          // Predicated region
          $region56: #{coordconv_forward.1} parent=54 // pred_check
            _
          $region57: #{coordconv_forward.1} parent=54 // pred_check_branch
            %373 = sbr.rel (0) target = $region59
          $region58: #{coordconv_forward.1} parent=54 // pred_region
            // Predicated region
            $region60: #{coordconv_forward.1} parent=58 // pred_check
              _
            $region61: #{coordconv_forward.1} parent=58 // pred_check_branch
              %375 = sbr.rel (0) target = $region63
            $region62: #{coordconv_forward.1} parent=58 // pred_region
              loop: start=0, step=1, limit=1
              $region64: #{coordconv_forward.1} parent=62 // loop_pre_header
                _
              $region65: #{coordconv_forward.1} parent=62 // loop_header
                %s377 = sphi 0, %s381
                %p378 = scmp.ge.s32.totalorder %s377, 1
                %s382 = sphi %s371, %s371
                %s383 = sphi %s366, %s366
              $region66: #{coordconv_forward.1} parent=62 // loop_header_branch
                %380 = sbr.rel (%p378) target = $region70
              $region67: #{coordconv_forward.1} parent=62 // loop_body
                %v384 = vld [vmem:[%s382] sm:$0xff]
                %385 = vst [vmem:[%s383] sm:$0xff] %v384
                %v386 = vld [vmem:[%s382 + $0x8] sm:$0xff]
                %387 = vst [vmem:[%s383 + $0x8] sm:$0xff] %v386
                %v388 = vld [vmem:[%s382 + $0x10] sm:$0xff]
                %389 = vst [vmem:[%s383 + $0x10] sm:$0xff] %v388
                %v390 = vld [vmem:[%s382 + $0x18] sm:$0xff]
                %391 = vst [vmem:[%s383 + $0x18] sm:$0xff] %v390
                %v392 = vld [vmem:[%s382 + $0x20] sm:$0xff]
                %393 = vst [vmem:[%s383 + $0x20] sm:$0xff] %v392
                %v394 = vld [vmem:[%s382 + $0xf0] sm:$0xff]
                %395 = vst [vmem:[%s383 + $0x28] sm:$0xff] %v394
                %v396 = vld [vmem:[%s382 + $0xf8] sm:$0xff]
                %397 = vst [vmem:[%s383 + $0x30] sm:$0xff] %v396
                %v398 = vld [vmem:[%s382 + $0x100] sm:$0xff]
                %399 = vst [vmem:[%s383 + $0x38] sm:$0xff] %v398
                %v400 = vld [vmem:[%s382 + $0x108] sm:$0xff]
                %401 = vst [vmem:[%s383 + $0x40] sm:$0xff] %v400
                %v402 = vld [vmem:[%s382 + $0x110] sm:$0xff]
                %403 = vst [vmem:[%s383 + $0x48] sm:$0xff] %v402
              $region68: #{coordconv_forward.1} parent=62 // loop_footer
                %s381 = sadd.s32 1, %s377
              $region69: #{coordconv_forward.1} parent=62 // loop_footer_branch
                %376 = sbr.rel target = $region65
              $region70: #{coordconv_forward.1} parent=62 // loop_exit
                _
            $region63: #{coordconv_forward.1} parent=58 // pred_fallthru
              _
            // Predicated region
            $region71: #{coordconv_forward.1} parent=58 // pred_check
              _
            $region72: #{coordconv_forward.1} parent=58 // pred_check_branch
              %405 = sbr.rel target = $region74
            $region73: #{coordconv_forward.1} parent=58 // pred_region
              _
            $region74: #{coordconv_forward.1} parent=58 // pred_fallthru
              _
          $region59: #{coordconv_forward.1} parent=54 // pred_fallthru
            _
          %406 = vnop
        $region55: #{coordconv_forward.1} parent=23 // pred_fallthru
          _
      $region24: #{coordconv_forward.1} parent=5 // pred_fallthru
        _
      %p407 = scmp.le.s32.totalorder 1, %s11
      %p408 = scmp.lt.s32.totalorder %s11, 15
      %p409 = pnand %p407, %p408
      %p410 = pneg %p409
      // Predicated region
      $region75: #{coordconv_forward.1} parent=5 // pred_check
        _
      $region76: #{coordconv_forward.1} parent=5 // pred_check_branch
        %412 = sbr.rel (%p409) target = $region78
      $region77: #{coordconv_forward.1} parent=5 // pred_region
        %s413 = ssub.s32 %s11, 1
        %s414 = sand.u32 %s72, 1
        %s415 = sand.u32 %s72, 1
        %s416 = smul.addr %s415, 400
        %s417 = scalar_lea.vmem [#allocation3], %s416
        // Predicated region
        $region79: #{coordconv_forward.1} parent=77 // pred_check
          %p418 = pneg %p85
        $region80: #{coordconv_forward.1} parent=77 // pred_check_branch
          %420 = sbr.rel (%p418) target = $region82
        $region81: #{coordconv_forward.1} parent=77 // pred_region
          _
        $region82: #{coordconv_forward.1} parent=77 // pred_fallthru
          _
        %s421 = sand.u32 %s102, 1
        %s422 = sand.u32 %s102, 1
        %s423 = smul.addr %s422, 80
        %s424 = scalar_lea.vmem [#allocation4], %s423
        // Predicated region
        $region83: #{coordconv_forward.1} parent=77 // pred_check
          %p425 = pneg %p115
        $region84: #{coordconv_forward.1} parent=77 // pred_check_branch
          %427 = sbr.rel (%p425) target = $region86
        $region85: #{coordconv_forward.1} parent=77 // pred_region
          _
        $region86: #{coordconv_forward.1} parent=77 // pred_fallthru
          _
        %p428 = scmp.lt.s32.totalorder %s21, 5
        %s429 = scalar_select %p428, %s21, 5
        %s430 = smul.u32 5, %s429
        %p431 = scmp.lt.s32.totalorder %s20, 1
        %s432 = scalar_select %p431, %s20, 1
        %p433 = scmp.lt.s32.totalorder %s430, 29
        %s434 = scalar_select %p433, %s430, 29
        %s435 = smul.addr %s432, 30
        %s436 = sadd.s32 %s434, %s435
        %s437 = smul.addr %s436, 8
        %s438 = scalar_lea.vmem %s0, %s437
        %p439 = pneg %p55
        %p440 = pneg %p52
        %s441 = sand.u32 %s72, 1
        %s442 = sand.u32 %s72, 1
        %s443 = smul.addr %s442, 400
        %s444 = scalar_lea.vmem [#allocation3], %s443
        %p445 = pneg %p85
        %p446 = pneg %p82
        %s447 = sand.u32 %s102, 1
        %s448 = sand.u32 %s102, 1
        %s449 = smul.addr %s448, 80
        %s450 = scalar_lea.vmem [#allocation4], %s449
        %p451 = pneg %p115
        %p452 = pneg %p112
        %p453 = pneg %p136
        %p454 = pneg %p133
        %p455 = pneg %p157
        %p456 = pneg %p154
        %p457 = pneg %p191
        %p458 = pneg %p188
        %s459 = ssub.s32 %s21, 1
        %p460 = scmp.gt.s32.totalorder %s459, 0
        %s461 = scalar_select %p460, %s459, 0
        %s462 = smul.u32 5, %s461
        %p463 = scmp.lt.s32.totalorder %s20, 1
        %s464 = scalar_select %p463, %s20, 1
        %p465 = scmp.lt.s32.totalorder %s462, 29
        %s466 = scalar_select %p465, %s462, 29
        %s467 = smul.addr %s464, 30
        %s468 = sadd.s32 %s466, %s467
        %s469 = smul.addr %s468, 8
        %s470 = scalar_lea.vmem %s5, %s469
        %p471 = scmp.lt.s32.totalorder %s21, 5
        %s472 = scalar_select %p471, %s21, 5
        %s473 = smul.u32 5, %s472
        %p474 = scmp.lt.s32.totalorder %s20, 1
        %s475 = scalar_select %p474, %s20, 1
        %p476 = scmp.lt.s32.totalorder %s473, 29
        %s477 = scalar_select %p476, %s473, 29
        %s478 = smul.addr %s475, 30
        %s479 = sadd.s32 %s477, %s478
        %s480 = smul.addr %s479, 8
        %s481 = scalar_lea.vmem %s0, %s480
        %p482 = scmp.lt.s32.totalorder %s21, 5
        %s483 = scalar_select %p482, %s21, 5
        %s484 = smul.u32 5, %s483
        %p485 = scmp.lt.s32.totalorder %s21, 5
        %s486 = scalar_select %p485, %s21, 5
        %s487 = smul.u32 5, %s486
        %p488 = scmp.lt.s32.totalorder %s21, 5
        %s489 = scalar_select %p488, %s21, 5
        %s490 = smul.u32 5, %s489
        %s491 = ssub.s32 %s21, 1
        %p492 = scmp.gt.s32.totalorder %s491, 0
        %s493 = scalar_select %p492, %s491, 0
        %s494 = smul.u32 5, %s493
        %p495 = scmp.lt.s32.totalorder %s20, 1
        %s496 = scalar_select %p495, %s20, 1
        %p497 = scmp.lt.s32.totalorder %s494, 29
        %s498 = scalar_select %p497, %s494, 29
        %s499 = smul.addr %s496, 30
        %s500 = sadd.s32 %s498, %s499
        %s501 = smul.addr %s500, 8
        %s502 = scalar_lea.vmem %s5, %s501
        %s503 = ssub.s32 %s21, 1
        %p504 = scmp.gt.s32.totalorder %s503, 0
        %s505 = scalar_select %p504, %s503, 0
        %s506 = smul.u32 5, %s505
        %p507 = scmp.eq.s32.totalorder %s21, 0
        // Predicated region
        $region87: #{coordconv_forward.1} parent=77 // pred_check
          %p508 = pneg %p507
        $region88: #{coordconv_forward.1} parent=77 // pred_check_branch
          %510 = sbr.rel (%p508) target = $region90
        $region89: #{coordconv_forward.1} parent=77 // pred_region
          %511 = vst [vmem:[#allocation2 + $0xf0] sm:$0xff] 0.0
          %512 = vst [vmem:[#allocation2 + $0x1e8] sm:$0xff] 0.0
        $region90: #{coordconv_forward.1} parent=77 // pred_fallthru
          _
        %p513 = scmp.lt.s32.totalorder %s21, 6
        // Predicated region
        $region91: #{coordconv_forward.1} parent=77 // pred_check
          %p514 = pneg %p513
        $region92: #{coordconv_forward.1} parent=77 // pred_check_branch
          %516 = sbr.rel (%p514) target = $region94
        $region93: #{coordconv_forward.1} parent=77 // pred_region
          %v517 = vld [vmem:[%s424] sm:$0xff]
          %v518 = vld [vmem:[%s424 + $0x8] sm:$0xff]
          %v519 = vld [vmem:[%s424 + $0x10] sm:$0xff]
          %v520 = vld [vmem:[%s424 + $0x18] sm:$0xff]
          %v521 = vld [vmem:[%s424 + $0x20] sm:$0xff]
          %v522 = vld [vmem:[%s424 + $0x28] sm:$0xff]
          %v523 = vld [vmem:[%s424 + $0x30] sm:$0xff]
          %v524 = vld [vmem:[%s424 + $0x38] sm:$0xff]
          %v525 = vld [vmem:[%s424 + $0x40] sm:$0xff]
          %v526 = vld [vmem:[%s424 + $0x48] sm:$0xff]
          %v527 = vld [vmem:[%s417] sm:$0xff]
          %v528 = vld [vmem:[%s417 + $0x8] sm:$0xff]
          %v529 = vld [vmem:[%s417 + $0x10] sm:$0xff]
          %v530 = vld [vmem:[%s417 + $0x18] sm:$0xff]
          %v531 = vld [vmem:[%s417 + $0x20] sm:$0xff]
          %v532 = vld [vmem:[%s417 + $0x28] sm:$0xff]
          %v533 = vld [vmem:[%s417 + $0x30] sm:$0xff]
          %v534 = vld [vmem:[%s417 + $0x38] sm:$0xff]
          %v535 = vld [vmem:[%s417 + $0x40] sm:$0xff]
          %v536 = vld [vmem:[%s417 + $0x48] sm:$0xff]
          %v537 = vld [vmem:[%s481] ss:$8 sm:$0xf]
          %v538 = vld [vmem:[%s481] ss:$8 sm:$0x10]
          %v539 = vor.u32 %v537, %v538
          %v541 = vperm.slane %v539, 0
          %v542 = vperm.slane %v539, 1
          %v543 = vperm.slane %v539, 2
          %v544 = vperm.slane %v539, 3
          %v545 = vperm.slane %v539, 4
          %v551 = vmul.f32 %v527, %v541
          %v552 = vmul.f32 %v528, %v542
          %v553 = vmul.f32 %v529, %v543
          %v554 = vmul.f32 %v530, %v544
          %v555 = vmul.f32 %v531, %v545
          %v556 = vmul.f32 %v532, %v541
          %v557 = vmul.f32 %v533, %v542
          %v558 = vmul.f32 %v534, %v543
          %v559 = vmul.f32 %v535, %v544
          %v560 = vmul.f32 %v536, %v545
          %v561 = vadd.f32 %v517, %v551
          %v562 = vadd.f32 %v518, %v552
          %v563 = vadd.f32 %v519, %v553
          %v564 = vadd.f32 %v520, %v554
          %v565 = vadd.f32 %v521, %v555
          %v566 = vadd.f32 %v522, %v556
          %v567 = vadd.f32 %v523, %v557
          %v568 = vadd.f32 %v524, %v558
          %v569 = vadd.f32 %v525, %v559
          %v570 = vadd.f32 %v526, %v560
          %s571 = scalar_lea.vmem %s417, 80 [#allocation3]
          %v572 = vld [vmem:[%s571] sm:$0xff]
          %v573 = vld [vmem:[%s571 + $0x8] sm:$0xff]
          %v574 = vld [vmem:[%s571 + $0x10] sm:$0xff]
          %v575 = vld [vmem:[%s571 + $0x18] sm:$0xff]
          %v576 = vld [vmem:[%s571 + $0x20] sm:$0xff]
          %v577 = vld [vmem:[%s571 + $0x28] sm:$0xff]
          %v578 = vld [vmem:[%s571 + $0x30] sm:$0xff]
          %v579 = vld [vmem:[%s571 + $0x38] sm:$0xff]
          %v580 = vld [vmem:[%s571 + $0x40] sm:$0xff]
          %v581 = vld [vmem:[%s571 + $0x48] sm:$0xff]
          %s582 = scalar_lea.vmem %s481, 1
          %v583 = vld [vmem:[%s582] ss:$8 sm:$0xf]
          %v584 = vld [vmem:[%s582] ss:$8 sm:$0x10]
          %v585 = vor.u32 %v583, %v584
          %v587 = vperm.slane %v585, 0
          %v588 = vperm.slane %v585, 1
          %v589 = vperm.slane %v585, 2
          %v590 = vperm.slane %v585, 3
          %v591 = vperm.slane %v585, 4
          %v597 = vmul.f32 %v572, %v587
          %v598 = vmul.f32 %v573, %v588
          %v599 = vmul.f32 %v574, %v589
          %v600 = vmul.f32 %v575, %v590
          %v601 = vmul.f32 %v576, %v591
          %v602 = vmul.f32 %v577, %v587
          %v603 = vmul.f32 %v578, %v588
          %v604 = vmul.f32 %v579, %v589
          %v605 = vmul.f32 %v580, %v590
          %v606 = vmul.f32 %v581, %v591
          %v607 = vadd.f32 %v561, %v597
          %v608 = vadd.f32 %v562, %v598
          %v609 = vadd.f32 %v563, %v599
          %v610 = vadd.f32 %v564, %v600
          %v611 = vadd.f32 %v565, %v601
          %v612 = vadd.f32 %v566, %v602
          %v613 = vadd.f32 %v567, %v603
          %v614 = vadd.f32 %v568, %v604
          %v615 = vadd.f32 %v569, %v605
          %v616 = vadd.f32 %v570, %v606
          %s617 = scalar_lea.vmem %s417, 160 [#allocation3]
          %v618 = vld [vmem:[%s617] sm:$0xff]
          %v619 = vld [vmem:[%s617 + $0x8] sm:$0xff]
          %v620 = vld [vmem:[%s617 + $0x10] sm:$0xff]
          %v621 = vld [vmem:[%s617 + $0x18] sm:$0xff]
          %v622 = vld [vmem:[%s617 + $0x20] sm:$0xff]
          %v623 = vld [vmem:[%s617 + $0x28] sm:$0xff]
          %v624 = vld [vmem:[%s617 + $0x30] sm:$0xff]
          %v625 = vld [vmem:[%s617 + $0x38] sm:$0xff]
          %v626 = vld [vmem:[%s617 + $0x40] sm:$0xff]
          %v627 = vld [vmem:[%s617 + $0x48] sm:$0xff]
          %s628 = scalar_lea.vmem %s481, 2
          %v629 = vld [vmem:[%s628] ss:$8 sm:$0xf]
          %v630 = vld [vmem:[%s628] ss:$8 sm:$0x10]
          %v631 = vor.u32 %v629, %v630
          %v633 = vperm.slane %v631, 0
          %v634 = vperm.slane %v631, 1
          %v635 = vperm.slane %v631, 2
          %v636 = vperm.slane %v631, 3
          %v637 = vperm.slane %v631, 4
          %v643 = vmul.f32 %v618, %v633
          %v644 = vmul.f32 %v619, %v634
          %v645 = vmul.f32 %v620, %v635
          %v646 = vmul.f32 %v621, %v636
          %v647 = vmul.f32 %v622, %v637
          %v648 = vmul.f32 %v623, %v633
          %v649 = vmul.f32 %v624, %v634
          %v650 = vmul.f32 %v625, %v635
          %v651 = vmul.f32 %v626, %v636
          %v652 = vmul.f32 %v627, %v637
          %v653 = vadd.f32 %v607, %v643
          %v654 = vadd.f32 %v608, %v644
          %v655 = vadd.f32 %v609, %v645
          %v656 = vadd.f32 %v610, %v646
          %v657 = vadd.f32 %v611, %v647
          %v658 = vadd.f32 %v612, %v648
          %v659 = vadd.f32 %v613, %v649
          %v660 = vadd.f32 %v614, %v650
          %v661 = vadd.f32 %v615, %v651
          %v662 = vadd.f32 %v616, %v652
          %s663 = scalar_lea.vmem %s417, 240 [#allocation3]
          %v664 = vld [vmem:[%s663] sm:$0xff]
          %v665 = vld [vmem:[%s663 + $0x8] sm:$0xff]
          %v666 = vld [vmem:[%s663 + $0x10] sm:$0xff]
          %v667 = vld [vmem:[%s663 + $0x18] sm:$0xff]
          %v668 = vld [vmem:[%s663 + $0x20] sm:$0xff]
          %v669 = vld [vmem:[%s663 + $0x28] sm:$0xff]
          %v670 = vld [vmem:[%s663 + $0x30] sm:$0xff]
          %v671 = vld [vmem:[%s663 + $0x38] sm:$0xff]
          %v672 = vld [vmem:[%s663 + $0x40] sm:$0xff]
          %v673 = vld [vmem:[%s663 + $0x48] sm:$0xff]
          %s674 = scalar_lea.vmem %s481, 3
          %v675 = vld [vmem:[%s674] ss:$8 sm:$0xf]
          %v676 = vld [vmem:[%s674] ss:$8 sm:$0x10]
          %v677 = vor.u32 %v675, %v676
          %v679 = vperm.slane %v677, 0
          %v680 = vperm.slane %v677, 1
          %v681 = vperm.slane %v677, 2
          %v682 = vperm.slane %v677, 3
          %v683 = vperm.slane %v677, 4
          %v689 = vmul.f32 %v664, %v679
          %v690 = vmul.f32 %v665, %v680
          %v691 = vmul.f32 %v666, %v681
          %v692 = vmul.f32 %v667, %v682
          %v693 = vmul.f32 %v668, %v683
          %v694 = vmul.f32 %v669, %v679
          %v695 = vmul.f32 %v670, %v680
          %v696 = vmul.f32 %v671, %v681
          %v697 = vmul.f32 %v672, %v682
          %v698 = vmul.f32 %v673, %v683
          %v699 = vadd.f32 %v653, %v689
          %v700 = vadd.f32 %v654, %v690
          %v701 = vadd.f32 %v655, %v691
          %v702 = vadd.f32 %v656, %v692
          %v703 = vadd.f32 %v657, %v693
          %v704 = vadd.f32 %v658, %v694
          %v705 = vadd.f32 %v659, %v695
          %v706 = vadd.f32 %v660, %v696
          %v707 = vadd.f32 %v661, %v697
          %v708 = vadd.f32 %v662, %v698
          %s709 = scalar_lea.vmem %s417, 320 [#allocation3]
          %v710 = vld [vmem:[%s709] sm:$0xff]
          %v711 = vld [vmem:[%s709 + $0x8] sm:$0xff]
          %v712 = vld [vmem:[%s709 + $0x10] sm:$0xff]
          %v713 = vld [vmem:[%s709 + $0x18] sm:$0xff]
          %v714 = vld [vmem:[%s709 + $0x20] sm:$0xff]
          %v715 = vld [vmem:[%s709 + $0x28] sm:$0xff]
          %v716 = vld [vmem:[%s709 + $0x30] sm:$0xff]
          %v717 = vld [vmem:[%s709 + $0x38] sm:$0xff]
          %v718 = vld [vmem:[%s709 + $0x40] sm:$0xff]
          %v719 = vld [vmem:[%s709 + $0x48] sm:$0xff]
          %s720 = scalar_lea.vmem %s481, 4
          %v721 = vld [vmem:[%s720] ss:$8 sm:$0xf]
          %v722 = vld [vmem:[%s720] ss:$8 sm:$0x10]
          %v723 = vor.u32 %v721, %v722
          %v725 = vperm.slane %v723, 0
          %v726 = vperm.slane %v723, 1
          %v727 = vperm.slane %v723, 2
          %v728 = vperm.slane %v723, 3
          %v729 = vperm.slane %v723, 4
          %v735 = vmul.f32 %v710, %v725
          %v736 = vmul.f32 %v711, %v726
          %v737 = vmul.f32 %v712, %v727
          %v738 = vmul.f32 %v713, %v728
          %v739 = vmul.f32 %v714, %v729
          %v740 = vmul.f32 %v715, %v725
          %v741 = vmul.f32 %v716, %v726
          %v742 = vmul.f32 %v717, %v727
          %v743 = vmul.f32 %v718, %v728
          %v744 = vmul.f32 %v719, %v729
          %v745 = vadd.f32 %v699, %v735
          %v746 = vadd.f32 %v700, %v736
          %v747 = vadd.f32 %v701, %v737
          %v748 = vadd.f32 %v702, %v738
          %v749 = vadd.f32 %v703, %v739
          %v750 = vadd.f32 %v704, %v740
          %v751 = vadd.f32 %v705, %v741
          %v752 = vadd.f32 %v706, %v742
          %v753 = vadd.f32 %v707, %v743
          %v754 = vadd.f32 %v708, %v744
          %s755 = smul.u32 %s21, 640
          %s756 = sshra.s32 %s755, 7
          %s757 = sand.u32 %s755, 127
          %s758 = smul.addr %s756, 8
          %s759 = scalar_lea.vmem [#allocation2], %s758
          %760 = vst [vmem:[%s759] sm:$0xff] %v745
          %761 = vst [vmem:[%s759 + $0x8] sm:$0xff] %v746
          %762 = vst [vmem:[%s759 + $0x10] sm:$0xff] %v747
          %763 = vst [vmem:[%s759 + $0x18] sm:$0xff] %v748
          %764 = vst [vmem:[%s759 + $0x20] sm:$0xff] %v749
          %765 = vst [vmem:[%s759 + $0xf8] sm:$0xff] %v750
          %766 = vst [vmem:[%s759 + $0x100] sm:$0xff] %v751
          %767 = vst [vmem:[%s759 + $0x108] sm:$0xff] %v752
          %768 = vst [vmem:[%s759 + $0x110] sm:$0xff] %v753
          %769 = vst [vmem:[%s759 + $0x118] sm:$0xff] %v754
        $region94: #{coordconv_forward.1} parent=77 // pred_fallthru
          _
        %p770 = scmp.ge.s32.totalorder %s21, 1
        // Predicated region
        $region95: #{coordconv_forward.1} parent=77 // pred_check
          %p771 = pneg %p770
        $region96: #{coordconv_forward.1} parent=77 // pred_check_branch
          %773 = sbr.rel (%p771) target = $region98
        $region97: #{coordconv_forward.1} parent=77 // pred_region
          %s774 = ssub.s32 %s21, 1
          %s775 = smul.u32 %s774, 640
          %s776 = sshra.s32 %s775, 7
          %s777 = sand.u32 %s775, 127
          %s778 = smul.addr %s776, 8
          %s779 = scalar_lea.vmem [#allocation2], %s778
          %v780 = vld [vmem:[%s779] sm:$0xff]
          %v781 = vld [vmem:[%s779 + $0x8] sm:$0xff]
          %v782 = vld [vmem:[%s779 + $0x10] sm:$0xff]
          %v783 = vld [vmem:[%s779 + $0x18] sm:$0xff]
          %v784 = vld [vmem:[%s779 + $0x20] sm:$0xff]
          %v785 = vld [vmem:[%s779 + $0x28] sm:$0xff]
          %v786 = vld [vmem:[%s779 + $0xf8] sm:$0xff]
          %v787 = vld [vmem:[%s779 + $0x100] sm:$0xff]
          %v788 = vld [vmem:[%s779 + $0x108] sm:$0xff]
          %v789 = vld [vmem:[%s779 + $0x110] sm:$0xff]
          %v790 = vld [vmem:[%s779 + $0x118] sm:$0xff]
          %v791 = vld [vmem:[%s779 + $0x120] sm:$0xff]
          %804 = vrot.lane.b32.xlu0 %v780, 127
          %v805 = vpop.permute.xlu0 %804
          %806 = vrot.lane.b32.xlu0 %v781, 127
          %v807 = vpop.permute.xlu0 %806
          %808 = vrot.lane.b32.xlu0 %v782, 127
          %v809 = vpop.permute.xlu0 %808
          %810 = vrot.lane.b32.xlu0 %v783, 127
          %v811 = vpop.permute.xlu0 %810
          %812 = vrot.lane.b32.xlu0 %v784, 127
          %v813 = vpop.permute.xlu0 %812
          %814 = vrot.lane.b32.xlu0 %v785, 127
          %v815 = vpop.permute.xlu0 %814
          %816 = vrot.lane.b32.xlu0 %v786, 127
          %v817 = vpop.permute.xlu0 %816
          %818 = vrot.lane.b32.xlu0 %v787, 127
          %v819 = vpop.permute.xlu0 %818
          %820 = vrot.lane.b32.xlu0 %v788, 127
          %v821 = vpop.permute.xlu0 %820
          %822 = vrot.lane.b32.xlu0 %v789, 127
          %v823 = vpop.permute.xlu0 %822
          %824 = vrot.lane.b32.xlu0 %v790, 127
          %v825 = vpop.permute.xlu0 %824
          %826 = vrot.lane.b32.xlu0 %v791, 127
          %v827 = vpop.permute.xlu0 %826
          %vm828 = vcmask 1039360
          %v829 = vsel %vm828, %v805, %v807
          %v830 = vsel %vm828, %v807, %v809
          %v831 = vsel %vm828, %v809, %v811
          %v832 = vsel %vm828, %v811, %v813
          %v833 = vsel %vm828, %v813, %v815
          %v834 = vsel %vm828, %v817, %v819
          %v835 = vsel %vm828, %v819, %v821
          %v836 = vsel %vm828, %v821, %v823
          %v837 = vsel %vm828, %v823, %v825
          %v838 = vsel %vm828, %v825, %v827
          %849 = vrot.lane.b32.xlu0 %v780, 126
          %v850 = vpop.permute.xlu0 %849
          %851 = vrot.lane.b32.xlu0 %v781, 126
          %v852 = vpop.permute.xlu0 %851
          %853 = vrot.lane.b32.xlu0 %v782, 126
          %v854 = vpop.permute.xlu0 %853
          %855 = vrot.lane.b32.xlu0 %v783, 126
          %v856 = vpop.permute.xlu0 %855
          %857 = vrot.lane.b32.xlu0 %v784, 126
          %v858 = vpop.permute.xlu0 %857
          %859 = vrot.lane.b32.xlu0 %v785, 126
          %v860 = vpop.permute.xlu0 %859
          %861 = vrot.lane.b32.xlu0 %v786, 126
          %v862 = vpop.permute.xlu0 %861
          %863 = vrot.lane.b32.xlu0 %v787, 126
          %v864 = vpop.permute.xlu0 %863
          %865 = vrot.lane.b32.xlu0 %v788, 126
          %v866 = vpop.permute.xlu0 %865
          %867 = vrot.lane.b32.xlu0 %v789, 126
          %v868 = vpop.permute.xlu0 %867
          %869 = vrot.lane.b32.xlu0 %v790, 126
          %v870 = vpop.permute.xlu0 %869
          %871 = vrot.lane.b32.xlu0 %v791, 126
          %v872 = vpop.permute.xlu0 %871
          %vm873 = vcmask 1031168
          %v874 = vsel %vm873, %v850, %v852
          %v875 = vsel %vm873, %v852, %v854
          %v876 = vsel %vm873, %v854, %v856
          %v877 = vsel %vm873, %v856, %v858
          %v878 = vsel %vm873, %v858, %v860
          %v879 = vsel %vm873, %v862, %v864
          %v880 = vsel %vm873, %v864, %v866
          %v881 = vsel %vm873, %v866, %v868
          %v882 = vsel %vm873, %v868, %v870
          %v883 = vsel %vm873, %v870, %v872
          %v894 = vld [vmem:[%s3] sm:$0xff]
          %s895 = scalar_lea.vmem %s3, 8
          %v896 = vld [vmem:[%s895] sm:$0xff]
          %897 = vrot.lane.b32.xlu0 %v780, 68
          %v898 = vpop.permute.xlu0 %897
          %899 = vrot.lane.b32.xlu0 %v781, 68
          %v900 = vpop.permute.xlu0 %899
          %901 = vrot.lane.b32.xlu0 %v782, 68
          %v902 = vpop.permute.xlu0 %901
          %903 = vrot.lane.b32.xlu0 %v783, 68
          %v904 = vpop.permute.xlu0 %903
          %905 = vrot.lane.b32.xlu0 %v784, 68
          %v906 = vpop.permute.xlu0 %905
          %907 = vrot.lane.b32.xlu0 %v785, 68
          %v908 = vpop.permute.xlu0 %907
          %909 = vrot.lane.b32.xlu0 %v786, 68
          %v910 = vpop.permute.xlu0 %909
          %911 = vrot.lane.b32.xlu0 %v787, 68
          %v912 = vpop.permute.xlu0 %911
          %913 = vrot.lane.b32.xlu0 %v788, 68
          %v914 = vpop.permute.xlu0 %913
          %915 = vrot.lane.b32.xlu0 %v789, 68
          %v916 = vpop.permute.xlu0 %915
          %917 = vrot.lane.b32.xlu0 %v790, 68
          %v918 = vpop.permute.xlu0 %917
          %919 = vrot.lane.b32.xlu0 %v791, 68
          %v920 = vpop.permute.xlu0 %919
          %921 = vrot.lane.b32.xlu0 %v829, 68
          %v922 = vpop.permute.xlu0 %921
          %923 = vrot.lane.b32.xlu0 %v830, 68
          %v924 = vpop.permute.xlu0 %923
          %925 = vrot.lane.b32.xlu0 %v831, 68
          %v926 = vpop.permute.xlu0 %925
          %927 = vrot.lane.b32.xlu0 %v832, 68
          %v928 = vpop.permute.xlu0 %927
          %929 = vrot.lane.b32.xlu0 %v833, 68
          %v930 = vpop.permute.xlu0 %929
          %931 = vrot.lane.b32.xlu0 %v815, 68
          %v932 = vpop.permute.xlu0 %931
          %933 = vrot.lane.b32.xlu0 %v834, 68
          %v934 = vpop.permute.xlu0 %933
          %935 = vrot.lane.b32.xlu0 %v835, 68
          %v936 = vpop.permute.xlu0 %935
          %937 = vrot.lane.b32.xlu0 %v836, 68
          %v938 = vpop.permute.xlu0 %937
          %939 = vrot.lane.b32.xlu0 %v837, 68
          %v940 = vpop.permute.xlu0 %939
          %941 = vrot.lane.b32.xlu0 %v838, 68
          %v942 = vpop.permute.xlu0 %941
          %943 = vrot.lane.b32.xlu0 %v827, 68
          %v944 = vpop.permute.xlu0 %943
          %945 = vrot.lane.b32.xlu0 %v874, 68
          %v946 = vpop.permute.xlu0 %945
          %947 = vrot.lane.b32.xlu0 %v875, 68
          %v948 = vpop.permute.xlu0 %947
          %949 = vrot.lane.b32.xlu0 %v876, 68
          %v950 = vpop.permute.xlu0 %949
          %951 = vrot.lane.b32.xlu0 %v877, 68
          %v952 = vpop.permute.xlu0 %951
          %953 = vrot.lane.b32.xlu0 %v878, 68
          %v954 = vpop.permute.xlu0 %953
          %955 = vrot.lane.b32.xlu0 %v860, 68
          %v956 = vpop.permute.xlu0 %955
          %957 = vrot.lane.b32.xlu0 %v879, 68
          %v958 = vpop.permute.xlu0 %957
          %959 = vrot.lane.b32.xlu0 %v880, 68
          %v960 = vpop.permute.xlu0 %959
          %961 = vrot.lane.b32.xlu0 %v881, 68
          %v962 = vpop.permute.xlu0 %961
          %963 = vrot.lane.b32.xlu0 %v882, 68
          %v964 = vpop.permute.xlu0 %963
          %965 = vrot.lane.b32.xlu0 %v883, 68
          %v966 = vpop.permute.xlu0 %965
          %967 = vrot.lane.b32.xlu0 %v872, 68
          %v968 = vpop.permute.xlu0 %967
          %vm969 = vcmask 556032
          %v970 = vsel %vm969, %v898, %v900
          %v971 = vsel %vm969, %v900, %v902
          %v972 = vsel %vm969, %v902, %v904
          %v973 = vsel %vm969, %v904, %v906
          %v974 = vsel %vm969, %v906, %v908
          %v975 = vsel %vm969, %v910, %v912
          %v976 = vsel %vm969, %v912, %v914
          %v977 = vsel %vm969, %v914, %v916
          %v978 = vsel %vm969, %v916, %v918
          %v979 = vsel %vm969, %v918, %v920
          %v980 = vsel %vm969, %v922, %v924
          %v981 = vsel %vm969, %v924, %v926
          %v982 = vsel %vm969, %v926, %v928
          %v983 = vsel %vm969, %v928, %v930
          %v984 = vsel %vm969, %v930, %v932
          %v985 = vsel %vm969, %v934, %v936
          %v986 = vsel %vm969, %v936, %v938
          %v987 = vsel %vm969, %v938, %v940
          %v988 = vsel %vm969, %v940, %v942
          %v989 = vsel %vm969, %v942, %v944
          %v990 = vsel %vm969, %v946, %v948
          %v991 = vsel %vm969, %v948, %v950
          %v992 = vsel %vm969, %v950, %v952
          %v993 = vsel %vm969, %v952, %v954
          %v994 = vsel %vm969, %v954, %v956
          %v995 = vsel %vm969, %v958, %v960
          %v996 = vsel %vm969, %v960, %v962
          %v997 = vsel %vm969, %v962, %v964
          %v998 = vsel %vm969, %v964, %v966
          %v999 = vsel %vm969, %v966, %v968
          %vm1030 = vcmask 392192
          %v1032 = vsel %vm1030, %v896, 0
          %1034 = vmatpush.msra.mxu0 0.0
          %1035 = vmatpush.msra.mxu0 0.0
          %1036 = vmatpush.msra.mxu0 0.0
          %1037 = vmatpush.msra.mxu0 0.0
          %1038 = vmatpush.msra.mxu0 0.0
          %1039 = vmatpush.msra.mxu0 0.0
          %1040 = vmatpush.msra.mxu0 0.0
          %1041 = vmatpush.msra.mxu0 0.0
          %1042 = vmatpush.msra.mxu0 0.0
          %1043 = vmatpush.msra.mxu0 0.0
          %v1044 = vand.u32 %v995, 4294901760
          %1045 = vmatpush.msra.mxu0 %v1044
          %v1046 = vand.u32 %v990, 4294901760
          %1047 = vmatpush.msra.mxu0 %v1046
          %v1048 = vand.u32 %v985, 4294901760
          %1049 = vmatpush.msra.mxu0 %v1048
          %v1050 = vand.u32 %v980, 4294901760
          %1051 = vmatpush.msra.mxu0 %v1050
          %v1052 = vand.u32 %v975, 4294901760
          %1053 = vmatpush.msra.mxu0 %v1052
          %v1054 = vand.u32 %v970, 4294901760
          %1055 = vmatpush.msra.mxu0 %v1054
          %v1056 = vand.u32 %v1032, 4294901760
          %v1057 = vsub.f32 %v1032, %v1056
          %v1058 = vand.u32 %v1057, 4294901760
          %v1059 = vsub.f32 %v1057, %v1058
          %v1060 = vand.u32 %v1059, 4294901760
          %1061 = vmatmul.f32.gmra.mxu0 %v1060
          %v1062 = vpop.f32.mrf.mxu0
          %v1063 = vadd.f32 0.0, %v1062
          %1064 = vdwg.mxu0
          %1065 = vmatpush.msra.mxu0 0.0
          %1066 = vmatpush.msra.mxu0 0.0
          %1067 = vmatpush.msra.mxu0 0.0
          %1068 = vmatpush.msra.mxu0 0.0
          %1069 = vmatpush.msra.mxu0 0.0
          %1070 = vmatpush.msra.mxu0 0.0
          %1071 = vmatpush.msra.mxu0 0.0
          %1072 = vmatpush.msra.mxu0 0.0
          %1073 = vmatpush.msra.mxu0 0.0
          %1074 = vmatpush.msra.mxu0 0.0
          %v1075 = vand.u32 %v995, 4294901760
          %v1076 = vsub.f32 %v995, %v1075
          %v1077 = vand.u32 %v1076, 4294901760
          %v1078 = vsub.f32 %v1076, %v1077
          %v1079 = vand.u32 %v1078, 4294901760
          %1080 = vmatpush.msra.mxu0 %v1079
          %v1081 = vand.u32 %v990, 4294901760
          %v1082 = vsub.f32 %v990, %v1081
          %v1083 = vand.u32 %v1082, 4294901760
          %v1084 = vsub.f32 %v1082, %v1083
          %v1085 = vand.u32 %v1084, 4294901760
          %1086 = vmatpush.msra.mxu0 %v1085
          %v1087 = vand.u32 %v985, 4294901760
          %v1088 = vsub.f32 %v985, %v1087
          %v1089 = vand.u32 %v1088, 4294901760
          %v1090 = vsub.f32 %v1088, %v1089
          %v1091 = vand.u32 %v1090, 4294901760
          %1092 = vmatpush.msra.mxu0 %v1091
          %v1093 = vand.u32 %v980, 4294901760
          %v1094 = vsub.f32 %v980, %v1093
          %v1095 = vand.u32 %v1094, 4294901760
          %v1096 = vsub.f32 %v1094, %v1095
          %v1097 = vand.u32 %v1096, 4294901760
          %1098 = vmatpush.msra.mxu0 %v1097
          %v1099 = vand.u32 %v975, 4294901760
          %v1100 = vsub.f32 %v975, %v1099
          %v1101 = vand.u32 %v1100, 4294901760
          %v1102 = vsub.f32 %v1100, %v1101
          %v1103 = vand.u32 %v1102, 4294901760
          %1104 = vmatpush.msra.mxu0 %v1103
          %v1105 = vand.u32 %v970, 4294901760
          %v1106 = vsub.f32 %v970, %v1105
          %v1107 = vand.u32 %v1106, 4294901760
          %v1108 = vsub.f32 %v1106, %v1107
          %v1109 = vand.u32 %v1108, 4294901760
          %1110 = vmatpush.msra.mxu0 %v1109
          %v1111 = vand.u32 %v1032, 4294901760
          %1112 = vmatmul.f32.gmra.mxu0 %v1111
          %v1113 = vpop.f32.mrf.mxu0
          %v1114 = vadd.f32 %v1063, %v1113
          %1115 = vdwg.mxu0
          %1116 = vmatpush.msra.mxu0 0.0
          %1117 = vmatpush.msra.mxu0 0.0
          %1118 = vmatpush.msra.mxu0 0.0
          %1119 = vmatpush.msra.mxu0 0.0
          %1120 = vmatpush.msra.mxu0 0.0
          %1121 = vmatpush.msra.mxu0 0.0
          %1122 = vmatpush.msra.mxu0 0.0
          %1123 = vmatpush.msra.mxu0 0.0
          %1124 = vmatpush.msra.mxu0 0.0
          %1125 = vmatpush.msra.mxu0 0.0
          %v1126 = vand.u32 %v995, 4294901760
          %v1127 = vsub.f32 %v995, %v1126
          %1128 = vmatpush.msra.mxu0 %v1127
          %v1129 = vand.u32 %v990, 4294901760
          %v1130 = vsub.f32 %v990, %v1129
          %1131 = vmatpush.msra.mxu0 %v1130
          %v1132 = vand.u32 %v985, 4294901760
          %v1133 = vsub.f32 %v985, %v1132
          %1134 = vmatpush.msra.mxu0 %v1133
          %v1135 = vand.u32 %v980, 4294901760
          %v1136 = vsub.f32 %v980, %v1135
          %1137 = vmatpush.msra.mxu0 %v1136
          %v1138 = vand.u32 %v975, 4294901760
          %v1139 = vsub.f32 %v975, %v1138
          %1140 = vmatpush.msra.mxu0 %v1139
          %v1141 = vand.u32 %v970, 4294901760
          %v1142 = vsub.f32 %v970, %v1141
          %1143 = vmatpush.msra.mxu0 %v1142
          %v1144 = vand.u32 %v1032, 4294901760
          %v1145 = vsub.f32 %v1032, %v1144
          %1146 = vmatmul.f32.gmra.mxu0 %v1145
          %v1147 = vpop.f32.mrf.mxu0
          %v1148 = vadd.f32 %v1114, %v1147
          %1149 = vdwg.mxu0
          %1150 = vmatpush.msra.mxu0 0.0
          %1151 = vmatpush.msra.mxu0 0.0
          %1152 = vmatpush.msra.mxu0 0.0
          %1153 = vmatpush.msra.mxu0 0.0
          %1154 = vmatpush.msra.mxu0 0.0
          %1155 = vmatpush.msra.mxu0 0.0
          %1156 = vmatpush.msra.mxu0 0.0
          %1157 = vmatpush.msra.mxu0 0.0
          %1158 = vmatpush.msra.mxu0 0.0
          %1159 = vmatpush.msra.mxu0 0.0
          %v1160 = vand.u32 %v995, 4294901760
          %1161 = vmatpush.msra.mxu0 %v1160
          %v1162 = vand.u32 %v990, 4294901760
          %1163 = vmatpush.msra.mxu0 %v1162
          %v1164 = vand.u32 %v985, 4294901760
          %1165 = vmatpush.msra.mxu0 %v1164
          %v1166 = vand.u32 %v980, 4294901760
          %1167 = vmatpush.msra.mxu0 %v1166
          %v1168 = vand.u32 %v975, 4294901760
          %1169 = vmatpush.msra.mxu0 %v1168
          %v1170 = vand.u32 %v970, 4294901760
          %1171 = vmatpush.msra.mxu0 %v1170
          %v1172 = vand.u32 %v1032, 4294901760
          %v1173 = vsub.f32 %v1032, %v1172
          %v1174 = vand.u32 %v1173, 4294901760
          %1175 = vmatmul.f32.gmra.mxu0 %v1174
          %v1176 = vpop.f32.mrf.mxu0
          %v1177 = vadd.f32 %v1148, %v1176
          %1178 = vdwg.mxu0
          %1179 = vmatpush.msra.mxu0 0.0
          %1180 = vmatpush.msra.mxu0 0.0
          %1181 = vmatpush.msra.mxu0 0.0
          %1182 = vmatpush.msra.mxu0 0.0
          %1183 = vmatpush.msra.mxu0 0.0
          %1184 = vmatpush.msra.mxu0 0.0
          %1185 = vmatpush.msra.mxu0 0.0
          %1186 = vmatpush.msra.mxu0 0.0
          %1187 = vmatpush.msra.mxu0 0.0
          %1188 = vmatpush.msra.mxu0 0.0
          %v1189 = vand.u32 %v995, 4294901760
          %v1190 = vsub.f32 %v995, %v1189
          %v1191 = vand.u32 %v1190, 4294901760
          %1192 = vmatpush.msra.mxu0 %v1191
          %v1193 = vand.u32 %v990, 4294901760
          %v1194 = vsub.f32 %v990, %v1193
          %v1195 = vand.u32 %v1194, 4294901760
          %1196 = vmatpush.msra.mxu0 %v1195
          %v1197 = vand.u32 %v985, 4294901760
          %v1198 = vsub.f32 %v985, %v1197
          %v1199 = vand.u32 %v1198, 4294901760
          %1200 = vmatpush.msra.mxu0 %v1199
          %v1201 = vand.u32 %v980, 4294901760
          %v1202 = vsub.f32 %v980, %v1201
          %v1203 = vand.u32 %v1202, 4294901760
          %1204 = vmatpush.msra.mxu0 %v1203
          %v1205 = vand.u32 %v975, 4294901760
          %v1206 = vsub.f32 %v975, %v1205
          %v1207 = vand.u32 %v1206, 4294901760
          %1208 = vmatpush.msra.mxu0 %v1207
          %v1209 = vand.u32 %v970, 4294901760
          %v1210 = vsub.f32 %v970, %v1209
          %v1211 = vand.u32 %v1210, 4294901760
          %1212 = vmatpush.msra.mxu0 %v1211
          %v1213 = vand.u32 %v1032, 4294901760
          %1214 = vmatmul.f32.gmra.mxu0 %v1213
          %v1215 = vpop.f32.mrf.mxu0
          %v1216 = vadd.f32 %v1177, %v1215
          %1217 = vdwg.mxu0
          %1218 = vmatpush.msra.mxu0 0.0
          %1219 = vmatpush.msra.mxu0 0.0
          %1220 = vmatpush.msra.mxu0 0.0
          %1221 = vmatpush.msra.mxu0 0.0
          %1222 = vmatpush.msra.mxu0 0.0
          %1223 = vmatpush.msra.mxu0 0.0
          %1224 = vmatpush.msra.mxu0 0.0
          %1225 = vmatpush.msra.mxu0 0.0
          %1226 = vmatpush.msra.mxu0 0.0
          %1227 = vmatpush.msra.mxu0 0.0
          %v1228 = vand.u32 %v995, 4294901760
          %1229 = vmatpush.msra.mxu0 %v1228
          %v1230 = vand.u32 %v990, 4294901760
          %1231 = vmatpush.msra.mxu0 %v1230
          %v1232 = vand.u32 %v985, 4294901760
          %1233 = vmatpush.msra.mxu0 %v1232
          %v1234 = vand.u32 %v980, 4294901760
          %1235 = vmatpush.msra.mxu0 %v1234
          %v1236 = vand.u32 %v975, 4294901760
          %1237 = vmatpush.msra.mxu0 %v1236
          %v1238 = vand.u32 %v970, 4294901760
          %1239 = vmatpush.msra.mxu0 %v1238
          %v1240 = vand.u32 %v1032, 4294901760
          %1241 = vmatmul.f32.gmra.mxu0 %v1240
          %v1242 = vpop.f32.mrf.mxu0
          %v1243 = vadd.f32 %v1216, %v1242
          %1244 = vdwg.mxu0
          %1245 = vmatpush.msra.mxu0 0.0
          %1246 = vmatpush.msra.mxu0 0.0
          %1247 = vmatpush.msra.mxu0 0.0
          %1248 = vmatpush.msra.mxu0 0.0
          %1249 = vmatpush.msra.mxu0 0.0
          %1250 = vmatpush.msra.mxu0 0.0
          %1251 = vmatpush.msra.mxu0 0.0
          %1252 = vmatpush.msra.mxu0 0.0
          %1253 = vmatpush.msra.mxu0 0.0
          %1254 = vmatpush.msra.mxu0 0.0
          %v1255 = vand.u32 %v996, 4294901760
          %1256 = vmatpush.msra.mxu0 %v1255
          %v1257 = vand.u32 %v991, 4294901760
          %1258 = vmatpush.msra.mxu0 %v1257
          %v1259 = vand.u32 %v986, 4294901760
          %1260 = vmatpush.msra.mxu0 %v1259
          %v1261 = vand.u32 %v981, 4294901760
          %1262 = vmatpush.msra.mxu0 %v1261
          %v1263 = vand.u32 %v976, 4294901760
          %1264 = vmatpush.msra.mxu0 %v1263
          %v1265 = vand.u32 %v971, 4294901760
          %1266 = vmatpush.msra.mxu0 %v1265
          %v1267 = vand.u32 %v1032, 4294901760
          %v1268 = vsub.f32 %v1032, %v1267
          %v1269 = vand.u32 %v1268, 4294901760
          %v1270 = vsub.f32 %v1268, %v1269
          %v1271 = vand.u32 %v1270, 4294901760
          %1272 = vmatmul.f32.gmra.mxu0 %v1271
          %v1273 = vpop.f32.mrf.mxu0
          %v1274 = vadd.f32 0.0, %v1273
          %1275 = vdwg.mxu0
          %1276 = vmatpush.msra.mxu0 0.0
          %1277 = vmatpush.msra.mxu0 0.0
          %1278 = vmatpush.msra.mxu0 0.0
          %1279 = vmatpush.msra.mxu0 0.0
          %1280 = vmatpush.msra.mxu0 0.0
          %1281 = vmatpush.msra.mxu0 0.0
          %1282 = vmatpush.msra.mxu0 0.0
          %1283 = vmatpush.msra.mxu0 0.0
          %1284 = vmatpush.msra.mxu0 0.0
          %1285 = vmatpush.msra.mxu0 0.0
          %v1286 = vand.u32 %v996, 4294901760
          %v1287 = vsub.f32 %v996, %v1286
          %v1288 = vand.u32 %v1287, 4294901760
          %v1289 = vsub.f32 %v1287, %v1288
          %v1290 = vand.u32 %v1289, 4294901760
          %1291 = vmatpush.msra.mxu0 %v1290
          %v1292 = vand.u32 %v991, 4294901760
          %v1293 = vsub.f32 %v991, %v1292
          %v1294 = vand.u32 %v1293, 4294901760
          %v1295 = vsub.f32 %v1293, %v1294
          %v1296 = vand.u32 %v1295, 4294901760
          %1297 = vmatpush.msra.mxu0 %v1296
          %v1298 = vand.u32 %v986, 4294901760
          %v1299 = vsub.f32 %v986, %v1298
          %v1300 = vand.u32 %v1299, 4294901760
          %v1301 = vsub.f32 %v1299, %v1300
          %v1302 = vand.u32 %v1301, 4294901760
          %1303 = vmatpush.msra.mxu0 %v1302
          %v1304 = vand.u32 %v981, 4294901760
          %v1305 = vsub.f32 %v981, %v1304
          %v1306 = vand.u32 %v1305, 4294901760
          %v1307 = vsub.f32 %v1305, %v1306
          %v1308 = vand.u32 %v1307, 4294901760
          %1309 = vmatpush.msra.mxu0 %v1308
          %v1310 = vand.u32 %v976, 4294901760
          %v1311 = vsub.f32 %v976, %v1310
          %v1312 = vand.u32 %v1311, 4294901760
          %v1313 = vsub.f32 %v1311, %v1312
          %v1314 = vand.u32 %v1313, 4294901760
          %1315 = vmatpush.msra.mxu0 %v1314
          %v1316 = vand.u32 %v971, 4294901760
          %v1317 = vsub.f32 %v971, %v1316
          %v1318 = vand.u32 %v1317, 4294901760
          %v1319 = vsub.f32 %v1317, %v1318
          %v1320 = vand.u32 %v1319, 4294901760
          %1321 = vmatpush.msra.mxu0 %v1320
          %v1322 = vand.u32 %v1032, 4294901760
          %1323 = vmatmul.f32.gmra.mxu0 %v1322
          %v1324 = vpop.f32.mrf.mxu0
          %v1325 = vadd.f32 %v1274, %v1324
          %1326 = vdwg.mxu0
          %1327 = vmatpush.msra.mxu0 0.0
          %1328 = vmatpush.msra.mxu0 0.0
          %1329 = vmatpush.msra.mxu0 0.0
          %1330 = vmatpush.msra.mxu0 0.0
          %1331 = vmatpush.msra.mxu0 0.0
          %1332 = vmatpush.msra.mxu0 0.0
          %1333 = vmatpush.msra.mxu0 0.0
          %1334 = vmatpush.msra.mxu0 0.0
          %1335 = vmatpush.msra.mxu0 0.0
          %1336 = vmatpush.msra.mxu0 0.0
          %v1337 = vand.u32 %v996, 4294901760
          %v1338 = vsub.f32 %v996, %v1337
          %1339 = vmatpush.msra.mxu0 %v1338
          %v1340 = vand.u32 %v991, 4294901760
          %v1341 = vsub.f32 %v991, %v1340
          %1342 = vmatpush.msra.mxu0 %v1341
          %v1343 = vand.u32 %v986, 4294901760
          %v1344 = vsub.f32 %v986, %v1343
          %1345 = vmatpush.msra.mxu0 %v1344
          %v1346 = vand.u32 %v981, 4294901760
          %v1347 = vsub.f32 %v981, %v1346
          %1348 = vmatpush.msra.mxu0 %v1347
          %v1349 = vand.u32 %v976, 4294901760
          %v1350 = vsub.f32 %v976, %v1349
          %1351 = vmatpush.msra.mxu0 %v1350
          %v1352 = vand.u32 %v971, 4294901760
          %v1353 = vsub.f32 %v971, %v1352
          %1354 = vmatpush.msra.mxu0 %v1353
          %v1355 = vand.u32 %v1032, 4294901760
          %v1356 = vsub.f32 %v1032, %v1355
          %1357 = vmatmul.f32.gmra.mxu0 %v1356
          %v1358 = vpop.f32.mrf.mxu0
          %v1359 = vadd.f32 %v1325, %v1358
          %1360 = vdwg.mxu0
          %1361 = vmatpush.msra.mxu0 0.0
          %1362 = vmatpush.msra.mxu0 0.0
          %1363 = vmatpush.msra.mxu0 0.0
          %1364 = vmatpush.msra.mxu0 0.0
          %1365 = vmatpush.msra.mxu0 0.0
          %1366 = vmatpush.msra.mxu0 0.0
          %1367 = vmatpush.msra.mxu0 0.0
          %1368 = vmatpush.msra.mxu0 0.0
          %1369 = vmatpush.msra.mxu0 0.0
          %1370 = vmatpush.msra.mxu0 0.0
          %v1371 = vand.u32 %v996, 4294901760
          %1372 = vmatpush.msra.mxu0 %v1371
          %v1373 = vand.u32 %v991, 4294901760
          %1374 = vmatpush.msra.mxu0 %v1373
          %v1375 = vand.u32 %v986, 4294901760
          %1376 = vmatpush.msra.mxu0 %v1375
          %v1377 = vand.u32 %v981, 4294901760
          %1378 = vmatpush.msra.mxu0 %v1377
          %v1379 = vand.u32 %v976, 4294901760
          %1380 = vmatpush.msra.mxu0 %v1379
          %v1381 = vand.u32 %v971, 4294901760
          %1382 = vmatpush.msra.mxu0 %v1381
          %v1383 = vand.u32 %v1032, 4294901760
          %v1384 = vsub.f32 %v1032, %v1383
          %v1385 = vand.u32 %v1384, 4294901760
          %1386 = vmatmul.f32.gmra.mxu0 %v1385
          %v1387 = vpop.f32.mrf.mxu0
          %v1388 = vadd.f32 %v1359, %v1387
          %1389 = vdwg.mxu0
          %1390 = vmatpush.msra.mxu0 0.0
          %1391 = vmatpush.msra.mxu0 0.0
          %1392 = vmatpush.msra.mxu0 0.0
          %1393 = vmatpush.msra.mxu0 0.0
          %1394 = vmatpush.msra.mxu0 0.0
          %1395 = vmatpush.msra.mxu0 0.0
          %1396 = vmatpush.msra.mxu0 0.0
          %1397 = vmatpush.msra.mxu0 0.0
          %1398 = vmatpush.msra.mxu0 0.0
          %1399 = vmatpush.msra.mxu0 0.0
          %v1400 = vand.u32 %v996, 4294901760
          %v1401 = vsub.f32 %v996, %v1400
          %v1402 = vand.u32 %v1401, 4294901760
          %1403 = vmatpush.msra.mxu0 %v1402
          %v1404 = vand.u32 %v991, 4294901760
          %v1405 = vsub.f32 %v991, %v1404
          %v1406 = vand.u32 %v1405, 4294901760
          %1407 = vmatpush.msra.mxu0 %v1406
          %v1408 = vand.u32 %v986, 4294901760
          %v1409 = vsub.f32 %v986, %v1408
          %v1410 = vand.u32 %v1409, 4294901760
          %1411 = vmatpush.msra.mxu0 %v1410
          %v1412 = vand.u32 %v981, 4294901760
          %v1413 = vsub.f32 %v981, %v1412
          %v1414 = vand.u32 %v1413, 4294901760
          %1415 = vmatpush.msra.mxu0 %v1414
          %v1416 = vand.u32 %v976, 4294901760
          %v1417 = vsub.f32 %v976, %v1416
          %v1418 = vand.u32 %v1417, 4294901760
          %1419 = vmatpush.msra.mxu0 %v1418
          %v1420 = vand.u32 %v971, 4294901760
          %v1421 = vsub.f32 %v971, %v1420
          %v1422 = vand.u32 %v1421, 4294901760
          %1423 = vmatpush.msra.mxu0 %v1422
          %v1424 = vand.u32 %v1032, 4294901760
          %1425 = vmatmul.f32.gmra.mxu0 %v1424
          %v1426 = vpop.f32.mrf.mxu0
          %v1427 = vadd.f32 %v1388, %v1426
          %1428 = vdwg.mxu0
          %1429 = vmatpush.msra.mxu0 0.0
          %1430 = vmatpush.msra.mxu0 0.0
          %1431 = vmatpush.msra.mxu0 0.0
          %1432 = vmatpush.msra.mxu0 0.0
          %1433 = vmatpush.msra.mxu0 0.0
          %1434 = vmatpush.msra.mxu0 0.0
          %1435 = vmatpush.msra.mxu0 0.0
          %1436 = vmatpush.msra.mxu0 0.0
          %1437 = vmatpush.msra.mxu0 0.0
          %1438 = vmatpush.msra.mxu0 0.0
          %v1439 = vand.u32 %v996, 4294901760
          %1440 = vmatpush.msra.mxu0 %v1439
          %v1441 = vand.u32 %v991, 4294901760
          %1442 = vmatpush.msra.mxu0 %v1441
          %v1443 = vand.u32 %v986, 4294901760
          %1444 = vmatpush.msra.mxu0 %v1443
          %v1445 = vand.u32 %v981, 4294901760
          %1446 = vmatpush.msra.mxu0 %v1445
          %v1447 = vand.u32 %v976, 4294901760
          %1448 = vmatpush.msra.mxu0 %v1447
          %v1449 = vand.u32 %v971, 4294901760
          %1450 = vmatpush.msra.mxu0 %v1449
          %v1451 = vand.u32 %v1032, 4294901760
          %1452 = vmatmul.f32.gmra.mxu0 %v1451
          %v1453 = vpop.f32.mrf.mxu0
          %v1454 = vadd.f32 %v1427, %v1453
          %1455 = vdwg.mxu0
          %1456 = vmatpush.msra.mxu0 0.0
          %1457 = vmatpush.msra.mxu0 0.0
          %1458 = vmatpush.msra.mxu0 0.0
          %1459 = vmatpush.msra.mxu0 0.0
          %1460 = vmatpush.msra.mxu0 0.0
          %1461 = vmatpush.msra.mxu0 0.0
          %1462 = vmatpush.msra.mxu0 0.0
          %1463 = vmatpush.msra.mxu0 0.0
          %1464 = vmatpush.msra.mxu0 0.0
          %1465 = vmatpush.msra.mxu0 0.0
          %v1466 = vand.u32 %v997, 4294901760
          %1467 = vmatpush.msra.mxu0 %v1466
          %v1468 = vand.u32 %v992, 4294901760
          %1469 = vmatpush.msra.mxu0 %v1468
          %v1470 = vand.u32 %v987, 4294901760
          %1471 = vmatpush.msra.mxu0 %v1470
          %v1472 = vand.u32 %v982, 4294901760
          %1473 = vmatpush.msra.mxu0 %v1472
          %v1474 = vand.u32 %v977, 4294901760
          %1475 = vmatpush.msra.mxu0 %v1474
          %v1476 = vand.u32 %v972, 4294901760
          %1477 = vmatpush.msra.mxu0 %v1476
          %v1478 = vand.u32 %v1032, 4294901760
          %v1479 = vsub.f32 %v1032, %v1478
          %v1480 = vand.u32 %v1479, 4294901760
          %v1481 = vsub.f32 %v1479, %v1480
          %v1482 = vand.u32 %v1481, 4294901760
          %1483 = vmatmul.f32.gmra.mxu0 %v1482
          %v1484 = vpop.f32.mrf.mxu0
          %v1485 = vadd.f32 0.0, %v1484
          %1486 = vdwg.mxu0
          %1487 = vmatpush.msra.mxu0 0.0
          %1488 = vmatpush.msra.mxu0 0.0
          %1489 = vmatpush.msra.mxu0 0.0
          %1490 = vmatpush.msra.mxu0 0.0
          %1491 = vmatpush.msra.mxu0 0.0
          %1492 = vmatpush.msra.mxu0 0.0
          %1493 = vmatpush.msra.mxu0 0.0
          %1494 = vmatpush.msra.mxu0 0.0
          %1495 = vmatpush.msra.mxu0 0.0
          %1496 = vmatpush.msra.mxu0 0.0
          %v1497 = vand.u32 %v997, 4294901760
          %v1498 = vsub.f32 %v997, %v1497
          %v1499 = vand.u32 %v1498, 4294901760
          %v1500 = vsub.f32 %v1498, %v1499
          %v1501 = vand.u32 %v1500, 4294901760
          %1502 = vmatpush.msra.mxu0 %v1501
          %v1503 = vand.u32 %v992, 4294901760
          %v1504 = vsub.f32 %v992, %v1503
          %v1505 = vand.u32 %v1504, 4294901760
          %v1506 = vsub.f32 %v1504, %v1505
          %v1507 = vand.u32 %v1506, 4294901760
          %1508 = vmatpush.msra.mxu0 %v1507
          %v1509 = vand.u32 %v987, 4294901760
          %v1510 = vsub.f32 %v987, %v1509
          %v1511 = vand.u32 %v1510, 4294901760
          %v1512 = vsub.f32 %v1510, %v1511
          %v1513 = vand.u32 %v1512, 4294901760
          %1514 = vmatpush.msra.mxu0 %v1513
          %v1515 = vand.u32 %v982, 4294901760
          %v1516 = vsub.f32 %v982, %v1515
          %v1517 = vand.u32 %v1516, 4294901760
          %v1518 = vsub.f32 %v1516, %v1517
          %v1519 = vand.u32 %v1518, 4294901760
          %1520 = vmatpush.msra.mxu0 %v1519
          %v1521 = vand.u32 %v977, 4294901760
          %v1522 = vsub.f32 %v977, %v1521
          %v1523 = vand.u32 %v1522, 4294901760
          %v1524 = vsub.f32 %v1522, %v1523
          %v1525 = vand.u32 %v1524, 4294901760
          %1526 = vmatpush.msra.mxu0 %v1525
          %v1527 = vand.u32 %v972, 4294901760
          %v1528 = vsub.f32 %v972, %v1527
          %v1529 = vand.u32 %v1528, 4294901760
          %v1530 = vsub.f32 %v1528, %v1529
          %v1531 = vand.u32 %v1530, 4294901760
          %1532 = vmatpush.msra.mxu0 %v1531
          %v1533 = vand.u32 %v1032, 4294901760
          %1534 = vmatmul.f32.gmra.mxu0 %v1533
          %v1535 = vpop.f32.mrf.mxu0
          %v1536 = vadd.f32 %v1485, %v1535
          %1537 = vdwg.mxu0
          %1538 = vmatpush.msra.mxu0 0.0
          %1539 = vmatpush.msra.mxu0 0.0
          %1540 = vmatpush.msra.mxu0 0.0
          %1541 = vmatpush.msra.mxu0 0.0
          %1542 = vmatpush.msra.mxu0 0.0
          %1543 = vmatpush.msra.mxu0 0.0
          %1544 = vmatpush.msra.mxu0 0.0
          %1545 = vmatpush.msra.mxu0 0.0
          %1546 = vmatpush.msra.mxu0 0.0
          %1547 = vmatpush.msra.mxu0 0.0
          %v1548 = vand.u32 %v997, 4294901760
          %v1549 = vsub.f32 %v997, %v1548
          %1550 = vmatpush.msra.mxu0 %v1549
          %v1551 = vand.u32 %v992, 4294901760
          %v1552 = vsub.f32 %v992, %v1551
          %1553 = vmatpush.msra.mxu0 %v1552
          %v1554 = vand.u32 %v987, 4294901760
          %v1555 = vsub.f32 %v987, %v1554
          %1556 = vmatpush.msra.mxu0 %v1555
          %v1557 = vand.u32 %v982, 4294901760
          %v1558 = vsub.f32 %v982, %v1557
          %1559 = vmatpush.msra.mxu0 %v1558
          %v1560 = vand.u32 %v977, 4294901760
          %v1561 = vsub.f32 %v977, %v1560
          %1562 = vmatpush.msra.mxu0 %v1561
          %v1563 = vand.u32 %v972, 4294901760
          %v1564 = vsub.f32 %v972, %v1563
          %1565 = vmatpush.msra.mxu0 %v1564
          %v1566 = vand.u32 %v1032, 4294901760
          %v1567 = vsub.f32 %v1032, %v1566
          %1568 = vmatmul.f32.gmra.mxu0 %v1567
          %v1569 = vpop.f32.mrf.mxu0
          %v1570 = vadd.f32 %v1536, %v1569
          %1571 = vdwg.mxu0
          %1572 = vmatpush.msra.mxu0 0.0
          %1573 = vmatpush.msra.mxu0 0.0
          %1574 = vmatpush.msra.mxu0 0.0
          %1575 = vmatpush.msra.mxu0 0.0
          %1576 = vmatpush.msra.mxu0 0.0
          %1577 = vmatpush.msra.mxu0 0.0
          %1578 = vmatpush.msra.mxu0 0.0
          %1579 = vmatpush.msra.mxu0 0.0
          %1580 = vmatpush.msra.mxu0 0.0
          %1581 = vmatpush.msra.mxu0 0.0
          %v1582 = vand.u32 %v997, 4294901760
          %1583 = vmatpush.msra.mxu0 %v1582
          %v1584 = vand.u32 %v992, 4294901760
          %1585 = vmatpush.msra.mxu0 %v1584
          %v1586 = vand.u32 %v987, 4294901760
          %1587 = vmatpush.msra.mxu0 %v1586
          %v1588 = vand.u32 %v982, 4294901760
          %1589 = vmatpush.msra.mxu0 %v1588
          %v1590 = vand.u32 %v977, 4294901760
          %1591 = vmatpush.msra.mxu0 %v1590
          %v1592 = vand.u32 %v972, 4294901760
          %1593 = vmatpush.msra.mxu0 %v1592
          %v1594 = vand.u32 %v1032, 4294901760
          %v1595 = vsub.f32 %v1032, %v1594
          %v1596 = vand.u32 %v1595, 4294901760
          %1597 = vmatmul.f32.gmra.mxu0 %v1596
          %v1598 = vpop.f32.mrf.mxu0
          %v1599 = vadd.f32 %v1570, %v1598
          %1600 = vdwg.mxu0
          %1601 = vmatpush.msra.mxu0 0.0
          %1602 = vmatpush.msra.mxu0 0.0
          %1603 = vmatpush.msra.mxu0 0.0
          %1604 = vmatpush.msra.mxu0 0.0
          %1605 = vmatpush.msra.mxu0 0.0
          %1606 = vmatpush.msra.mxu0 0.0
          %1607 = vmatpush.msra.mxu0 0.0
          %1608 = vmatpush.msra.mxu0 0.0
          %1609 = vmatpush.msra.mxu0 0.0
          %1610 = vmatpush.msra.mxu0 0.0
          %v1611 = vand.u32 %v997, 4294901760
          %v1612 = vsub.f32 %v997, %v1611
          %v1613 = vand.u32 %v1612, 4294901760
          %1614 = vmatpush.msra.mxu0 %v1613
          %v1615 = vand.u32 %v992, 4294901760
          %v1616 = vsub.f32 %v992, %v1615
          %v1617 = vand.u32 %v1616, 4294901760
          %1618 = vmatpush.msra.mxu0 %v1617
          %v1619 = vand.u32 %v987, 4294901760
          %v1620 = vsub.f32 %v987, %v1619
          %v1621 = vand.u32 %v1620, 4294901760
          %1622 = vmatpush.msra.mxu0 %v1621
          %v1623 = vand.u32 %v982, 4294901760
          %v1624 = vsub.f32 %v982, %v1623
          %v1625 = vand.u32 %v1624, 4294901760
          %1626 = vmatpush.msra.mxu0 %v1625
          %v1627 = vand.u32 %v977, 4294901760
          %v1628 = vsub.f32 %v977, %v1627
          %v1629 = vand.u32 %v1628, 4294901760
          %1630 = vmatpush.msra.mxu0 %v1629
          %v1631 = vand.u32 %v972, 4294901760
          %v1632 = vsub.f32 %v972, %v1631
          %v1633 = vand.u32 %v1632, 4294901760
          %1634 = vmatpush.msra.mxu0 %v1633
          %v1635 = vand.u32 %v1032, 4294901760
          %1636 = vmatmul.f32.gmra.mxu0 %v1635
          %v1637 = vpop.f32.mrf.mxu0
          %v1638 = vadd.f32 %v1599, %v1637
          %1639 = vdwg.mxu0
          %1640 = vmatpush.msra.mxu0 0.0
          %1641 = vmatpush.msra.mxu0 0.0
          %1642 = vmatpush.msra.mxu0 0.0
          %1643 = vmatpush.msra.mxu0 0.0
          %1644 = vmatpush.msra.mxu0 0.0
          %1645 = vmatpush.msra.mxu0 0.0
          %1646 = vmatpush.msra.mxu0 0.0
          %1647 = vmatpush.msra.mxu0 0.0
          %1648 = vmatpush.msra.mxu0 0.0
          %1649 = vmatpush.msra.mxu0 0.0
          %v1650 = vand.u32 %v997, 4294901760
          %1651 = vmatpush.msra.mxu0 %v1650
          %v1652 = vand.u32 %v992, 4294901760
          %1653 = vmatpush.msra.mxu0 %v1652
          %v1654 = vand.u32 %v987, 4294901760
          %1655 = vmatpush.msra.mxu0 %v1654
          %v1656 = vand.u32 %v982, 4294901760
          %1657 = vmatpush.msra.mxu0 %v1656
          %v1658 = vand.u32 %v977, 4294901760
          %1659 = vmatpush.msra.mxu0 %v1658
          %v1660 = vand.u32 %v972, 4294901760
          %1661 = vmatpush.msra.mxu0 %v1660
          %v1662 = vand.u32 %v1032, 4294901760
          %1663 = vmatmul.f32.gmra.mxu0 %v1662
          %v1664 = vpop.f32.mrf.mxu0
          %v1665 = vadd.f32 %v1638, %v1664
          %1666 = vdwg.mxu0
          %1667 = vmatpush.msra.mxu0 0.0
          %1668 = vmatpush.msra.mxu0 0.0
          %1669 = vmatpush.msra.mxu0 0.0
          %1670 = vmatpush.msra.mxu0 0.0
          %1671 = vmatpush.msra.mxu0 0.0
          %1672 = vmatpush.msra.mxu0 0.0
          %1673 = vmatpush.msra.mxu0 0.0
          %1674 = vmatpush.msra.mxu0 0.0
          %1675 = vmatpush.msra.mxu0 0.0
          %1676 = vmatpush.msra.mxu0 0.0
          %v1677 = vand.u32 %v998, 4294901760
          %1678 = vmatpush.msra.mxu0 %v1677
          %v1679 = vand.u32 %v993, 4294901760
          %1680 = vmatpush.msra.mxu0 %v1679
          %v1681 = vand.u32 %v988, 4294901760
          %1682 = vmatpush.msra.mxu0 %v1681
          %v1683 = vand.u32 %v983, 4294901760
          %1684 = vmatpush.msra.mxu0 %v1683
          %v1685 = vand.u32 %v978, 4294901760
          %1686 = vmatpush.msra.mxu0 %v1685
          %v1687 = vand.u32 %v973, 4294901760
          %1688 = vmatpush.msra.mxu0 %v1687
          %v1689 = vand.u32 %v1032, 4294901760
          %v1690 = vsub.f32 %v1032, %v1689
          %v1691 = vand.u32 %v1690, 4294901760
          %v1692 = vsub.f32 %v1690, %v1691
          %v1693 = vand.u32 %v1692, 4294901760
          %1694 = vmatmul.f32.gmra.mxu0 %v1693
          %v1695 = vpop.f32.mrf.mxu0
          %v1696 = vadd.f32 0.0, %v1695
          %1697 = vdwg.mxu0
          %1698 = vmatpush.msra.mxu0 0.0
          %1699 = vmatpush.msra.mxu0 0.0
          %1700 = vmatpush.msra.mxu0 0.0
          %1701 = vmatpush.msra.mxu0 0.0
          %1702 = vmatpush.msra.mxu0 0.0
          %1703 = vmatpush.msra.mxu0 0.0
          %1704 = vmatpush.msra.mxu0 0.0
          %1705 = vmatpush.msra.mxu0 0.0
          %1706 = vmatpush.msra.mxu0 0.0
          %1707 = vmatpush.msra.mxu0 0.0
          %v1708 = vand.u32 %v998, 4294901760
          %v1709 = vsub.f32 %v998, %v1708
          %v1710 = vand.u32 %v1709, 4294901760
          %v1711 = vsub.f32 %v1709, %v1710
          %v1712 = vand.u32 %v1711, 4294901760
          %1713 = vmatpush.msra.mxu0 %v1712
          %v1714 = vand.u32 %v993, 4294901760
          %v1715 = vsub.f32 %v993, %v1714
          %v1716 = vand.u32 %v1715, 4294901760
          %v1717 = vsub.f32 %v1715, %v1716
          %v1718 = vand.u32 %v1717, 4294901760
          %1719 = vmatpush.msra.mxu0 %v1718
          %v1720 = vand.u32 %v988, 4294901760
          %v1721 = vsub.f32 %v988, %v1720
          %v1722 = vand.u32 %v1721, 4294901760
          %v1723 = vsub.f32 %v1721, %v1722
          %v1724 = vand.u32 %v1723, 4294901760
          %1725 = vmatpush.msra.mxu0 %v1724
          %v1726 = vand.u32 %v983, 4294901760
          %v1727 = vsub.f32 %v983, %v1726
          %v1728 = vand.u32 %v1727, 4294901760
          %v1729 = vsub.f32 %v1727, %v1728
          %v1730 = vand.u32 %v1729, 4294901760
          %1731 = vmatpush.msra.mxu0 %v1730
          %v1732 = vand.u32 %v978, 4294901760
          %v1733 = vsub.f32 %v978, %v1732
          %v1734 = vand.u32 %v1733, 4294901760
          %v1735 = vsub.f32 %v1733, %v1734
          %v1736 = vand.u32 %v1735, 4294901760
          %1737 = vmatpush.msra.mxu0 %v1736
          %v1738 = vand.u32 %v973, 4294901760
          %v1739 = vsub.f32 %v973, %v1738
          %v1740 = vand.u32 %v1739, 4294901760
          %v1741 = vsub.f32 %v1739, %v1740
          %v1742 = vand.u32 %v1741, 4294901760
          %1743 = vmatpush.msra.mxu0 %v1742
          %v1744 = vand.u32 %v1032, 4294901760
          %1745 = vmatmul.f32.gmra.mxu0 %v1744
          %v1746 = vpop.f32.mrf.mxu0
          %v1747 = vadd.f32 %v1696, %v1746
          %1748 = vdwg.mxu0
          %1749 = vmatpush.msra.mxu0 0.0
          %1750 = vmatpush.msra.mxu0 0.0
          %1751 = vmatpush.msra.mxu0 0.0
          %1752 = vmatpush.msra.mxu0 0.0
          %1753 = vmatpush.msra.mxu0 0.0
          %1754 = vmatpush.msra.mxu0 0.0
          %1755 = vmatpush.msra.mxu0 0.0
          %1756 = vmatpush.msra.mxu0 0.0
          %1757 = vmatpush.msra.mxu0 0.0
          %1758 = vmatpush.msra.mxu0 0.0
          %v1759 = vand.u32 %v998, 4294901760
          %v1760 = vsub.f32 %v998, %v1759
          %1761 = vmatpush.msra.mxu0 %v1760
          %v1762 = vand.u32 %v993, 4294901760
          %v1763 = vsub.f32 %v993, %v1762
          %1764 = vmatpush.msra.mxu0 %v1763
          %v1765 = vand.u32 %v988, 4294901760
          %v1766 = vsub.f32 %v988, %v1765
          %1767 = vmatpush.msra.mxu0 %v1766
          %v1768 = vand.u32 %v983, 4294901760
          %v1769 = vsub.f32 %v983, %v1768
          %1770 = vmatpush.msra.mxu0 %v1769
          %v1771 = vand.u32 %v978, 4294901760
          %v1772 = vsub.f32 %v978, %v1771
          %1773 = vmatpush.msra.mxu0 %v1772
          %v1774 = vand.u32 %v973, 4294901760
          %v1775 = vsub.f32 %v973, %v1774
          %1776 = vmatpush.msra.mxu0 %v1775
          %v1777 = vand.u32 %v1032, 4294901760
          %v1778 = vsub.f32 %v1032, %v1777
          %1779 = vmatmul.f32.gmra.mxu0 %v1778
          %v1780 = vpop.f32.mrf.mxu0
          %v1781 = vadd.f32 %v1747, %v1780
          %1782 = vdwg.mxu0
          %1783 = vmatpush.msra.mxu0 0.0
          %1784 = vmatpush.msra.mxu0 0.0
          %1785 = vmatpush.msra.mxu0 0.0
          %1786 = vmatpush.msra.mxu0 0.0
          %1787 = vmatpush.msra.mxu0 0.0
          %1788 = vmatpush.msra.mxu0 0.0
          %1789 = vmatpush.msra.mxu0 0.0
          %1790 = vmatpush.msra.mxu0 0.0
          %1791 = vmatpush.msra.mxu0 0.0
          %1792 = vmatpush.msra.mxu0 0.0
          %v1793 = vand.u32 %v998, 4294901760
          %1794 = vmatpush.msra.mxu0 %v1793
          %v1795 = vand.u32 %v993, 4294901760
          %1796 = vmatpush.msra.mxu0 %v1795
          %v1797 = vand.u32 %v988, 4294901760
          %1798 = vmatpush.msra.mxu0 %v1797
          %v1799 = vand.u32 %v983, 4294901760
          %1800 = vmatpush.msra.mxu0 %v1799
          %v1801 = vand.u32 %v978, 4294901760
          %1802 = vmatpush.msra.mxu0 %v1801
          %v1803 = vand.u32 %v973, 4294901760
          %1804 = vmatpush.msra.mxu0 %v1803
          %v1805 = vand.u32 %v1032, 4294901760
          %v1806 = vsub.f32 %v1032, %v1805
          %v1807 = vand.u32 %v1806, 4294901760
          %1808 = vmatmul.f32.gmra.mxu0 %v1807
          %v1809 = vpop.f32.mrf.mxu0
          %v1810 = vadd.f32 %v1781, %v1809
          %1811 = vdwg.mxu0
          %1812 = vmatpush.msra.mxu0 0.0
          %1813 = vmatpush.msra.mxu0 0.0
          %1814 = vmatpush.msra.mxu0 0.0
          %1815 = vmatpush.msra.mxu0 0.0
          %1816 = vmatpush.msra.mxu0 0.0
          %1817 = vmatpush.msra.mxu0 0.0
          %1818 = vmatpush.msra.mxu0 0.0
          %1819 = vmatpush.msra.mxu0 0.0
          %1820 = vmatpush.msra.mxu0 0.0
          %1821 = vmatpush.msra.mxu0 0.0
          %v1822 = vand.u32 %v998, 4294901760
          %v1823 = vsub.f32 %v998, %v1822
          %v1824 = vand.u32 %v1823, 4294901760
          %1825 = vmatpush.msra.mxu0 %v1824
          %v1826 = vand.u32 %v993, 4294901760
          %v1827 = vsub.f32 %v993, %v1826
          %v1828 = vand.u32 %v1827, 4294901760
          %1829 = vmatpush.msra.mxu0 %v1828
          %v1830 = vand.u32 %v988, 4294901760
          %v1831 = vsub.f32 %v988, %v1830
          %v1832 = vand.u32 %v1831, 4294901760
          %1833 = vmatpush.msra.mxu0 %v1832
          %v1834 = vand.u32 %v983, 4294901760
          %v1835 = vsub.f32 %v983, %v1834
          %v1836 = vand.u32 %v1835, 4294901760
          %1837 = vmatpush.msra.mxu0 %v1836
          %v1838 = vand.u32 %v978, 4294901760
          %v1839 = vsub.f32 %v978, %v1838
          %v1840 = vand.u32 %v1839, 4294901760
          %1841 = vmatpush.msra.mxu0 %v1840
          %v1842 = vand.u32 %v973, 4294901760
          %v1843 = vsub.f32 %v973, %v1842
          %v1844 = vand.u32 %v1843, 4294901760
          %1845 = vmatpush.msra.mxu0 %v1844
          %v1846 = vand.u32 %v1032, 4294901760
          %1847 = vmatmul.f32.gmra.mxu0 %v1846
          %v1848 = vpop.f32.mrf.mxu0
          %v1849 = vadd.f32 %v1810, %v1848
          %1850 = vdwg.mxu0
          %1851 = vmatpush.msra.mxu0 0.0
          %1852 = vmatpush.msra.mxu0 0.0
          %1853 = vmatpush.msra.mxu0 0.0
          %1854 = vmatpush.msra.mxu0 0.0
          %1855 = vmatpush.msra.mxu0 0.0
          %1856 = vmatpush.msra.mxu0 0.0
          %1857 = vmatpush.msra.mxu0 0.0
          %1858 = vmatpush.msra.mxu0 0.0
          %1859 = vmatpush.msra.mxu0 0.0
          %1860 = vmatpush.msra.mxu0 0.0
          %v1861 = vand.u32 %v998, 4294901760
          %1862 = vmatpush.msra.mxu0 %v1861
          %v1863 = vand.u32 %v993, 4294901760
          %1864 = vmatpush.msra.mxu0 %v1863
          %v1865 = vand.u32 %v988, 4294901760
          %1866 = vmatpush.msra.mxu0 %v1865
          %v1867 = vand.u32 %v983, 4294901760
          %1868 = vmatpush.msra.mxu0 %v1867
          %v1869 = vand.u32 %v978, 4294901760
          %1870 = vmatpush.msra.mxu0 %v1869
          %v1871 = vand.u32 %v973, 4294901760
          %1872 = vmatpush.msra.mxu0 %v1871
          %v1873 = vand.u32 %v1032, 4294901760
          %1874 = vmatmul.f32.gmra.mxu0 %v1873
          %v1875 = vpop.f32.mrf.mxu0
          %v1876 = vadd.f32 %v1849, %v1875
          %1877 = vdwg.mxu0
          %1878 = vmatpush.msra.mxu0 0.0
          %1879 = vmatpush.msra.mxu0 0.0
          %1880 = vmatpush.msra.mxu0 0.0
          %1881 = vmatpush.msra.mxu0 0.0
          %1882 = vmatpush.msra.mxu0 0.0
          %1883 = vmatpush.msra.mxu0 0.0
          %1884 = vmatpush.msra.mxu0 0.0
          %1885 = vmatpush.msra.mxu0 0.0
          %1886 = vmatpush.msra.mxu0 0.0
          %1887 = vmatpush.msra.mxu0 0.0
          %v1888 = vand.u32 %v999, 4294901760
          %1889 = vmatpush.msra.mxu0 %v1888
          %v1890 = vand.u32 %v994, 4294901760
          %1891 = vmatpush.msra.mxu0 %v1890
          %v1892 = vand.u32 %v989, 4294901760
          %1893 = vmatpush.msra.mxu0 %v1892
          %v1894 = vand.u32 %v984, 4294901760
          %1895 = vmatpush.msra.mxu0 %v1894
          %v1896 = vand.u32 %v979, 4294901760
          %1897 = vmatpush.msra.mxu0 %v1896
          %v1898 = vand.u32 %v974, 4294901760
          %1899 = vmatpush.msra.mxu0 %v1898
          %v1900 = vand.u32 %v1032, 4294901760
          %v1901 = vsub.f32 %v1032, %v1900
          %v1902 = vand.u32 %v1901, 4294901760
          %v1903 = vsub.f32 %v1901, %v1902
          %v1904 = vand.u32 %v1903, 4294901760
          %1905 = vmatmul.f32.gmra.mxu0 %v1904
          %v1906 = vpop.f32.mrf.mxu0
          %v1907 = vadd.f32 0.0, %v1906
          %1908 = vdwg.mxu0
          %1909 = vmatpush.msra.mxu0 0.0
          %1910 = vmatpush.msra.mxu0 0.0
          %1911 = vmatpush.msra.mxu0 0.0
          %1912 = vmatpush.msra.mxu0 0.0
          %1913 = vmatpush.msra.mxu0 0.0
          %1914 = vmatpush.msra.mxu0 0.0
          %1915 = vmatpush.msra.mxu0 0.0
          %1916 = vmatpush.msra.mxu0 0.0
          %1917 = vmatpush.msra.mxu0 0.0
          %1918 = vmatpush.msra.mxu0 0.0
          %v1919 = vand.u32 %v999, 4294901760
          %v1920 = vsub.f32 %v999, %v1919
          %v1921 = vand.u32 %v1920, 4294901760
          %v1922 = vsub.f32 %v1920, %v1921
          %v1923 = vand.u32 %v1922, 4294901760
          %1924 = vmatpush.msra.mxu0 %v1923
          %v1925 = vand.u32 %v994, 4294901760
          %v1926 = vsub.f32 %v994, %v1925
          %v1927 = vand.u32 %v1926, 4294901760
          %v1928 = vsub.f32 %v1926, %v1927
          %v1929 = vand.u32 %v1928, 4294901760
          %1930 = vmatpush.msra.mxu0 %v1929
          %v1931 = vand.u32 %v989, 4294901760
          %v1932 = vsub.f32 %v989, %v1931
          %v1933 = vand.u32 %v1932, 4294901760
          %v1934 = vsub.f32 %v1932, %v1933
          %v1935 = vand.u32 %v1934, 4294901760
          %1936 = vmatpush.msra.mxu0 %v1935
          %v1937 = vand.u32 %v984, 4294901760
          %v1938 = vsub.f32 %v984, %v1937
          %v1939 = vand.u32 %v1938, 4294901760
          %v1940 = vsub.f32 %v1938, %v1939
          %v1941 = vand.u32 %v1940, 4294901760
          %1942 = vmatpush.msra.mxu0 %v1941
          %v1943 = vand.u32 %v979, 4294901760
          %v1944 = vsub.f32 %v979, %v1943
          %v1945 = vand.u32 %v1944, 4294901760
          %v1946 = vsub.f32 %v1944, %v1945
          %v1947 = vand.u32 %v1946, 4294901760
          %1948 = vmatpush.msra.mxu0 %v1947
          %v1949 = vand.u32 %v974, 4294901760
          %v1950 = vsub.f32 %v974, %v1949
          %v1951 = vand.u32 %v1950, 4294901760
          %v1952 = vsub.f32 %v1950, %v1951
          %v1953 = vand.u32 %v1952, 4294901760
          %1954 = vmatpush.msra.mxu0 %v1953
          %v1955 = vand.u32 %v1032, 4294901760
          %1956 = vmatmul.f32.gmra.mxu0 %v1955
          %v1957 = vpop.f32.mrf.mxu0
          %v1958 = vadd.f32 %v1907, %v1957
          %1959 = vdwg.mxu0
          %1960 = vmatpush.msra.mxu0 0.0
          %1961 = vmatpush.msra.mxu0 0.0
          %1962 = vmatpush.msra.mxu0 0.0
          %1963 = vmatpush.msra.mxu0 0.0
          %1964 = vmatpush.msra.mxu0 0.0
          %1965 = vmatpush.msra.mxu0 0.0
          %1966 = vmatpush.msra.mxu0 0.0
          %1967 = vmatpush.msra.mxu0 0.0
          %1968 = vmatpush.msra.mxu0 0.0
          %1969 = vmatpush.msra.mxu0 0.0
          %v1970 = vand.u32 %v999, 4294901760
          %v1971 = vsub.f32 %v999, %v1970
          %1972 = vmatpush.msra.mxu0 %v1971
          %v1973 = vand.u32 %v994, 4294901760
          %v1974 = vsub.f32 %v994, %v1973
          %1975 = vmatpush.msra.mxu0 %v1974
          %v1976 = vand.u32 %v989, 4294901760
          %v1977 = vsub.f32 %v989, %v1976
          %1978 = vmatpush.msra.mxu0 %v1977
          %v1979 = vand.u32 %v984, 4294901760
          %v1980 = vsub.f32 %v984, %v1979
          %1981 = vmatpush.msra.mxu0 %v1980
          %v1982 = vand.u32 %v979, 4294901760
          %v1983 = vsub.f32 %v979, %v1982
          %1984 = vmatpush.msra.mxu0 %v1983
          %v1985 = vand.u32 %v974, 4294901760
          %v1986 = vsub.f32 %v974, %v1985
          %1987 = vmatpush.msra.mxu0 %v1986
          %v1988 = vand.u32 %v1032, 4294901760
          %v1989 = vsub.f32 %v1032, %v1988
          %1990 = vmatmul.f32.gmra.mxu0 %v1989
          %v1991 = vpop.f32.mrf.mxu0
          %v1992 = vadd.f32 %v1958, %v1991
          %1993 = vdwg.mxu0
          %1994 = vmatpush.msra.mxu0 0.0
          %1995 = vmatpush.msra.mxu0 0.0
          %1996 = vmatpush.msra.mxu0 0.0
          %1997 = vmatpush.msra.mxu0 0.0
          %1998 = vmatpush.msra.mxu0 0.0
          %1999 = vmatpush.msra.mxu0 0.0
          %2000 = vmatpush.msra.mxu0 0.0
          %2001 = vmatpush.msra.mxu0 0.0
          %2002 = vmatpush.msra.mxu0 0.0
          %2003 = vmatpush.msra.mxu0 0.0
          %v2004 = vand.u32 %v999, 4294901760
          %2005 = vmatpush.msra.mxu0 %v2004
          %v2006 = vand.u32 %v994, 4294901760
          %2007 = vmatpush.msra.mxu0 %v2006
          %v2008 = vand.u32 %v989, 4294901760
          %2009 = vmatpush.msra.mxu0 %v2008
          %v2010 = vand.u32 %v984, 4294901760
          %2011 = vmatpush.msra.mxu0 %v2010
          %v2012 = vand.u32 %v979, 4294901760
          %2013 = vmatpush.msra.mxu0 %v2012
          %v2014 = vand.u32 %v974, 4294901760
          %2015 = vmatpush.msra.mxu0 %v2014
          %v2016 = vand.u32 %v1032, 4294901760
          %v2017 = vsub.f32 %v1032, %v2016
          %v2018 = vand.u32 %v2017, 4294901760
          %2019 = vmatmul.f32.gmra.mxu0 %v2018
          %v2020 = vpop.f32.mrf.mxu0
          %v2021 = vadd.f32 %v1992, %v2020
          %2022 = vdwg.mxu0
          %2023 = vmatpush.msra.mxu0 0.0
          %2024 = vmatpush.msra.mxu0 0.0
          %2025 = vmatpush.msra.mxu0 0.0
          %2026 = vmatpush.msra.mxu0 0.0
          %2027 = vmatpush.msra.mxu0 0.0
          %2028 = vmatpush.msra.mxu0 0.0
          %2029 = vmatpush.msra.mxu0 0.0
          %2030 = vmatpush.msra.mxu0 0.0
          %2031 = vmatpush.msra.mxu0 0.0
          %2032 = vmatpush.msra.mxu0 0.0
          %v2033 = vand.u32 %v999, 4294901760
          %v2034 = vsub.f32 %v999, %v2033
          %v2035 = vand.u32 %v2034, 4294901760
          %2036 = vmatpush.msra.mxu0 %v2035
          %v2037 = vand.u32 %v994, 4294901760
          %v2038 = vsub.f32 %v994, %v2037
          %v2039 = vand.u32 %v2038, 4294901760
          %2040 = vmatpush.msra.mxu0 %v2039
          %v2041 = vand.u32 %v989, 4294901760
          %v2042 = vsub.f32 %v989, %v2041
          %v2043 = vand.u32 %v2042, 4294901760
          %2044 = vmatpush.msra.mxu0 %v2043
          %v2045 = vand.u32 %v984, 4294901760
          %v2046 = vsub.f32 %v984, %v2045
          %v2047 = vand.u32 %v2046, 4294901760
          %2048 = vmatpush.msra.mxu0 %v2047
          %v2049 = vand.u32 %v979, 4294901760
          %v2050 = vsub.f32 %v979, %v2049
          %v2051 = vand.u32 %v2050, 4294901760
          %2052 = vmatpush.msra.mxu0 %v2051
          %v2053 = vand.u32 %v974, 4294901760
          %v2054 = vsub.f32 %v974, %v2053
          %v2055 = vand.u32 %v2054, 4294901760
          %2056 = vmatpush.msra.mxu0 %v2055
          %v2057 = vand.u32 %v1032, 4294901760
          %2058 = vmatmul.f32.gmra.mxu0 %v2057
          %v2059 = vpop.f32.mrf.mxu0
          %v2060 = vadd.f32 %v2021, %v2059
          %2061 = vdwg.mxu0
          %2062 = vmatpush.msra.mxu0 0.0
          %2063 = vmatpush.msra.mxu0 0.0
          %2064 = vmatpush.msra.mxu0 0.0
          %2065 = vmatpush.msra.mxu0 0.0
          %2066 = vmatpush.msra.mxu0 0.0
          %2067 = vmatpush.msra.mxu0 0.0
          %2068 = vmatpush.msra.mxu0 0.0
          %2069 = vmatpush.msra.mxu0 0.0
          %2070 = vmatpush.msra.mxu0 0.0
          %2071 = vmatpush.msra.mxu0 0.0
          %v2072 = vand.u32 %v999, 4294901760
          %2073 = vmatpush.msra.mxu0 %v2072
          %v2074 = vand.u32 %v994, 4294901760
          %2075 = vmatpush.msra.mxu0 %v2074
          %v2076 = vand.u32 %v989, 4294901760
          %2077 = vmatpush.msra.mxu0 %v2076
          %v2078 = vand.u32 %v984, 4294901760
          %2079 = vmatpush.msra.mxu0 %v2078
          %v2080 = vand.u32 %v979, 4294901760
          %2081 = vmatpush.msra.mxu0 %v2080
          %v2082 = vand.u32 %v974, 4294901760
          %2083 = vmatpush.msra.mxu0 %v2082
          %v2084 = vand.u32 %v1032, 4294901760
          %2085 = vmatmul.f32.gmra.mxu0 %v2084
          %v2086 = vpop.f32.mrf.mxu0
          %v2087 = vadd.f32 %v2060, %v2086
          %2088 = vdwg.mxu0
          %v2090 = vsel %vm1030, %v894, 0
          %2092 = vmatpush.msra.mxu0 0.0
          %2093 = vmatpush.msra.mxu0 0.0
          %2094 = vmatpush.msra.mxu0 0.0
          %2095 = vmatpush.msra.mxu0 0.0
          %2096 = vmatpush.msra.mxu0 0.0
          %2097 = vmatpush.msra.mxu0 0.0
          %2098 = vmatpush.msra.mxu0 0.0
          %2099 = vmatpush.msra.mxu0 0.0
          %2100 = vmatpush.msra.mxu0 0.0
          %2101 = vmatpush.msra.mxu0 0.0
          %v2102 = vand.u32 %v879, 4294901760
          %2103 = vmatpush.msra.mxu0 %v2102
          %v2104 = vand.u32 %v874, 4294901760
          %2105 = vmatpush.msra.mxu0 %v2104
          %v2106 = vand.u32 %v834, 4294901760
          %2107 = vmatpush.msra.mxu0 %v2106
          %v2108 = vand.u32 %v829, 4294901760
          %2109 = vmatpush.msra.mxu0 %v2108
          %v2110 = vand.u32 %v786, 4294901760
          %2111 = vmatpush.msra.mxu0 %v2110
          %v2112 = vand.u32 %v780, 4294901760
          %2113 = vmatpush.msra.mxu0 %v2112
          %v2114 = vand.u32 %v2090, 4294901760
          %v2115 = vsub.f32 %v2090, %v2114
          %v2116 = vand.u32 %v2115, 4294901760
          %v2117 = vsub.f32 %v2115, %v2116
          %v2118 = vand.u32 %v2117, 4294901760
          %2119 = vmatmul.f32.gmra.mxu0 %v2118
          %v2120 = vpop.f32.mrf.mxu0
          %v2121 = vadd.f32 %v1243, %v2120
          %2122 = vdwg.mxu0
          %2123 = vmatpush.msra.mxu0 0.0
          %2124 = vmatpush.msra.mxu0 0.0
          %2125 = vmatpush.msra.mxu0 0.0
          %2126 = vmatpush.msra.mxu0 0.0
          %2127 = vmatpush.msra.mxu0 0.0
          %2128 = vmatpush.msra.mxu0 0.0
          %2129 = vmatpush.msra.mxu0 0.0
          %2130 = vmatpush.msra.mxu0 0.0
          %2131 = vmatpush.msra.mxu0 0.0
          %2132 = vmatpush.msra.mxu0 0.0
          %v2133 = vand.u32 %v879, 4294901760
          %v2134 = vsub.f32 %v879, %v2133
          %v2135 = vand.u32 %v2134, 4294901760
          %v2136 = vsub.f32 %v2134, %v2135
          %v2137 = vand.u32 %v2136, 4294901760
          %2138 = vmatpush.msra.mxu0 %v2137
          %v2139 = vand.u32 %v874, 4294901760
          %v2140 = vsub.f32 %v874, %v2139
          %v2141 = vand.u32 %v2140, 4294901760
          %v2142 = vsub.f32 %v2140, %v2141
          %v2143 = vand.u32 %v2142, 4294901760
          %2144 = vmatpush.msra.mxu0 %v2143
          %v2145 = vand.u32 %v834, 4294901760
          %v2146 = vsub.f32 %v834, %v2145
          %v2147 = vand.u32 %v2146, 4294901760
          %v2148 = vsub.f32 %v2146, %v2147
          %v2149 = vand.u32 %v2148, 4294901760
          %2150 = vmatpush.msra.mxu0 %v2149
          %v2151 = vand.u32 %v829, 4294901760
          %v2152 = vsub.f32 %v829, %v2151
          %v2153 = vand.u32 %v2152, 4294901760
          %v2154 = vsub.f32 %v2152, %v2153
          %v2155 = vand.u32 %v2154, 4294901760
          %2156 = vmatpush.msra.mxu0 %v2155
          %v2157 = vand.u32 %v786, 4294901760
          %v2158 = vsub.f32 %v786, %v2157
          %v2159 = vand.u32 %v2158, 4294901760
          %v2160 = vsub.f32 %v2158, %v2159
          %v2161 = vand.u32 %v2160, 4294901760
          %2162 = vmatpush.msra.mxu0 %v2161
          %v2163 = vand.u32 %v780, 4294901760
          %v2164 = vsub.f32 %v780, %v2163
          %v2165 = vand.u32 %v2164, 4294901760
          %v2166 = vsub.f32 %v2164, %v2165
          %v2167 = vand.u32 %v2166, 4294901760
          %2168 = vmatpush.msra.mxu0 %v2167
          %v2169 = vand.u32 %v2090, 4294901760
          %2170 = vmatmul.f32.gmra.mxu0 %v2169
          %v2171 = vpop.f32.mrf.mxu0
          %v2172 = vadd.f32 %v2121, %v2171
          %2173 = vdwg.mxu0
          %2174 = vmatpush.msra.mxu0 0.0
          %2175 = vmatpush.msra.mxu0 0.0
          %2176 = vmatpush.msra.mxu0 0.0
          %2177 = vmatpush.msra.mxu0 0.0
          %2178 = vmatpush.msra.mxu0 0.0
          %2179 = vmatpush.msra.mxu0 0.0
          %2180 = vmatpush.msra.mxu0 0.0
          %2181 = vmatpush.msra.mxu0 0.0
          %2182 = vmatpush.msra.mxu0 0.0
          %2183 = vmatpush.msra.mxu0 0.0
          %v2184 = vand.u32 %v879, 4294901760
          %v2185 = vsub.f32 %v879, %v2184
          %2186 = vmatpush.msra.mxu0 %v2185
          %v2187 = vand.u32 %v874, 4294901760
          %v2188 = vsub.f32 %v874, %v2187
          %2189 = vmatpush.msra.mxu0 %v2188
          %v2190 = vand.u32 %v834, 4294901760
          %v2191 = vsub.f32 %v834, %v2190
          %2192 = vmatpush.msra.mxu0 %v2191
          %v2193 = vand.u32 %v829, 4294901760
          %v2194 = vsub.f32 %v829, %v2193
          %2195 = vmatpush.msra.mxu0 %v2194
          %v2196 = vand.u32 %v786, 4294901760
          %v2197 = vsub.f32 %v786, %v2196
          %2198 = vmatpush.msra.mxu0 %v2197
          %v2199 = vand.u32 %v780, 4294901760
          %v2200 = vsub.f32 %v780, %v2199
          %2201 = vmatpush.msra.mxu0 %v2200
          %v2202 = vand.u32 %v2090, 4294901760
          %v2203 = vsub.f32 %v2090, %v2202
          %2204 = vmatmul.f32.gmra.mxu0 %v2203
          %v2205 = vpop.f32.mrf.mxu0
          %v2206 = vadd.f32 %v2172, %v2205
          %2207 = vdwg.mxu0
          %2208 = vmatpush.msra.mxu0 0.0
          %2209 = vmatpush.msra.mxu0 0.0
          %2210 = vmatpush.msra.mxu0 0.0
          %2211 = vmatpush.msra.mxu0 0.0
          %2212 = vmatpush.msra.mxu0 0.0
          %2213 = vmatpush.msra.mxu0 0.0
          %2214 = vmatpush.msra.mxu0 0.0
          %2215 = vmatpush.msra.mxu0 0.0
          %2216 = vmatpush.msra.mxu0 0.0
          %2217 = vmatpush.msra.mxu0 0.0
          %v2218 = vand.u32 %v879, 4294901760
          %2219 = vmatpush.msra.mxu0 %v2218
          %v2220 = vand.u32 %v874, 4294901760
          %2221 = vmatpush.msra.mxu0 %v2220
          %v2222 = vand.u32 %v834, 4294901760
          %2223 = vmatpush.msra.mxu0 %v2222
          %v2224 = vand.u32 %v829, 4294901760
          %2225 = vmatpush.msra.mxu0 %v2224
          %v2226 = vand.u32 %v786, 4294901760
          %2227 = vmatpush.msra.mxu0 %v2226
          %v2228 = vand.u32 %v780, 4294901760
          %2229 = vmatpush.msra.mxu0 %v2228
          %v2230 = vand.u32 %v2090, 4294901760
          %v2231 = vsub.f32 %v2090, %v2230
          %v2232 = vand.u32 %v2231, 4294901760
          %2233 = vmatmul.f32.gmra.mxu0 %v2232
          %v2234 = vpop.f32.mrf.mxu0
          %v2235 = vadd.f32 %v2206, %v2234
          %2236 = vdwg.mxu0
          %2237 = vmatpush.msra.mxu0 0.0
          %2238 = vmatpush.msra.mxu0 0.0
          %2239 = vmatpush.msra.mxu0 0.0
          %2240 = vmatpush.msra.mxu0 0.0
          %2241 = vmatpush.msra.mxu0 0.0
          %2242 = vmatpush.msra.mxu0 0.0
          %2243 = vmatpush.msra.mxu0 0.0
          %2244 = vmatpush.msra.mxu0 0.0
          %2245 = vmatpush.msra.mxu0 0.0
          %2246 = vmatpush.msra.mxu0 0.0
          %v2247 = vand.u32 %v879, 4294901760
          %v2248 = vsub.f32 %v879, %v2247
          %v2249 = vand.u32 %v2248, 4294901760
          %2250 = vmatpush.msra.mxu0 %v2249
          %v2251 = vand.u32 %v874, 4294901760
          %v2252 = vsub.f32 %v874, %v2251
          %v2253 = vand.u32 %v2252, 4294901760
          %2254 = vmatpush.msra.mxu0 %v2253
          %v2255 = vand.u32 %v834, 4294901760
          %v2256 = vsub.f32 %v834, %v2255
          %v2257 = vand.u32 %v2256, 4294901760
          %2258 = vmatpush.msra.mxu0 %v2257
          %v2259 = vand.u32 %v829, 4294901760
          %v2260 = vsub.f32 %v829, %v2259
          %v2261 = vand.u32 %v2260, 4294901760
          %2262 = vmatpush.msra.mxu0 %v2261
          %v2263 = vand.u32 %v786, 4294901760
          %v2264 = vsub.f32 %v786, %v2263
          %v2265 = vand.u32 %v2264, 4294901760
          %2266 = vmatpush.msra.mxu0 %v2265
          %v2267 = vand.u32 %v780, 4294901760
          %v2268 = vsub.f32 %v780, %v2267
          %v2269 = vand.u32 %v2268, 4294901760
          %2270 = vmatpush.msra.mxu0 %v2269
          %v2271 = vand.u32 %v2090, 4294901760
          %2272 = vmatmul.f32.gmra.mxu0 %v2271
          %v2273 = vpop.f32.mrf.mxu0
          %v2274 = vadd.f32 %v2235, %v2273
          %2275 = vdwg.mxu0
          %2276 = vmatpush.msra.mxu0 0.0
          %2277 = vmatpush.msra.mxu0 0.0
          %2278 = vmatpush.msra.mxu0 0.0
          %2279 = vmatpush.msra.mxu0 0.0
          %2280 = vmatpush.msra.mxu0 0.0
          %2281 = vmatpush.msra.mxu0 0.0
          %2282 = vmatpush.msra.mxu0 0.0
          %2283 = vmatpush.msra.mxu0 0.0
          %2284 = vmatpush.msra.mxu0 0.0
          %2285 = vmatpush.msra.mxu0 0.0
          %v2286 = vand.u32 %v879, 4294901760
          %2287 = vmatpush.msra.mxu0 %v2286
          %v2288 = vand.u32 %v874, 4294901760
          %2289 = vmatpush.msra.mxu0 %v2288
          %v2290 = vand.u32 %v834, 4294901760
          %2291 = vmatpush.msra.mxu0 %v2290
          %v2292 = vand.u32 %v829, 4294901760
          %2293 = vmatpush.msra.mxu0 %v2292
          %v2294 = vand.u32 %v786, 4294901760
          %2295 = vmatpush.msra.mxu0 %v2294
          %v2296 = vand.u32 %v780, 4294901760
          %2297 = vmatpush.msra.mxu0 %v2296
          %v2298 = vand.u32 %v2090, 4294901760
          %2299 = vmatmul.f32.gmra.mxu0 %v2298
          %v2300 = vpop.f32.mrf.mxu0
          %v2301 = vadd.f32 %v2274, %v2300
          %2302 = vdwg.mxu0
          %2303 = vmatpush.msra.mxu0 0.0
          %2304 = vmatpush.msra.mxu0 0.0
          %2305 = vmatpush.msra.mxu0 0.0
          %2306 = vmatpush.msra.mxu0 0.0
          %2307 = vmatpush.msra.mxu0 0.0
          %2308 = vmatpush.msra.mxu0 0.0
          %2309 = vmatpush.msra.mxu0 0.0
          %2310 = vmatpush.msra.mxu0 0.0
          %2311 = vmatpush.msra.mxu0 0.0
          %2312 = vmatpush.msra.mxu0 0.0
          %v2313 = vand.u32 %v880, 4294901760
          %2314 = vmatpush.msra.mxu0 %v2313
          %v2315 = vand.u32 %v875, 4294901760
          %2316 = vmatpush.msra.mxu0 %v2315
          %v2317 = vand.u32 %v835, 4294901760
          %2318 = vmatpush.msra.mxu0 %v2317
          %v2319 = vand.u32 %v830, 4294901760
          %2320 = vmatpush.msra.mxu0 %v2319
          %v2321 = vand.u32 %v787, 4294901760
          %2322 = vmatpush.msra.mxu0 %v2321
          %v2323 = vand.u32 %v781, 4294901760
          %2324 = vmatpush.msra.mxu0 %v2323
          %v2325 = vand.u32 %v2090, 4294901760
          %v2326 = vsub.f32 %v2090, %v2325
          %v2327 = vand.u32 %v2326, 4294901760
          %v2328 = vsub.f32 %v2326, %v2327
          %v2329 = vand.u32 %v2328, 4294901760
          %2330 = vmatmul.f32.gmra.mxu0 %v2329
          %v2331 = vpop.f32.mrf.mxu0
          %v2332 = vadd.f32 %v1454, %v2331
          %2333 = vdwg.mxu0
          %2334 = vmatpush.msra.mxu0 0.0
          %2335 = vmatpush.msra.mxu0 0.0
          %2336 = vmatpush.msra.mxu0 0.0
          %2337 = vmatpush.msra.mxu0 0.0
          %2338 = vmatpush.msra.mxu0 0.0
          %2339 = vmatpush.msra.mxu0 0.0
          %2340 = vmatpush.msra.mxu0 0.0
          %2341 = vmatpush.msra.mxu0 0.0
          %2342 = vmatpush.msra.mxu0 0.0
          %2343 = vmatpush.msra.mxu0 0.0
          %v2344 = vand.u32 %v880, 4294901760
          %v2345 = vsub.f32 %v880, %v2344
          %v2346 = vand.u32 %v2345, 4294901760
          %v2347 = vsub.f32 %v2345, %v2346
          %v2348 = vand.u32 %v2347, 4294901760
          %2349 = vmatpush.msra.mxu0 %v2348
          %v2350 = vand.u32 %v875, 4294901760
          %v2351 = vsub.f32 %v875, %v2350
          %v2352 = vand.u32 %v2351, 4294901760
          %v2353 = vsub.f32 %v2351, %v2352
          %v2354 = vand.u32 %v2353, 4294901760
          %2355 = vmatpush.msra.mxu0 %v2354
          %v2356 = vand.u32 %v835, 4294901760
          %v2357 = vsub.f32 %v835, %v2356
          %v2358 = vand.u32 %v2357, 4294901760
          %v2359 = vsub.f32 %v2357, %v2358
          %v2360 = vand.u32 %v2359, 4294901760
          %2361 = vmatpush.msra.mxu0 %v2360
          %v2362 = vand.u32 %v830, 4294901760
          %v2363 = vsub.f32 %v830, %v2362
          %v2364 = vand.u32 %v2363, 4294901760
          %v2365 = vsub.f32 %v2363, %v2364
          %v2366 = vand.u32 %v2365, 4294901760
          %2367 = vmatpush.msra.mxu0 %v2366
          %v2368 = vand.u32 %v787, 4294901760
          %v2369 = vsub.f32 %v787, %v2368
          %v2370 = vand.u32 %v2369, 4294901760
          %v2371 = vsub.f32 %v2369, %v2370
          %v2372 = vand.u32 %v2371, 4294901760
          %2373 = vmatpush.msra.mxu0 %v2372
          %v2374 = vand.u32 %v781, 4294901760
          %v2375 = vsub.f32 %v781, %v2374
          %v2376 = vand.u32 %v2375, 4294901760
          %v2377 = vsub.f32 %v2375, %v2376
          %v2378 = vand.u32 %v2377, 4294901760
          %2379 = vmatpush.msra.mxu0 %v2378
          %v2380 = vand.u32 %v2090, 4294901760
          %2381 = vmatmul.f32.gmra.mxu0 %v2380
          %v2382 = vpop.f32.mrf.mxu0
          %v2383 = vadd.f32 %v2332, %v2382
          %2384 = vdwg.mxu0
          %2385 = vmatpush.msra.mxu0 0.0
          %2386 = vmatpush.msra.mxu0 0.0
          %2387 = vmatpush.msra.mxu0 0.0
          %2388 = vmatpush.msra.mxu0 0.0
          %2389 = vmatpush.msra.mxu0 0.0
          %2390 = vmatpush.msra.mxu0 0.0
          %2391 = vmatpush.msra.mxu0 0.0
          %2392 = vmatpush.msra.mxu0 0.0
          %2393 = vmatpush.msra.mxu0 0.0
          %2394 = vmatpush.msra.mxu0 0.0
          %v2395 = vand.u32 %v880, 4294901760
          %v2396 = vsub.f32 %v880, %v2395
          %2397 = vmatpush.msra.mxu0 %v2396
          %v2398 = vand.u32 %v875, 4294901760
          %v2399 = vsub.f32 %v875, %v2398
          %2400 = vmatpush.msra.mxu0 %v2399
          %v2401 = vand.u32 %v835, 4294901760
          %v2402 = vsub.f32 %v835, %v2401
          %2403 = vmatpush.msra.mxu0 %v2402
          %v2404 = vand.u32 %v830, 4294901760
          %v2405 = vsub.f32 %v830, %v2404
          %2406 = vmatpush.msra.mxu0 %v2405
          %v2407 = vand.u32 %v787, 4294901760
          %v2408 = vsub.f32 %v787, %v2407
          %2409 = vmatpush.msra.mxu0 %v2408
          %v2410 = vand.u32 %v781, 4294901760
          %v2411 = vsub.f32 %v781, %v2410
          %2412 = vmatpush.msra.mxu0 %v2411
          %v2413 = vand.u32 %v2090, 4294901760
          %v2414 = vsub.f32 %v2090, %v2413
          %2415 = vmatmul.f32.gmra.mxu0 %v2414
          %v2416 = vpop.f32.mrf.mxu0
          %v2417 = vadd.f32 %v2383, %v2416
          %2418 = vdwg.mxu0
          %2419 = vmatpush.msra.mxu0 0.0
          %2420 = vmatpush.msra.mxu0 0.0
          %2421 = vmatpush.msra.mxu0 0.0
          %2422 = vmatpush.msra.mxu0 0.0
          %2423 = vmatpush.msra.mxu0 0.0
          %2424 = vmatpush.msra.mxu0 0.0
          %2425 = vmatpush.msra.mxu0 0.0
          %2426 = vmatpush.msra.mxu0 0.0
          %2427 = vmatpush.msra.mxu0 0.0
          %2428 = vmatpush.msra.mxu0 0.0
          %v2429 = vand.u32 %v880, 4294901760
          %2430 = vmatpush.msra.mxu0 %v2429
          %v2431 = vand.u32 %v875, 4294901760
          %2432 = vmatpush.msra.mxu0 %v2431
          %v2433 = vand.u32 %v835, 4294901760
          %2434 = vmatpush.msra.mxu0 %v2433
          %v2435 = vand.u32 %v830, 4294901760
          %2436 = vmatpush.msra.mxu0 %v2435
          %v2437 = vand.u32 %v787, 4294901760
          %2438 = vmatpush.msra.mxu0 %v2437
          %v2439 = vand.u32 %v781, 4294901760
          %2440 = vmatpush.msra.mxu0 %v2439
          %v2441 = vand.u32 %v2090, 4294901760
          %v2442 = vsub.f32 %v2090, %v2441
          %v2443 = vand.u32 %v2442, 4294901760
          %2444 = vmatmul.f32.gmra.mxu0 %v2443
          %v2445 = vpop.f32.mrf.mxu0
          %v2446 = vadd.f32 %v2417, %v2445
          %2447 = vdwg.mxu0
          %2448 = vmatpush.msra.mxu0 0.0
          %2449 = vmatpush.msra.mxu0 0.0
          %2450 = vmatpush.msra.mxu0 0.0
          %2451 = vmatpush.msra.mxu0 0.0
          %2452 = vmatpush.msra.mxu0 0.0
          %2453 = vmatpush.msra.mxu0 0.0
          %2454 = vmatpush.msra.mxu0 0.0
          %2455 = vmatpush.msra.mxu0 0.0
          %2456 = vmatpush.msra.mxu0 0.0
          %2457 = vmatpush.msra.mxu0 0.0
          %v2458 = vand.u32 %v880, 4294901760
          %v2459 = vsub.f32 %v880, %v2458
          %v2460 = vand.u32 %v2459, 4294901760
          %2461 = vmatpush.msra.mxu0 %v2460
          %v2462 = vand.u32 %v875, 4294901760
          %v2463 = vsub.f32 %v875, %v2462
          %v2464 = vand.u32 %v2463, 4294901760
          %2465 = vmatpush.msra.mxu0 %v2464
          %v2466 = vand.u32 %v835, 4294901760
          %v2467 = vsub.f32 %v835, %v2466
          %v2468 = vand.u32 %v2467, 4294901760
          %2469 = vmatpush.msra.mxu0 %v2468
          %v2470 = vand.u32 %v830, 4294901760
          %v2471 = vsub.f32 %v830, %v2470
          %v2472 = vand.u32 %v2471, 4294901760
          %2473 = vmatpush.msra.mxu0 %v2472
          %v2474 = vand.u32 %v787, 4294901760
          %v2475 = vsub.f32 %v787, %v2474
          %v2476 = vand.u32 %v2475, 4294901760
          %2477 = vmatpush.msra.mxu0 %v2476
          %v2478 = vand.u32 %v781, 4294901760
          %v2479 = vsub.f32 %v781, %v2478
          %v2480 = vand.u32 %v2479, 4294901760
          %2481 = vmatpush.msra.mxu0 %v2480
          %v2482 = vand.u32 %v2090, 4294901760
          %2483 = vmatmul.f32.gmra.mxu0 %v2482
          %v2484 = vpop.f32.mrf.mxu0
          %v2485 = vadd.f32 %v2446, %v2484
          %2486 = vdwg.mxu0
          %2487 = vmatpush.msra.mxu0 0.0
          %2488 = vmatpush.msra.mxu0 0.0
          %2489 = vmatpush.msra.mxu0 0.0
          %2490 = vmatpush.msra.mxu0 0.0
          %2491 = vmatpush.msra.mxu0 0.0
          %2492 = vmatpush.msra.mxu0 0.0
          %2493 = vmatpush.msra.mxu0 0.0
          %2494 = vmatpush.msra.mxu0 0.0
          %2495 = vmatpush.msra.mxu0 0.0
          %2496 = vmatpush.msra.mxu0 0.0
          %v2497 = vand.u32 %v880, 4294901760
          %2498 = vmatpush.msra.mxu0 %v2497
          %v2499 = vand.u32 %v875, 4294901760
          %2500 = vmatpush.msra.mxu0 %v2499
          %v2501 = vand.u32 %v835, 4294901760
          %2502 = vmatpush.msra.mxu0 %v2501
          %v2503 = vand.u32 %v830, 4294901760
          %2504 = vmatpush.msra.mxu0 %v2503
          %v2505 = vand.u32 %v787, 4294901760
          %2506 = vmatpush.msra.mxu0 %v2505
          %v2507 = vand.u32 %v781, 4294901760
          %2508 = vmatpush.msra.mxu0 %v2507
          %v2509 = vand.u32 %v2090, 4294901760
          %2510 = vmatmul.f32.gmra.mxu0 %v2509
          %v2511 = vpop.f32.mrf.mxu0
          %v2512 = vadd.f32 %v2485, %v2511
          %2513 = vdwg.mxu0
          %2514 = vmatpush.msra.mxu0 0.0
          %2515 = vmatpush.msra.mxu0 0.0
          %2516 = vmatpush.msra.mxu0 0.0
          %2517 = vmatpush.msra.mxu0 0.0
          %2518 = vmatpush.msra.mxu0 0.0
          %2519 = vmatpush.msra.mxu0 0.0
          %2520 = vmatpush.msra.mxu0 0.0
          %2521 = vmatpush.msra.mxu0 0.0
          %2522 = vmatpush.msra.mxu0 0.0
          %2523 = vmatpush.msra.mxu0 0.0
          %v2524 = vand.u32 %v881, 4294901760
          %2525 = vmatpush.msra.mxu0 %v2524
          %v2526 = vand.u32 %v876, 4294901760
          %2527 = vmatpush.msra.mxu0 %v2526
          %v2528 = vand.u32 %v836, 4294901760
          %2529 = vmatpush.msra.mxu0 %v2528
          %v2530 = vand.u32 %v831, 4294901760
          %2531 = vmatpush.msra.mxu0 %v2530
          %v2532 = vand.u32 %v788, 4294901760
          %2533 = vmatpush.msra.mxu0 %v2532
          %v2534 = vand.u32 %v782, 4294901760
          %2535 = vmatpush.msra.mxu0 %v2534
          %v2536 = vand.u32 %v2090, 4294901760
          %v2537 = vsub.f32 %v2090, %v2536
          %v2538 = vand.u32 %v2537, 4294901760
          %v2539 = vsub.f32 %v2537, %v2538
          %v2540 = vand.u32 %v2539, 4294901760
          %2541 = vmatmul.f32.gmra.mxu0 %v2540
          %v2542 = vpop.f32.mrf.mxu0
          %v2543 = vadd.f32 %v1665, %v2542
          %2544 = vdwg.mxu0
          %2545 = vmatpush.msra.mxu0 0.0
          %2546 = vmatpush.msra.mxu0 0.0
          %2547 = vmatpush.msra.mxu0 0.0
          %2548 = vmatpush.msra.mxu0 0.0
          %2549 = vmatpush.msra.mxu0 0.0
          %2550 = vmatpush.msra.mxu0 0.0
          %2551 = vmatpush.msra.mxu0 0.0
          %2552 = vmatpush.msra.mxu0 0.0
          %2553 = vmatpush.msra.mxu0 0.0
          %2554 = vmatpush.msra.mxu0 0.0
          %v2555 = vand.u32 %v881, 4294901760
          %v2556 = vsub.f32 %v881, %v2555
          %v2557 = vand.u32 %v2556, 4294901760
          %v2558 = vsub.f32 %v2556, %v2557
          %v2559 = vand.u32 %v2558, 4294901760
          %2560 = vmatpush.msra.mxu0 %v2559
          %v2561 = vand.u32 %v876, 4294901760
          %v2562 = vsub.f32 %v876, %v2561
          %v2563 = vand.u32 %v2562, 4294901760
          %v2564 = vsub.f32 %v2562, %v2563
          %v2565 = vand.u32 %v2564, 4294901760
          %2566 = vmatpush.msra.mxu0 %v2565
          %v2567 = vand.u32 %v836, 4294901760
          %v2568 = vsub.f32 %v836, %v2567
          %v2569 = vand.u32 %v2568, 4294901760
          %v2570 = vsub.f32 %v2568, %v2569
          %v2571 = vand.u32 %v2570, 4294901760
          %2572 = vmatpush.msra.mxu0 %v2571
          %v2573 = vand.u32 %v831, 4294901760
          %v2574 = vsub.f32 %v831, %v2573
          %v2575 = vand.u32 %v2574, 4294901760
          %v2576 = vsub.f32 %v2574, %v2575
          %v2577 = vand.u32 %v2576, 4294901760
          %2578 = vmatpush.msra.mxu0 %v2577
          %v2579 = vand.u32 %v788, 4294901760
          %v2580 = vsub.f32 %v788, %v2579
          %v2581 = vand.u32 %v2580, 4294901760
          %v2582 = vsub.f32 %v2580, %v2581
          %v2583 = vand.u32 %v2582, 4294901760
          %2584 = vmatpush.msra.mxu0 %v2583
          %v2585 = vand.u32 %v782, 4294901760
          %v2586 = vsub.f32 %v782, %v2585
          %v2587 = vand.u32 %v2586, 4294901760
          %v2588 = vsub.f32 %v2586, %v2587
          %v2589 = vand.u32 %v2588, 4294901760
          %2590 = vmatpush.msra.mxu0 %v2589
          %v2591 = vand.u32 %v2090, 4294901760
          %2592 = vmatmul.f32.gmra.mxu0 %v2591
          %v2593 = vpop.f32.mrf.mxu0
          %v2594 = vadd.f32 %v2543, %v2593
          %2595 = vdwg.mxu0
          %2596 = vmatpush.msra.mxu0 0.0
          %2597 = vmatpush.msra.mxu0 0.0
          %2598 = vmatpush.msra.mxu0 0.0
          %2599 = vmatpush.msra.mxu0 0.0
          %2600 = vmatpush.msra.mxu0 0.0
          %2601 = vmatpush.msra.mxu0 0.0
          %2602 = vmatpush.msra.mxu0 0.0
          %2603 = vmatpush.msra.mxu0 0.0
          %2604 = vmatpush.msra.mxu0 0.0
          %2605 = vmatpush.msra.mxu0 0.0
          %v2606 = vand.u32 %v881, 4294901760
          %v2607 = vsub.f32 %v881, %v2606
          %2608 = vmatpush.msra.mxu0 %v2607
          %v2609 = vand.u32 %v876, 4294901760
          %v2610 = vsub.f32 %v876, %v2609
          %2611 = vmatpush.msra.mxu0 %v2610
          %v2612 = vand.u32 %v836, 4294901760
          %v2613 = vsub.f32 %v836, %v2612
          %2614 = vmatpush.msra.mxu0 %v2613
          %v2615 = vand.u32 %v831, 4294901760
          %v2616 = vsub.f32 %v831, %v2615
          %2617 = vmatpush.msra.mxu0 %v2616
          %v2618 = vand.u32 %v788, 4294901760
          %v2619 = vsub.f32 %v788, %v2618
          %2620 = vmatpush.msra.mxu0 %v2619
          %v2621 = vand.u32 %v782, 4294901760
          %v2622 = vsub.f32 %v782, %v2621
          %2623 = vmatpush.msra.mxu0 %v2622
          %v2624 = vand.u32 %v2090, 4294901760
          %v2625 = vsub.f32 %v2090, %v2624
          %2626 = vmatmul.f32.gmra.mxu0 %v2625
          %v2627 = vpop.f32.mrf.mxu0
          %v2628 = vadd.f32 %v2594, %v2627
          %2629 = vdwg.mxu0
          %2630 = vmatpush.msra.mxu0 0.0
          %2631 = vmatpush.msra.mxu0 0.0
          %2632 = vmatpush.msra.mxu0 0.0
          %2633 = vmatpush.msra.mxu0 0.0
          %2634 = vmatpush.msra.mxu0 0.0
          %2635 = vmatpush.msra.mxu0 0.0
          %2636 = vmatpush.msra.mxu0 0.0
          %2637 = vmatpush.msra.mxu0 0.0
          %2638 = vmatpush.msra.mxu0 0.0
          %2639 = vmatpush.msra.mxu0 0.0
          %v2640 = vand.u32 %v881, 4294901760
          %2641 = vmatpush.msra.mxu0 %v2640
          %v2642 = vand.u32 %v876, 4294901760
          %2643 = vmatpush.msra.mxu0 %v2642
          %v2644 = vand.u32 %v836, 4294901760
          %2645 = vmatpush.msra.mxu0 %v2644
          %v2646 = vand.u32 %v831, 4294901760
          %2647 = vmatpush.msra.mxu0 %v2646
          %v2648 = vand.u32 %v788, 4294901760
          %2649 = vmatpush.msra.mxu0 %v2648
          %v2650 = vand.u32 %v782, 4294901760
          %2651 = vmatpush.msra.mxu0 %v2650
          %v2652 = vand.u32 %v2090, 4294901760
          %v2653 = vsub.f32 %v2090, %v2652
          %v2654 = vand.u32 %v2653, 4294901760
          %2655 = vmatmul.f32.gmra.mxu0 %v2654
          %v2656 = vpop.f32.mrf.mxu0
          %v2657 = vadd.f32 %v2628, %v2656
          %2658 = vdwg.mxu0
          %2659 = vmatpush.msra.mxu0 0.0
          %2660 = vmatpush.msra.mxu0 0.0
          %2661 = vmatpush.msra.mxu0 0.0
          %2662 = vmatpush.msra.mxu0 0.0
          %2663 = vmatpush.msra.mxu0 0.0
          %2664 = vmatpush.msra.mxu0 0.0
          %2665 = vmatpush.msra.mxu0 0.0
          %2666 = vmatpush.msra.mxu0 0.0
          %2667 = vmatpush.msra.mxu0 0.0
          %2668 = vmatpush.msra.mxu0 0.0
          %v2669 = vand.u32 %v881, 4294901760
          %v2670 = vsub.f32 %v881, %v2669
          %v2671 = vand.u32 %v2670, 4294901760
          %2672 = vmatpush.msra.mxu0 %v2671
          %v2673 = vand.u32 %v876, 4294901760
          %v2674 = vsub.f32 %v876, %v2673
          %v2675 = vand.u32 %v2674, 4294901760
          %2676 = vmatpush.msra.mxu0 %v2675
          %v2677 = vand.u32 %v836, 4294901760
          %v2678 = vsub.f32 %v836, %v2677
          %v2679 = vand.u32 %v2678, 4294901760
          %2680 = vmatpush.msra.mxu0 %v2679
          %v2681 = vand.u32 %v831, 4294901760
          %v2682 = vsub.f32 %v831, %v2681
          %v2683 = vand.u32 %v2682, 4294901760
          %2684 = vmatpush.msra.mxu0 %v2683
          %v2685 = vand.u32 %v788, 4294901760
          %v2686 = vsub.f32 %v788, %v2685
          %v2687 = vand.u32 %v2686, 4294901760
          %2688 = vmatpush.msra.mxu0 %v2687
          %v2689 = vand.u32 %v782, 4294901760
          %v2690 = vsub.f32 %v782, %v2689
          %v2691 = vand.u32 %v2690, 4294901760
          %2692 = vmatpush.msra.mxu0 %v2691
          %v2693 = vand.u32 %v2090, 4294901760
          %2694 = vmatmul.f32.gmra.mxu0 %v2693
          %v2695 = vpop.f32.mrf.mxu0
          %v2696 = vadd.f32 %v2657, %v2695
          %2697 = vdwg.mxu0
          %2698 = vmatpush.msra.mxu0 0.0
          %2699 = vmatpush.msra.mxu0 0.0
          %2700 = vmatpush.msra.mxu0 0.0
          %2701 = vmatpush.msra.mxu0 0.0
          %2702 = vmatpush.msra.mxu0 0.0
          %2703 = vmatpush.msra.mxu0 0.0
          %2704 = vmatpush.msra.mxu0 0.0
          %2705 = vmatpush.msra.mxu0 0.0
          %2706 = vmatpush.msra.mxu0 0.0
          %2707 = vmatpush.msra.mxu0 0.0
          %v2708 = vand.u32 %v881, 4294901760
          %2709 = vmatpush.msra.mxu0 %v2708
          %v2710 = vand.u32 %v876, 4294901760
          %2711 = vmatpush.msra.mxu0 %v2710
          %v2712 = vand.u32 %v836, 4294901760
          %2713 = vmatpush.msra.mxu0 %v2712
          %v2714 = vand.u32 %v831, 4294901760
          %2715 = vmatpush.msra.mxu0 %v2714
          %v2716 = vand.u32 %v788, 4294901760
          %2717 = vmatpush.msra.mxu0 %v2716
          %v2718 = vand.u32 %v782, 4294901760
          %2719 = vmatpush.msra.mxu0 %v2718
          %v2720 = vand.u32 %v2090, 4294901760
          %2721 = vmatmul.f32.gmra.mxu0 %v2720
          %v2722 = vpop.f32.mrf.mxu0
          %v2723 = vadd.f32 %v2696, %v2722
          %2724 = vdwg.mxu0
          %2725 = vmatpush.msra.mxu0 0.0
          %2726 = vmatpush.msra.mxu0 0.0
          %2727 = vmatpush.msra.mxu0 0.0
          %2728 = vmatpush.msra.mxu0 0.0
          %2729 = vmatpush.msra.mxu0 0.0
          %2730 = vmatpush.msra.mxu0 0.0
          %2731 = vmatpush.msra.mxu0 0.0
          %2732 = vmatpush.msra.mxu0 0.0
          %2733 = vmatpush.msra.mxu0 0.0
          %2734 = vmatpush.msra.mxu0 0.0
          %v2735 = vand.u32 %v882, 4294901760
          %2736 = vmatpush.msra.mxu0 %v2735
          %v2737 = vand.u32 %v877, 4294901760
          %2738 = vmatpush.msra.mxu0 %v2737
          %v2739 = vand.u32 %v837, 4294901760
          %2740 = vmatpush.msra.mxu0 %v2739
          %v2741 = vand.u32 %v832, 4294901760
          %2742 = vmatpush.msra.mxu0 %v2741
          %v2743 = vand.u32 %v789, 4294901760
          %2744 = vmatpush.msra.mxu0 %v2743
          %v2745 = vand.u32 %v783, 4294901760
          %2746 = vmatpush.msra.mxu0 %v2745
          %v2747 = vand.u32 %v2090, 4294901760
          %v2748 = vsub.f32 %v2090, %v2747
          %v2749 = vand.u32 %v2748, 4294901760
          %v2750 = vsub.f32 %v2748, %v2749
          %v2751 = vand.u32 %v2750, 4294901760
          %2752 = vmatmul.f32.gmra.mxu0 %v2751
          %v2753 = vpop.f32.mrf.mxu0
          %v2754 = vadd.f32 %v1876, %v2753
          %2755 = vdwg.mxu0
          %2756 = vmatpush.msra.mxu0 0.0
          %2757 = vmatpush.msra.mxu0 0.0
          %2758 = vmatpush.msra.mxu0 0.0
          %2759 = vmatpush.msra.mxu0 0.0
          %2760 = vmatpush.msra.mxu0 0.0
          %2761 = vmatpush.msra.mxu0 0.0
          %2762 = vmatpush.msra.mxu0 0.0
          %2763 = vmatpush.msra.mxu0 0.0
          %2764 = vmatpush.msra.mxu0 0.0
          %2765 = vmatpush.msra.mxu0 0.0
          %v2766 = vand.u32 %v882, 4294901760
          %v2767 = vsub.f32 %v882, %v2766
          %v2768 = vand.u32 %v2767, 4294901760
          %v2769 = vsub.f32 %v2767, %v2768
          %v2770 = vand.u32 %v2769, 4294901760
          %2771 = vmatpush.msra.mxu0 %v2770
          %v2772 = vand.u32 %v877, 4294901760
          %v2773 = vsub.f32 %v877, %v2772
          %v2774 = vand.u32 %v2773, 4294901760
          %v2775 = vsub.f32 %v2773, %v2774
          %v2776 = vand.u32 %v2775, 4294901760
          %2777 = vmatpush.msra.mxu0 %v2776
          %v2778 = vand.u32 %v837, 4294901760
          %v2779 = vsub.f32 %v837, %v2778
          %v2780 = vand.u32 %v2779, 4294901760
          %v2781 = vsub.f32 %v2779, %v2780
          %v2782 = vand.u32 %v2781, 4294901760
          %2783 = vmatpush.msra.mxu0 %v2782
          %v2784 = vand.u32 %v832, 4294901760
          %v2785 = vsub.f32 %v832, %v2784
          %v2786 = vand.u32 %v2785, 4294901760
          %v2787 = vsub.f32 %v2785, %v2786
          %v2788 = vand.u32 %v2787, 4294901760
          %2789 = vmatpush.msra.mxu0 %v2788
          %v2790 = vand.u32 %v789, 4294901760
          %v2791 = vsub.f32 %v789, %v2790
          %v2792 = vand.u32 %v2791, 4294901760
          %v2793 = vsub.f32 %v2791, %v2792
          %v2794 = vand.u32 %v2793, 4294901760
          %2795 = vmatpush.msra.mxu0 %v2794
          %v2796 = vand.u32 %v783, 4294901760
          %v2797 = vsub.f32 %v783, %v2796
          %v2798 = vand.u32 %v2797, 4294901760
          %v2799 = vsub.f32 %v2797, %v2798
          %v2800 = vand.u32 %v2799, 4294901760
          %2801 = vmatpush.msra.mxu0 %v2800
          %v2802 = vand.u32 %v2090, 4294901760
          %2803 = vmatmul.f32.gmra.mxu0 %v2802
          %v2804 = vpop.f32.mrf.mxu0
          %v2805 = vadd.f32 %v2754, %v2804
          %2806 = vdwg.mxu0
          %2807 = vmatpush.msra.mxu0 0.0
          %2808 = vmatpush.msra.mxu0 0.0
          %2809 = vmatpush.msra.mxu0 0.0
          %2810 = vmatpush.msra.mxu0 0.0
          %2811 = vmatpush.msra.mxu0 0.0
          %2812 = vmatpush.msra.mxu0 0.0
          %2813 = vmatpush.msra.mxu0 0.0
          %2814 = vmatpush.msra.mxu0 0.0
          %2815 = vmatpush.msra.mxu0 0.0
          %2816 = vmatpush.msra.mxu0 0.0
          %v2817 = vand.u32 %v882, 4294901760
          %v2818 = vsub.f32 %v882, %v2817
          %2819 = vmatpush.msra.mxu0 %v2818
          %v2820 = vand.u32 %v877, 4294901760
          %v2821 = vsub.f32 %v877, %v2820
          %2822 = vmatpush.msra.mxu0 %v2821
          %v2823 = vand.u32 %v837, 4294901760
          %v2824 = vsub.f32 %v837, %v2823
          %2825 = vmatpush.msra.mxu0 %v2824
          %v2826 = vand.u32 %v832, 4294901760
          %v2827 = vsub.f32 %v832, %v2826
          %2828 = vmatpush.msra.mxu0 %v2827
          %v2829 = vand.u32 %v789, 4294901760
          %v2830 = vsub.f32 %v789, %v2829
          %2831 = vmatpush.msra.mxu0 %v2830
          %v2832 = vand.u32 %v783, 4294901760
          %v2833 = vsub.f32 %v783, %v2832
          %2834 = vmatpush.msra.mxu0 %v2833
          %v2835 = vand.u32 %v2090, 4294901760
          %v2836 = vsub.f32 %v2090, %v2835
          %2837 = vmatmul.f32.gmra.mxu0 %v2836
          %v2838 = vpop.f32.mrf.mxu0
          %v2839 = vadd.f32 %v2805, %v2838
          %2840 = vdwg.mxu0
          %2841 = vmatpush.msra.mxu0 0.0
          %2842 = vmatpush.msra.mxu0 0.0
          %2843 = vmatpush.msra.mxu0 0.0
          %2844 = vmatpush.msra.mxu0 0.0
          %2845 = vmatpush.msra.mxu0 0.0
          %2846 = vmatpush.msra.mxu0 0.0
          %2847 = vmatpush.msra.mxu0 0.0
          %2848 = vmatpush.msra.mxu0 0.0
          %2849 = vmatpush.msra.mxu0 0.0
          %2850 = vmatpush.msra.mxu0 0.0
          %v2851 = vand.u32 %v882, 4294901760
          %2852 = vmatpush.msra.mxu0 %v2851
          %v2853 = vand.u32 %v877, 4294901760
          %2854 = vmatpush.msra.mxu0 %v2853
          %v2855 = vand.u32 %v837, 4294901760
          %2856 = vmatpush.msra.mxu0 %v2855
          %v2857 = vand.u32 %v832, 4294901760
          %2858 = vmatpush.msra.mxu0 %v2857
          %v2859 = vand.u32 %v789, 4294901760
          %2860 = vmatpush.msra.mxu0 %v2859
          %v2861 = vand.u32 %v783, 4294901760
          %2862 = vmatpush.msra.mxu0 %v2861
          %v2863 = vand.u32 %v2090, 4294901760
          %v2864 = vsub.f32 %v2090, %v2863
          %v2865 = vand.u32 %v2864, 4294901760
          %2866 = vmatmul.f32.gmra.mxu0 %v2865
          %v2867 = vpop.f32.mrf.mxu0
          %v2868 = vadd.f32 %v2839, %v2867
          %2869 = vdwg.mxu0
          %2870 = vmatpush.msra.mxu0 0.0
          %2871 = vmatpush.msra.mxu0 0.0
          %2872 = vmatpush.msra.mxu0 0.0
          %2873 = vmatpush.msra.mxu0 0.0
          %2874 = vmatpush.msra.mxu0 0.0
          %2875 = vmatpush.msra.mxu0 0.0
          %2876 = vmatpush.msra.mxu0 0.0
          %2877 = vmatpush.msra.mxu0 0.0
          %2878 = vmatpush.msra.mxu0 0.0
          %2879 = vmatpush.msra.mxu0 0.0
          %v2880 = vand.u32 %v882, 4294901760
          %v2881 = vsub.f32 %v882, %v2880
          %v2882 = vand.u32 %v2881, 4294901760
          %2883 = vmatpush.msra.mxu0 %v2882
          %v2884 = vand.u32 %v877, 4294901760
          %v2885 = vsub.f32 %v877, %v2884
          %v2886 = vand.u32 %v2885, 4294901760
          %2887 = vmatpush.msra.mxu0 %v2886
          %v2888 = vand.u32 %v837, 4294901760
          %v2889 = vsub.f32 %v837, %v2888
          %v2890 = vand.u32 %v2889, 4294901760
          %2891 = vmatpush.msra.mxu0 %v2890
          %v2892 = vand.u32 %v832, 4294901760
          %v2893 = vsub.f32 %v832, %v2892
          %v2894 = vand.u32 %v2893, 4294901760
          %2895 = vmatpush.msra.mxu0 %v2894
          %v2896 = vand.u32 %v789, 4294901760
          %v2897 = vsub.f32 %v789, %v2896
          %v2898 = vand.u32 %v2897, 4294901760
          %2899 = vmatpush.msra.mxu0 %v2898
          %v2900 = vand.u32 %v783, 4294901760
          %v2901 = vsub.f32 %v783, %v2900
          %v2902 = vand.u32 %v2901, 4294901760
          %2903 = vmatpush.msra.mxu0 %v2902
          %v2904 = vand.u32 %v2090, 4294901760
          %2905 = vmatmul.f32.gmra.mxu0 %v2904
          %v2906 = vpop.f32.mrf.mxu0
          %v2907 = vadd.f32 %v2868, %v2906
          %2908 = vdwg.mxu0
          %2909 = vmatpush.msra.mxu0 0.0
          %2910 = vmatpush.msra.mxu0 0.0
          %2911 = vmatpush.msra.mxu0 0.0
          %2912 = vmatpush.msra.mxu0 0.0
          %2913 = vmatpush.msra.mxu0 0.0
          %2914 = vmatpush.msra.mxu0 0.0
          %2915 = vmatpush.msra.mxu0 0.0
          %2916 = vmatpush.msra.mxu0 0.0
          %2917 = vmatpush.msra.mxu0 0.0
          %2918 = vmatpush.msra.mxu0 0.0
          %v2919 = vand.u32 %v882, 4294901760
          %2920 = vmatpush.msra.mxu0 %v2919
          %v2921 = vand.u32 %v877, 4294901760
          %2922 = vmatpush.msra.mxu0 %v2921
          %v2923 = vand.u32 %v837, 4294901760
          %2924 = vmatpush.msra.mxu0 %v2923
          %v2925 = vand.u32 %v832, 4294901760
          %2926 = vmatpush.msra.mxu0 %v2925
          %v2927 = vand.u32 %v789, 4294901760
          %2928 = vmatpush.msra.mxu0 %v2927
          %v2929 = vand.u32 %v783, 4294901760
          %2930 = vmatpush.msra.mxu0 %v2929
          %v2931 = vand.u32 %v2090, 4294901760
          %2932 = vmatmul.f32.gmra.mxu0 %v2931
          %v2933 = vpop.f32.mrf.mxu0
          %v2934 = vadd.f32 %v2907, %v2933
          %2935 = vdwg.mxu0
          %2936 = vmatpush.msra.mxu0 0.0
          %2937 = vmatpush.msra.mxu0 0.0
          %2938 = vmatpush.msra.mxu0 0.0
          %2939 = vmatpush.msra.mxu0 0.0
          %2940 = vmatpush.msra.mxu0 0.0
          %2941 = vmatpush.msra.mxu0 0.0
          %2942 = vmatpush.msra.mxu0 0.0
          %2943 = vmatpush.msra.mxu0 0.0
          %2944 = vmatpush.msra.mxu0 0.0
          %2945 = vmatpush.msra.mxu0 0.0
          %v2946 = vand.u32 %v883, 4294901760
          %2947 = vmatpush.msra.mxu0 %v2946
          %v2948 = vand.u32 %v878, 4294901760
          %2949 = vmatpush.msra.mxu0 %v2948
          %v2950 = vand.u32 %v838, 4294901760
          %2951 = vmatpush.msra.mxu0 %v2950
          %v2952 = vand.u32 %v833, 4294901760
          %2953 = vmatpush.msra.mxu0 %v2952
          %v2954 = vand.u32 %v790, 4294901760
          %2955 = vmatpush.msra.mxu0 %v2954
          %v2956 = vand.u32 %v784, 4294901760
          %2957 = vmatpush.msra.mxu0 %v2956
          %v2958 = vand.u32 %v2090, 4294901760
          %v2959 = vsub.f32 %v2090, %v2958
          %v2960 = vand.u32 %v2959, 4294901760
          %v2961 = vsub.f32 %v2959, %v2960
          %v2962 = vand.u32 %v2961, 4294901760
          %2963 = vmatmul.f32.gmra.mxu0 %v2962
          %v2964 = vpop.f32.mrf.mxu0
          %v2965 = vadd.f32 %v2087, %v2964
          %2966 = vdwg.mxu0
          %2967 = vmatpush.msra.mxu0 0.0
          %2968 = vmatpush.msra.mxu0 0.0
          %2969 = vmatpush.msra.mxu0 0.0
          %2970 = vmatpush.msra.mxu0 0.0
          %2971 = vmatpush.msra.mxu0 0.0
          %2972 = vmatpush.msra.mxu0 0.0
          %2973 = vmatpush.msra.mxu0 0.0
          %2974 = vmatpush.msra.mxu0 0.0
          %2975 = vmatpush.msra.mxu0 0.0
          %2976 = vmatpush.msra.mxu0 0.0
          %v2977 = vand.u32 %v883, 4294901760
          %v2978 = vsub.f32 %v883, %v2977
          %v2979 = vand.u32 %v2978, 4294901760
          %v2980 = vsub.f32 %v2978, %v2979
          %v2981 = vand.u32 %v2980, 4294901760
          %2982 = vmatpush.msra.mxu0 %v2981
          %v2983 = vand.u32 %v878, 4294901760
          %v2984 = vsub.f32 %v878, %v2983
          %v2985 = vand.u32 %v2984, 4294901760
          %v2986 = vsub.f32 %v2984, %v2985
          %v2987 = vand.u32 %v2986, 4294901760
          %2988 = vmatpush.msra.mxu0 %v2987
          %v2989 = vand.u32 %v838, 4294901760
          %v2990 = vsub.f32 %v838, %v2989
          %v2991 = vand.u32 %v2990, 4294901760
          %v2992 = vsub.f32 %v2990, %v2991
          %v2993 = vand.u32 %v2992, 4294901760
          %2994 = vmatpush.msra.mxu0 %v2993
          %v2995 = vand.u32 %v833, 4294901760
          %v2996 = vsub.f32 %v833, %v2995
          %v2997 = vand.u32 %v2996, 4294901760
          %v2998 = vsub.f32 %v2996, %v2997
          %v2999 = vand.u32 %v2998, 4294901760
          %3000 = vmatpush.msra.mxu0 %v2999
          %v3001 = vand.u32 %v790, 4294901760
          %v3002 = vsub.f32 %v790, %v3001
          %v3003 = vand.u32 %v3002, 4294901760
          %v3004 = vsub.f32 %v3002, %v3003
          %v3005 = vand.u32 %v3004, 4294901760
          %3006 = vmatpush.msra.mxu0 %v3005
          %v3007 = vand.u32 %v784, 4294901760
          %v3008 = vsub.f32 %v784, %v3007
          %v3009 = vand.u32 %v3008, 4294901760
          %v3010 = vsub.f32 %v3008, %v3009
          %v3011 = vand.u32 %v3010, 4294901760
          %3012 = vmatpush.msra.mxu0 %v3011
          %v3013 = vand.u32 %v2090, 4294901760
          %3014 = vmatmul.f32.gmra.mxu0 %v3013
          %v3015 = vpop.f32.mrf.mxu0
          %v3016 = vadd.f32 %v2965, %v3015
          %3017 = vdwg.mxu0
          %3018 = vmatpush.msra.mxu0 0.0
          %3019 = vmatpush.msra.mxu0 0.0
          %3020 = vmatpush.msra.mxu0 0.0
          %3021 = vmatpush.msra.mxu0 0.0
          %3022 = vmatpush.msra.mxu0 0.0
          %3023 = vmatpush.msra.mxu0 0.0
          %3024 = vmatpush.msra.mxu0 0.0
          %3025 = vmatpush.msra.mxu0 0.0
          %3026 = vmatpush.msra.mxu0 0.0
          %3027 = vmatpush.msra.mxu0 0.0
          %v3028 = vand.u32 %v883, 4294901760
          %v3029 = vsub.f32 %v883, %v3028
          %3030 = vmatpush.msra.mxu0 %v3029
          %v3031 = vand.u32 %v878, 4294901760
          %v3032 = vsub.f32 %v878, %v3031
          %3033 = vmatpush.msra.mxu0 %v3032
          %v3034 = vand.u32 %v838, 4294901760
          %v3035 = vsub.f32 %v838, %v3034
          %3036 = vmatpush.msra.mxu0 %v3035
          %v3037 = vand.u32 %v833, 4294901760
          %v3038 = vsub.f32 %v833, %v3037
          %3039 = vmatpush.msra.mxu0 %v3038
          %v3040 = vand.u32 %v790, 4294901760
          %v3041 = vsub.f32 %v790, %v3040
          %3042 = vmatpush.msra.mxu0 %v3041
          %v3043 = vand.u32 %v784, 4294901760
          %v3044 = vsub.f32 %v784, %v3043
          %3045 = vmatpush.msra.mxu0 %v3044
          %v3046 = vand.u32 %v2090, 4294901760
          %v3047 = vsub.f32 %v2090, %v3046
          %3048 = vmatmul.f32.gmra.mxu0 %v3047
          %v3049 = vpop.f32.mrf.mxu0
          %v3050 = vadd.f32 %v3016, %v3049
          %3051 = vdwg.mxu0
          %3052 = vmatpush.msra.mxu0 0.0
          %3053 = vmatpush.msra.mxu0 0.0
          %3054 = vmatpush.msra.mxu0 0.0
          %3055 = vmatpush.msra.mxu0 0.0
          %3056 = vmatpush.msra.mxu0 0.0
          %3057 = vmatpush.msra.mxu0 0.0
          %3058 = vmatpush.msra.mxu0 0.0
          %3059 = vmatpush.msra.mxu0 0.0
          %3060 = vmatpush.msra.mxu0 0.0
          %3061 = vmatpush.msra.mxu0 0.0
          %v3062 = vand.u32 %v883, 4294901760
          %3063 = vmatpush.msra.mxu0 %v3062
          %v3064 = vand.u32 %v878, 4294901760
          %3065 = vmatpush.msra.mxu0 %v3064
          %v3066 = vand.u32 %v838, 4294901760
          %3067 = vmatpush.msra.mxu0 %v3066
          %v3068 = vand.u32 %v833, 4294901760
          %3069 = vmatpush.msra.mxu0 %v3068
          %v3070 = vand.u32 %v790, 4294901760
          %3071 = vmatpush.msra.mxu0 %v3070
          %v3072 = vand.u32 %v784, 4294901760
          %3073 = vmatpush.msra.mxu0 %v3072
          %v3074 = vand.u32 %v2090, 4294901760
          %v3075 = vsub.f32 %v2090, %v3074
          %v3076 = vand.u32 %v3075, 4294901760
          %3077 = vmatmul.f32.gmra.mxu0 %v3076
          %v3078 = vpop.f32.mrf.mxu0
          %v3079 = vadd.f32 %v3050, %v3078
          %3080 = vdwg.mxu0
          %3081 = vmatpush.msra.mxu0 0.0
          %3082 = vmatpush.msra.mxu0 0.0
          %3083 = vmatpush.msra.mxu0 0.0
          %3084 = vmatpush.msra.mxu0 0.0
          %3085 = vmatpush.msra.mxu0 0.0
          %3086 = vmatpush.msra.mxu0 0.0
          %3087 = vmatpush.msra.mxu0 0.0
          %3088 = vmatpush.msra.mxu0 0.0
          %3089 = vmatpush.msra.mxu0 0.0
          %3090 = vmatpush.msra.mxu0 0.0
          %v3091 = vand.u32 %v883, 4294901760
          %v3092 = vsub.f32 %v883, %v3091
          %v3093 = vand.u32 %v3092, 4294901760
          %3094 = vmatpush.msra.mxu0 %v3093
          %v3095 = vand.u32 %v878, 4294901760
          %v3096 = vsub.f32 %v878, %v3095
          %v3097 = vand.u32 %v3096, 4294901760
          %3098 = vmatpush.msra.mxu0 %v3097
          %v3099 = vand.u32 %v838, 4294901760
          %v3100 = vsub.f32 %v838, %v3099
          %v3101 = vand.u32 %v3100, 4294901760
          %3102 = vmatpush.msra.mxu0 %v3101
          %v3103 = vand.u32 %v833, 4294901760
          %v3104 = vsub.f32 %v833, %v3103
          %v3105 = vand.u32 %v3104, 4294901760
          %3106 = vmatpush.msra.mxu0 %v3105
          %v3107 = vand.u32 %v790, 4294901760
          %v3108 = vsub.f32 %v790, %v3107
          %v3109 = vand.u32 %v3108, 4294901760
          %3110 = vmatpush.msra.mxu0 %v3109
          %v3111 = vand.u32 %v784, 4294901760
          %v3112 = vsub.f32 %v784, %v3111
          %v3113 = vand.u32 %v3112, 4294901760
          %3114 = vmatpush.msra.mxu0 %v3113
          %v3115 = vand.u32 %v2090, 4294901760
          %3116 = vmatmul.f32.gmra.mxu0 %v3115
          %v3117 = vpop.f32.mrf.mxu0
          %v3118 = vadd.f32 %v3079, %v3117
          %3119 = vdwg.mxu0
          %3120 = vmatpush.msra.mxu0 0.0
          %3121 = vmatpush.msra.mxu0 0.0
          %3122 = vmatpush.msra.mxu0 0.0
          %3123 = vmatpush.msra.mxu0 0.0
          %3124 = vmatpush.msra.mxu0 0.0
          %3125 = vmatpush.msra.mxu0 0.0
          %3126 = vmatpush.msra.mxu0 0.0
          %3127 = vmatpush.msra.mxu0 0.0
          %3128 = vmatpush.msra.mxu0 0.0
          %3129 = vmatpush.msra.mxu0 0.0
          %v3130 = vand.u32 %v883, 4294901760
          %3131 = vmatpush.msra.mxu0 %v3130
          %v3132 = vand.u32 %v878, 4294901760
          %3133 = vmatpush.msra.mxu0 %v3132
          %v3134 = vand.u32 %v838, 4294901760
          %3135 = vmatpush.msra.mxu0 %v3134
          %v3136 = vand.u32 %v833, 4294901760
          %3137 = vmatpush.msra.mxu0 %v3136
          %v3138 = vand.u32 %v790, 4294901760
          %3139 = vmatpush.msra.mxu0 %v3138
          %v3140 = vand.u32 %v784, 4294901760
          %3141 = vmatpush.msra.mxu0 %v3140
          %v3142 = vand.u32 %v2090, 4294901760
          %3143 = vmatmul.f32.gmra.mxu0 %v3142
          %v3144 = vpop.f32.mrf.mxu0
          %v3145 = vadd.f32 %v3118, %v3144
          %3146 = vdwg.mxu0
          %s3147 = scalar_lea.vmem %s3, 16
          %v3148 = vld [vmem:[%s3147] sm:$0xff]
          %3149 = vrot.lane.b32.xlu0 %v780, 8
          %v3150 = vpop.permute.xlu0 %3149
          %3151 = vrot.lane.b32.xlu0 %v781, 8
          %v3152 = vpop.permute.xlu0 %3151
          %3153 = vrot.lane.b32.xlu0 %v782, 8
          %v3154 = vpop.permute.xlu0 %3153
          %3155 = vrot.lane.b32.xlu0 %v783, 8
          %v3156 = vpop.permute.xlu0 %3155
          %3157 = vrot.lane.b32.xlu0 %v784, 8
          %v3158 = vpop.permute.xlu0 %3157
          %3159 = vrot.lane.b32.xlu0 %v785, 8
          %v3160 = vpop.permute.xlu0 %3159
          %3161 = vrot.lane.b32.xlu0 %v786, 8
          %v3162 = vpop.permute.xlu0 %3161
          %3163 = vrot.lane.b32.xlu0 %v787, 8
          %v3164 = vpop.permute.xlu0 %3163
          %3165 = vrot.lane.b32.xlu0 %v788, 8
          %v3166 = vpop.permute.xlu0 %3165
          %3167 = vrot.lane.b32.xlu0 %v789, 8
          %v3168 = vpop.permute.xlu0 %3167
          %3169 = vrot.lane.b32.xlu0 %v790, 8
          %v3170 = vpop.permute.xlu0 %3169
          %3171 = vrot.lane.b32.xlu0 %v791, 8
          %v3172 = vpop.permute.xlu0 %3171
          %3173 = vrot.lane.b32.xlu0 %v829, 8
          %v3174 = vpop.permute.xlu0 %3173
          %3175 = vrot.lane.b32.xlu0 %v830, 8
          %v3176 = vpop.permute.xlu0 %3175
          %3177 = vrot.lane.b32.xlu0 %v831, 8
          %v3178 = vpop.permute.xlu0 %3177
          %3179 = vrot.lane.b32.xlu0 %v832, 8
          %v3180 = vpop.permute.xlu0 %3179
          %3181 = vrot.lane.b32.xlu0 %v833, 8
          %v3182 = vpop.permute.xlu0 %3181
          %3183 = vrot.lane.b32.xlu0 %v815, 8
          %v3184 = vpop.permute.xlu0 %3183
          %3185 = vrot.lane.b32.xlu0 %v834, 8
          %v3186 = vpop.permute.xlu0 %3185
          %3187 = vrot.lane.b32.xlu0 %v835, 8
          %v3188 = vpop.permute.xlu0 %3187
          %3189 = vrot.lane.b32.xlu0 %v836, 8
          %v3190 = vpop.permute.xlu0 %3189
          %3191 = vrot.lane.b32.xlu0 %v837, 8
          %v3192 = vpop.permute.xlu0 %3191
          %3193 = vrot.lane.b32.xlu0 %v838, 8
          %v3194 = vpop.permute.xlu0 %3193
          %3195 = vrot.lane.b32.xlu0 %v827, 8
          %v3196 = vpop.permute.xlu0 %3195
          %3197 = vrot.lane.b32.xlu0 %v874, 8
          %v3198 = vpop.permute.xlu0 %3197
          %3199 = vrot.lane.b32.xlu0 %v875, 8
          %v3200 = vpop.permute.xlu0 %3199
          %3201 = vrot.lane.b32.xlu0 %v876, 8
          %v3202 = vpop.permute.xlu0 %3201
          %3203 = vrot.lane.b32.xlu0 %v877, 8
          %v3204 = vpop.permute.xlu0 %3203
          %3205 = vrot.lane.b32.xlu0 %v878, 8
          %v3206 = vpop.permute.xlu0 %3205
          %3207 = vrot.lane.b32.xlu0 %v860, 8
          %v3208 = vpop.permute.xlu0 %3207
          %3209 = vrot.lane.b32.xlu0 %v879, 8
          %v3210 = vpop.permute.xlu0 %3209
          %3211 = vrot.lane.b32.xlu0 %v880, 8
          %v3212 = vpop.permute.xlu0 %3211
          %3213 = vrot.lane.b32.xlu0 %v881, 8
          %v3214 = vpop.permute.xlu0 %3213
          %3215 = vrot.lane.b32.xlu0 %v882, 8
          %v3216 = vpop.permute.xlu0 %3215
          %3217 = vrot.lane.b32.xlu0 %v883, 8
          %v3218 = vpop.permute.xlu0 %3217
          %3219 = vrot.lane.b32.xlu0 %v872, 8
          %v3220 = vpop.permute.xlu0 %3219
          %vm3221 = vcmask 64512
          %v3222 = vsel %vm3221, %v3150, %v3152
          %v3223 = vsel %vm3221, %v3152, %v3154
          %v3224 = vsel %vm3221, %v3154, %v3156
          %v3225 = vsel %vm3221, %v3156, %v3158
          %v3226 = vsel %vm3221, %v3158, %v3160
          %v3227 = vsel %vm3221, %v3162, %v3164
          %v3228 = vsel %vm3221, %v3164, %v3166
          %v3229 = vsel %vm3221, %v3166, %v3168
          %v3230 = vsel %vm3221, %v3168, %v3170
          %v3231 = vsel %vm3221, %v3170, %v3172
          %v3232 = vsel %vm3221, %v3174, %v3176
          %v3233 = vsel %vm3221, %v3176, %v3178
          %v3234 = vsel %vm3221, %v3178, %v3180
          %v3235 = vsel %vm3221, %v3180, %v3182
          %v3236 = vsel %vm3221, %v3182, %v3184
          %v3237 = vsel %vm3221, %v3186, %v3188
          %v3238 = vsel %vm3221, %v3188, %v3190
          %v3239 = vsel %vm3221, %v3190, %v3192
          %v3240 = vsel %vm3221, %v3192, %v3194
          %v3241 = vsel %vm3221, %v3194, %v3196
          %v3242 = vsel %vm3221, %v3198, %v3200
          %v3243 = vsel %vm3221, %v3200, %v3202
          %v3244 = vsel %vm3221, %v3202, %v3204
          %v3245 = vsel %vm3221, %v3204, %v3206
          %v3246 = vsel %vm3221, %v3206, %v3208
          %v3247 = vsel %vm3221, %v3210, %v3212
          %v3248 = vsel %vm3221, %v3212, %v3214
          %v3249 = vsel %vm3221, %v3214, %v3216
          %v3250 = vsel %vm3221, %v3216, %v3218
          %v3251 = vsel %vm3221, %v3218, %v3220
          %v3283 = vsel %vm1030, %v3148, 0
          %3285 = vmatpush.msra.mxu0 0.0
          %3286 = vmatpush.msra.mxu0 0.0
          %3287 = vmatpush.msra.mxu0 0.0
          %3288 = vmatpush.msra.mxu0 0.0
          %3289 = vmatpush.msra.mxu0 0.0
          %3290 = vmatpush.msra.mxu0 0.0
          %3291 = vmatpush.msra.mxu0 0.0
          %3292 = vmatpush.msra.mxu0 0.0
          %3293 = vmatpush.msra.mxu0 0.0
          %3294 = vmatpush.msra.mxu0 0.0
          %v3295 = vand.u32 %v3247, 4294901760
          %3296 = vmatpush.msra.mxu0 %v3295
          %v3297 = vand.u32 %v3242, 4294901760
          %3298 = vmatpush.msra.mxu0 %v3297
          %v3299 = vand.u32 %v3237, 4294901760
          %3300 = vmatpush.msra.mxu0 %v3299
          %v3301 = vand.u32 %v3232, 4294901760
          %3302 = vmatpush.msra.mxu0 %v3301
          %v3303 = vand.u32 %v3227, 4294901760
          %3304 = vmatpush.msra.mxu0 %v3303
          %v3305 = vand.u32 %v3222, 4294901760
          %3306 = vmatpush.msra.mxu0 %v3305
          %v3307 = vand.u32 %v3283, 4294901760
          %v3308 = vsub.f32 %v3283, %v3307
          %v3309 = vand.u32 %v3308, 4294901760
          %v3310 = vsub.f32 %v3308, %v3309
          %v3311 = vand.u32 %v3310, 4294901760
          %3312 = vmatmul.f32.gmra.mxu0 %v3311
          %v3313 = vpop.f32.mrf.mxu0
          %v3314 = vadd.f32 0.0, %v3313
          %3315 = vdwg.mxu0
          %3316 = vmatpush.msra.mxu0 0.0
          %3317 = vmatpush.msra.mxu0 0.0
          %3318 = vmatpush.msra.mxu0 0.0
          %3319 = vmatpush.msra.mxu0 0.0
          %3320 = vmatpush.msra.mxu0 0.0
          %3321 = vmatpush.msra.mxu0 0.0
          %3322 = vmatpush.msra.mxu0 0.0
          %3323 = vmatpush.msra.mxu0 0.0
          %3324 = vmatpush.msra.mxu0 0.0
          %3325 = vmatpush.msra.mxu0 0.0
          %v3326 = vand.u32 %v3247, 4294901760
          %v3327 = vsub.f32 %v3247, %v3326
          %v3328 = vand.u32 %v3327, 4294901760
          %v3329 = vsub.f32 %v3327, %v3328
          %v3330 = vand.u32 %v3329, 4294901760
          %3331 = vmatpush.msra.mxu0 %v3330
          %v3332 = vand.u32 %v3242, 4294901760
          %v3333 = vsub.f32 %v3242, %v3332
          %v3334 = vand.u32 %v3333, 4294901760
          %v3335 = vsub.f32 %v3333, %v3334
          %v3336 = vand.u32 %v3335, 4294901760
          %3337 = vmatpush.msra.mxu0 %v3336
          %v3338 = vand.u32 %v3237, 4294901760
          %v3339 = vsub.f32 %v3237, %v3338
          %v3340 = vand.u32 %v3339, 4294901760
          %v3341 = vsub.f32 %v3339, %v3340
          %v3342 = vand.u32 %v3341, 4294901760
          %3343 = vmatpush.msra.mxu0 %v3342
          %v3344 = vand.u32 %v3232, 4294901760
          %v3345 = vsub.f32 %v3232, %v3344
          %v3346 = vand.u32 %v3345, 4294901760
          %v3347 = vsub.f32 %v3345, %v3346
          %v3348 = vand.u32 %v3347, 4294901760
          %3349 = vmatpush.msra.mxu0 %v3348
          %v3350 = vand.u32 %v3227, 4294901760
          %v3351 = vsub.f32 %v3227, %v3350
          %v3352 = vand.u32 %v3351, 4294901760
          %v3353 = vsub.f32 %v3351, %v3352
          %v3354 = vand.u32 %v3353, 4294901760
          %3355 = vmatpush.msra.mxu0 %v3354
          %v3356 = vand.u32 %v3222, 4294901760
          %v3357 = vsub.f32 %v3222, %v3356
          %v3358 = vand.u32 %v3357, 4294901760
          %v3359 = vsub.f32 %v3357, %v3358
          %v3360 = vand.u32 %v3359, 4294901760
          %3361 = vmatpush.msra.mxu0 %v3360
          %v3362 = vand.u32 %v3283, 4294901760
          %3363 = vmatmul.f32.gmra.mxu0 %v3362
          %v3364 = vpop.f32.mrf.mxu0
          %v3365 = vadd.f32 %v3314, %v3364
          %3366 = vdwg.mxu0
          %3367 = vmatpush.msra.mxu0 0.0
          %3368 = vmatpush.msra.mxu0 0.0
          %3369 = vmatpush.msra.mxu0 0.0
          %3370 = vmatpush.msra.mxu0 0.0
          %3371 = vmatpush.msra.mxu0 0.0
          %3372 = vmatpush.msra.mxu0 0.0
          %3373 = vmatpush.msra.mxu0 0.0
          %3374 = vmatpush.msra.mxu0 0.0
          %3375 = vmatpush.msra.mxu0 0.0
          %3376 = vmatpush.msra.mxu0 0.0
          %v3377 = vand.u32 %v3247, 4294901760
          %v3378 = vsub.f32 %v3247, %v3377
          %3379 = vmatpush.msra.mxu0 %v3378
          %v3380 = vand.u32 %v3242, 4294901760
          %v3381 = vsub.f32 %v3242, %v3380
          %3382 = vmatpush.msra.mxu0 %v3381
          %v3383 = vand.u32 %v3237, 4294901760
          %v3384 = vsub.f32 %v3237, %v3383
          %3385 = vmatpush.msra.mxu0 %v3384
          %v3386 = vand.u32 %v3232, 4294901760
          %v3387 = vsub.f32 %v3232, %v3386
          %3388 = vmatpush.msra.mxu0 %v3387
          %v3389 = vand.u32 %v3227, 4294901760
          %v3390 = vsub.f32 %v3227, %v3389
          %3391 = vmatpush.msra.mxu0 %v3390
          %v3392 = vand.u32 %v3222, 4294901760
          %v3393 = vsub.f32 %v3222, %v3392
          %3394 = vmatpush.msra.mxu0 %v3393
          %v3395 = vand.u32 %v3283, 4294901760
          %v3396 = vsub.f32 %v3283, %v3395
          %3397 = vmatmul.f32.gmra.mxu0 %v3396
          %v3398 = vpop.f32.mrf.mxu0
          %v3399 = vadd.f32 %v3365, %v3398
          %3400 = vdwg.mxu0
          %3401 = vmatpush.msra.mxu0 0.0
          %3402 = vmatpush.msra.mxu0 0.0
          %3403 = vmatpush.msra.mxu0 0.0
          %3404 = vmatpush.msra.mxu0 0.0
          %3405 = vmatpush.msra.mxu0 0.0
          %3406 = vmatpush.msra.mxu0 0.0
          %3407 = vmatpush.msra.mxu0 0.0
          %3408 = vmatpush.msra.mxu0 0.0
          %3409 = vmatpush.msra.mxu0 0.0
          %3410 = vmatpush.msra.mxu0 0.0
          %v3411 = vand.u32 %v3247, 4294901760
          %3412 = vmatpush.msra.mxu0 %v3411
          %v3413 = vand.u32 %v3242, 4294901760
          %3414 = vmatpush.msra.mxu0 %v3413
          %v3415 = vand.u32 %v3237, 4294901760
          %3416 = vmatpush.msra.mxu0 %v3415
          %v3417 = vand.u32 %v3232, 4294901760
          %3418 = vmatpush.msra.mxu0 %v3417
          %v3419 = vand.u32 %v3227, 4294901760
          %3420 = vmatpush.msra.mxu0 %v3419
          %v3421 = vand.u32 %v3222, 4294901760
          %3422 = vmatpush.msra.mxu0 %v3421
          %v3423 = vand.u32 %v3283, 4294901760
          %v3424 = vsub.f32 %v3283, %v3423
          %v3425 = vand.u32 %v3424, 4294901760
          %3426 = vmatmul.f32.gmra.mxu0 %v3425
          %v3427 = vpop.f32.mrf.mxu0
          %v3428 = vadd.f32 %v3399, %v3427
          %3429 = vdwg.mxu0
          %3430 = vmatpush.msra.mxu0 0.0
          %3431 = vmatpush.msra.mxu0 0.0
          %3432 = vmatpush.msra.mxu0 0.0
          %3433 = vmatpush.msra.mxu0 0.0
          %3434 = vmatpush.msra.mxu0 0.0
          %3435 = vmatpush.msra.mxu0 0.0
          %3436 = vmatpush.msra.mxu0 0.0
          %3437 = vmatpush.msra.mxu0 0.0
          %3438 = vmatpush.msra.mxu0 0.0
          %3439 = vmatpush.msra.mxu0 0.0
          %v3440 = vand.u32 %v3247, 4294901760
          %v3441 = vsub.f32 %v3247, %v3440
          %v3442 = vand.u32 %v3441, 4294901760
          %3443 = vmatpush.msra.mxu0 %v3442
          %v3444 = vand.u32 %v3242, 4294901760
          %v3445 = vsub.f32 %v3242, %v3444
          %v3446 = vand.u32 %v3445, 4294901760
          %3447 = vmatpush.msra.mxu0 %v3446
          %v3448 = vand.u32 %v3237, 4294901760
          %v3449 = vsub.f32 %v3237, %v3448
          %v3450 = vand.u32 %v3449, 4294901760
          %3451 = vmatpush.msra.mxu0 %v3450
          %v3452 = vand.u32 %v3232, 4294901760
          %v3453 = vsub.f32 %v3232, %v3452
          %v3454 = vand.u32 %v3453, 4294901760
          %3455 = vmatpush.msra.mxu0 %v3454
          %v3456 = vand.u32 %v3227, 4294901760
          %v3457 = vsub.f32 %v3227, %v3456
          %v3458 = vand.u32 %v3457, 4294901760
          %3459 = vmatpush.msra.mxu0 %v3458
          %v3460 = vand.u32 %v3222, 4294901760
          %v3461 = vsub.f32 %v3222, %v3460
          %v3462 = vand.u32 %v3461, 4294901760
          %3463 = vmatpush.msra.mxu0 %v3462
          %v3464 = vand.u32 %v3283, 4294901760
          %3465 = vmatmul.f32.gmra.mxu0 %v3464
          %v3466 = vpop.f32.mrf.mxu0
          %v3467 = vadd.f32 %v3428, %v3466
          %3468 = vdwg.mxu0
          %3469 = vmatpush.msra.mxu0 0.0
          %3470 = vmatpush.msra.mxu0 0.0
          %3471 = vmatpush.msra.mxu0 0.0
          %3472 = vmatpush.msra.mxu0 0.0
          %3473 = vmatpush.msra.mxu0 0.0
          %3474 = vmatpush.msra.mxu0 0.0
          %3475 = vmatpush.msra.mxu0 0.0
          %3476 = vmatpush.msra.mxu0 0.0
          %3477 = vmatpush.msra.mxu0 0.0
          %3478 = vmatpush.msra.mxu0 0.0
          %v3479 = vand.u32 %v3247, 4294901760
          %3480 = vmatpush.msra.mxu0 %v3479
          %v3481 = vand.u32 %v3242, 4294901760
          %3482 = vmatpush.msra.mxu0 %v3481
          %v3483 = vand.u32 %v3237, 4294901760
          %3484 = vmatpush.msra.mxu0 %v3483
          %v3485 = vand.u32 %v3232, 4294901760
          %3486 = vmatpush.msra.mxu0 %v3485
          %v3487 = vand.u32 %v3227, 4294901760
          %3488 = vmatpush.msra.mxu0 %v3487
          %v3489 = vand.u32 %v3222, 4294901760
          %3490 = vmatpush.msra.mxu0 %v3489
          %v3491 = vand.u32 %v3283, 4294901760
          %3492 = vmatmul.f32.gmra.mxu0 %v3491
          %v3493 = vpop.f32.mrf.mxu0
          %v3494 = vadd.f32 %v3467, %v3493
          %3495 = vdwg.mxu0
          %3496 = vmatpush.msra.mxu0 0.0
          %3497 = vmatpush.msra.mxu0 0.0
          %3498 = vmatpush.msra.mxu0 0.0
          %3499 = vmatpush.msra.mxu0 0.0
          %3500 = vmatpush.msra.mxu0 0.0
          %3501 = vmatpush.msra.mxu0 0.0
          %3502 = vmatpush.msra.mxu0 0.0
          %3503 = vmatpush.msra.mxu0 0.0
          %3504 = vmatpush.msra.mxu0 0.0
          %3505 = vmatpush.msra.mxu0 0.0
          %v3506 = vand.u32 %v3248, 4294901760
          %3507 = vmatpush.msra.mxu0 %v3506
          %v3508 = vand.u32 %v3243, 4294901760
          %3509 = vmatpush.msra.mxu0 %v3508
          %v3510 = vand.u32 %v3238, 4294901760
          %3511 = vmatpush.msra.mxu0 %v3510
          %v3512 = vand.u32 %v3233, 4294901760
          %3513 = vmatpush.msra.mxu0 %v3512
          %v3514 = vand.u32 %v3228, 4294901760
          %3515 = vmatpush.msra.mxu0 %v3514
          %v3516 = vand.u32 %v3223, 4294901760
          %3517 = vmatpush.msra.mxu0 %v3516
          %v3518 = vand.u32 %v3283, 4294901760
          %v3519 = vsub.f32 %v3283, %v3518
          %v3520 = vand.u32 %v3519, 4294901760
          %v3521 = vsub.f32 %v3519, %v3520
          %v3522 = vand.u32 %v3521, 4294901760
          %3523 = vmatmul.f32.gmra.mxu0 %v3522
          %v3524 = vpop.f32.mrf.mxu0
          %v3525 = vadd.f32 0.0, %v3524
          %3526 = vdwg.mxu0
          %3527 = vmatpush.msra.mxu0 0.0
          %3528 = vmatpush.msra.mxu0 0.0
          %3529 = vmatpush.msra.mxu0 0.0
          %3530 = vmatpush.msra.mxu0 0.0
          %3531 = vmatpush.msra.mxu0 0.0
          %3532 = vmatpush.msra.mxu0 0.0
          %3533 = vmatpush.msra.mxu0 0.0
          %3534 = vmatpush.msra.mxu0 0.0
          %3535 = vmatpush.msra.mxu0 0.0
          %3536 = vmatpush.msra.mxu0 0.0
          %v3537 = vand.u32 %v3248, 4294901760
          %v3538 = vsub.f32 %v3248, %v3537
          %v3539 = vand.u32 %v3538, 4294901760
          %v3540 = vsub.f32 %v3538, %v3539
          %v3541 = vand.u32 %v3540, 4294901760
          %3542 = vmatpush.msra.mxu0 %v3541
          %v3543 = vand.u32 %v3243, 4294901760
          %v3544 = vsub.f32 %v3243, %v3543
          %v3545 = vand.u32 %v3544, 4294901760
          %v3546 = vsub.f32 %v3544, %v3545
          %v3547 = vand.u32 %v3546, 4294901760
          %3548 = vmatpush.msra.mxu0 %v3547
          %v3549 = vand.u32 %v3238, 4294901760
          %v3550 = vsub.f32 %v3238, %v3549
          %v3551 = vand.u32 %v3550, 4294901760
          %v3552 = vsub.f32 %v3550, %v3551
          %v3553 = vand.u32 %v3552, 4294901760
          %3554 = vmatpush.msra.mxu0 %v3553
          %v3555 = vand.u32 %v3233, 4294901760
          %v3556 = vsub.f32 %v3233, %v3555
          %v3557 = vand.u32 %v3556, 4294901760
          %v3558 = vsub.f32 %v3556, %v3557
          %v3559 = vand.u32 %v3558, 4294901760
          %3560 = vmatpush.msra.mxu0 %v3559
          %v3561 = vand.u32 %v3228, 4294901760
          %v3562 = vsub.f32 %v3228, %v3561
          %v3563 = vand.u32 %v3562, 4294901760
          %v3564 = vsub.f32 %v3562, %v3563
          %v3565 = vand.u32 %v3564, 4294901760
          %3566 = vmatpush.msra.mxu0 %v3565
          %v3567 = vand.u32 %v3223, 4294901760
          %v3568 = vsub.f32 %v3223, %v3567
          %v3569 = vand.u32 %v3568, 4294901760
          %v3570 = vsub.f32 %v3568, %v3569
          %v3571 = vand.u32 %v3570, 4294901760
          %3572 = vmatpush.msra.mxu0 %v3571
          %v3573 = vand.u32 %v3283, 4294901760
          %3574 = vmatmul.f32.gmra.mxu0 %v3573
          %v3575 = vpop.f32.mrf.mxu0
          %v3576 = vadd.f32 %v3525, %v3575
          %3577 = vdwg.mxu0
          %3578 = vmatpush.msra.mxu0 0.0
          %3579 = vmatpush.msra.mxu0 0.0
          %3580 = vmatpush.msra.mxu0 0.0
          %3581 = vmatpush.msra.mxu0 0.0
          %3582 = vmatpush.msra.mxu0 0.0
          %3583 = vmatpush.msra.mxu0 0.0
          %3584 = vmatpush.msra.mxu0 0.0
          %3585 = vmatpush.msra.mxu0 0.0
          %3586 = vmatpush.msra.mxu0 0.0
          %3587 = vmatpush.msra.mxu0 0.0
          %v3588 = vand.u32 %v3248, 4294901760
          %v3589 = vsub.f32 %v3248, %v3588
          %3590 = vmatpush.msra.mxu0 %v3589
          %v3591 = vand.u32 %v3243, 4294901760
          %v3592 = vsub.f32 %v3243, %v3591
          %3593 = vmatpush.msra.mxu0 %v3592
          %v3594 = vand.u32 %v3238, 4294901760
          %v3595 = vsub.f32 %v3238, %v3594
          %3596 = vmatpush.msra.mxu0 %v3595
          %v3597 = vand.u32 %v3233, 4294901760
          %v3598 = vsub.f32 %v3233, %v3597
          %3599 = vmatpush.msra.mxu0 %v3598
          %v3600 = vand.u32 %v3228, 4294901760
          %v3601 = vsub.f32 %v3228, %v3600
          %3602 = vmatpush.msra.mxu0 %v3601
          %v3603 = vand.u32 %v3223, 4294901760
          %v3604 = vsub.f32 %v3223, %v3603
          %3605 = vmatpush.msra.mxu0 %v3604
          %v3606 = vand.u32 %v3283, 4294901760
          %v3607 = vsub.f32 %v3283, %v3606
          %3608 = vmatmul.f32.gmra.mxu0 %v3607
          %v3609 = vpop.f32.mrf.mxu0
          %v3610 = vadd.f32 %v3576, %v3609
          %3611 = vdwg.mxu0
          %3612 = vmatpush.msra.mxu0 0.0
          %3613 = vmatpush.msra.mxu0 0.0
          %3614 = vmatpush.msra.mxu0 0.0
          %3615 = vmatpush.msra.mxu0 0.0
          %3616 = vmatpush.msra.mxu0 0.0
          %3617 = vmatpush.msra.mxu0 0.0
          %3618 = vmatpush.msra.mxu0 0.0
          %3619 = vmatpush.msra.mxu0 0.0
          %3620 = vmatpush.msra.mxu0 0.0
          %3621 = vmatpush.msra.mxu0 0.0
          %v3622 = vand.u32 %v3248, 4294901760
          %3623 = vmatpush.msra.mxu0 %v3622
          %v3624 = vand.u32 %v3243, 4294901760
          %3625 = vmatpush.msra.mxu0 %v3624
          %v3626 = vand.u32 %v3238, 4294901760
          %3627 = vmatpush.msra.mxu0 %v3626
          %v3628 = vand.u32 %v3233, 4294901760
          %3629 = vmatpush.msra.mxu0 %v3628
          %v3630 = vand.u32 %v3228, 4294901760
          %3631 = vmatpush.msra.mxu0 %v3630
          %v3632 = vand.u32 %v3223, 4294901760
          %3633 = vmatpush.msra.mxu0 %v3632
          %v3634 = vand.u32 %v3283, 4294901760
          %v3635 = vsub.f32 %v3283, %v3634
          %v3636 = vand.u32 %v3635, 4294901760
          %3637 = vmatmul.f32.gmra.mxu0 %v3636
          %v3638 = vpop.f32.mrf.mxu0
          %v3639 = vadd.f32 %v3610, %v3638
          %3640 = vdwg.mxu0
          %3641 = vmatpush.msra.mxu0 0.0
          %3642 = vmatpush.msra.mxu0 0.0
          %3643 = vmatpush.msra.mxu0 0.0
          %3644 = vmatpush.msra.mxu0 0.0
          %3645 = vmatpush.msra.mxu0 0.0
          %3646 = vmatpush.msra.mxu0 0.0
          %3647 = vmatpush.msra.mxu0 0.0
          %3648 = vmatpush.msra.mxu0 0.0
          %3649 = vmatpush.msra.mxu0 0.0
          %3650 = vmatpush.msra.mxu0 0.0
          %v3651 = vand.u32 %v3248, 4294901760
          %v3652 = vsub.f32 %v3248, %v3651
          %v3653 = vand.u32 %v3652, 4294901760
          %3654 = vmatpush.msra.mxu0 %v3653
          %v3655 = vand.u32 %v3243, 4294901760
          %v3656 = vsub.f32 %v3243, %v3655
          %v3657 = vand.u32 %v3656, 4294901760
          %3658 = vmatpush.msra.mxu0 %v3657
          %v3659 = vand.u32 %v3238, 4294901760
          %v3660 = vsub.f32 %v3238, %v3659
          %v3661 = vand.u32 %v3660, 4294901760
          %3662 = vmatpush.msra.mxu0 %v3661
          %v3663 = vand.u32 %v3233, 4294901760
          %v3664 = vsub.f32 %v3233, %v3663
          %v3665 = vand.u32 %v3664, 4294901760
          %3666 = vmatpush.msra.mxu0 %v3665
          %v3667 = vand.u32 %v3228, 4294901760
          %v3668 = vsub.f32 %v3228, %v3667
          %v3669 = vand.u32 %v3668, 4294901760
          %3670 = vmatpush.msra.mxu0 %v3669
          %v3671 = vand.u32 %v3223, 4294901760
          %v3672 = vsub.f32 %v3223, %v3671
          %v3673 = vand.u32 %v3672, 4294901760
          %3674 = vmatpush.msra.mxu0 %v3673
          %v3675 = vand.u32 %v3283, 4294901760
          %3676 = vmatmul.f32.gmra.mxu0 %v3675
          %v3677 = vpop.f32.mrf.mxu0
          %v3678 = vadd.f32 %v3639, %v3677
          %3679 = vdwg.mxu0
          %3680 = vmatpush.msra.mxu0 0.0
          %3681 = vmatpush.msra.mxu0 0.0
          %3682 = vmatpush.msra.mxu0 0.0
          %3683 = vmatpush.msra.mxu0 0.0
          %3684 = vmatpush.msra.mxu0 0.0
          %3685 = vmatpush.msra.mxu0 0.0
          %3686 = vmatpush.msra.mxu0 0.0
          %3687 = vmatpush.msra.mxu0 0.0
          %3688 = vmatpush.msra.mxu0 0.0
          %3689 = vmatpush.msra.mxu0 0.0
          %v3690 = vand.u32 %v3248, 4294901760
          %3691 = vmatpush.msra.mxu0 %v3690
          %v3692 = vand.u32 %v3243, 4294901760
          %3693 = vmatpush.msra.mxu0 %v3692
          %v3694 = vand.u32 %v3238, 4294901760
          %3695 = vmatpush.msra.mxu0 %v3694
          %v3696 = vand.u32 %v3233, 4294901760
          %3697 = vmatpush.msra.mxu0 %v3696
          %v3698 = vand.u32 %v3228, 4294901760
          %3699 = vmatpush.msra.mxu0 %v3698
          %v3700 = vand.u32 %v3223, 4294901760
          %3701 = vmatpush.msra.mxu0 %v3700
          %v3702 = vand.u32 %v3283, 4294901760
          %3703 = vmatmul.f32.gmra.mxu0 %v3702
          %v3704 = vpop.f32.mrf.mxu0
          %v3705 = vadd.f32 %v3678, %v3704
          %3706 = vdwg.mxu0
          %3707 = vmatpush.msra.mxu0 0.0
          %3708 = vmatpush.msra.mxu0 0.0
          %3709 = vmatpush.msra.mxu0 0.0
          %3710 = vmatpush.msra.mxu0 0.0
          %3711 = vmatpush.msra.mxu0 0.0
          %3712 = vmatpush.msra.mxu0 0.0
          %3713 = vmatpush.msra.mxu0 0.0
          %3714 = vmatpush.msra.mxu0 0.0
          %3715 = vmatpush.msra.mxu0 0.0
          %3716 = vmatpush.msra.mxu0 0.0
          %v3717 = vand.u32 %v3249, 4294901760
          %3718 = vmatpush.msra.mxu0 %v3717
          %v3719 = vand.u32 %v3244, 4294901760
          %3720 = vmatpush.msra.mxu0 %v3719
          %v3721 = vand.u32 %v3239, 4294901760
          %3722 = vmatpush.msra.mxu0 %v3721
          %v3723 = vand.u32 %v3234, 4294901760
          %3724 = vmatpush.msra.mxu0 %v3723
          %v3725 = vand.u32 %v3229, 4294901760
          %3726 = vmatpush.msra.mxu0 %v3725
          %v3727 = vand.u32 %v3224, 4294901760
          %3728 = vmatpush.msra.mxu0 %v3727
          %v3729 = vand.u32 %v3283, 4294901760
          %v3730 = vsub.f32 %v3283, %v3729
          %v3731 = vand.u32 %v3730, 4294901760
          %v3732 = vsub.f32 %v3730, %v3731
          %v3733 = vand.u32 %v3732, 4294901760
          %3734 = vmatmul.f32.gmra.mxu0 %v3733
          %v3735 = vpop.f32.mrf.mxu0
          %v3736 = vadd.f32 0.0, %v3735
          %3737 = vdwg.mxu0
          %3738 = vmatpush.msra.mxu0 0.0
          %3739 = vmatpush.msra.mxu0 0.0
          %3740 = vmatpush.msra.mxu0 0.0
          %3741 = vmatpush.msra.mxu0 0.0
          %3742 = vmatpush.msra.mxu0 0.0
          %3743 = vmatpush.msra.mxu0 0.0
          %3744 = vmatpush.msra.mxu0 0.0
          %3745 = vmatpush.msra.mxu0 0.0
          %3746 = vmatpush.msra.mxu0 0.0
          %3747 = vmatpush.msra.mxu0 0.0
          %v3748 = vand.u32 %v3249, 4294901760
          %v3749 = vsub.f32 %v3249, %v3748
          %v3750 = vand.u32 %v3749, 4294901760
          %v3751 = vsub.f32 %v3749, %v3750
          %v3752 = vand.u32 %v3751, 4294901760
          %3753 = vmatpush.msra.mxu0 %v3752
          %v3754 = vand.u32 %v3244, 4294901760
          %v3755 = vsub.f32 %v3244, %v3754
          %v3756 = vand.u32 %v3755, 4294901760
          %v3757 = vsub.f32 %v3755, %v3756
          %v3758 = vand.u32 %v3757, 4294901760
          %3759 = vmatpush.msra.mxu0 %v3758
          %v3760 = vand.u32 %v3239, 4294901760
          %v3761 = vsub.f32 %v3239, %v3760
          %v3762 = vand.u32 %v3761, 4294901760
          %v3763 = vsub.f32 %v3761, %v3762
          %v3764 = vand.u32 %v3763, 4294901760
          %3765 = vmatpush.msra.mxu0 %v3764
          %v3766 = vand.u32 %v3234, 4294901760
          %v3767 = vsub.f32 %v3234, %v3766
          %v3768 = vand.u32 %v3767, 4294901760
          %v3769 = vsub.f32 %v3767, %v3768
          %v3770 = vand.u32 %v3769, 4294901760
          %3771 = vmatpush.msra.mxu0 %v3770
          %v3772 = vand.u32 %v3229, 4294901760
          %v3773 = vsub.f32 %v3229, %v3772
          %v3774 = vand.u32 %v3773, 4294901760
          %v3775 = vsub.f32 %v3773, %v3774
          %v3776 = vand.u32 %v3775, 4294901760
          %3777 = vmatpush.msra.mxu0 %v3776
          %v3778 = vand.u32 %v3224, 4294901760
          %v3779 = vsub.f32 %v3224, %v3778
          %v3780 = vand.u32 %v3779, 4294901760
          %v3781 = vsub.f32 %v3779, %v3780
          %v3782 = vand.u32 %v3781, 4294901760
          %3783 = vmatpush.msra.mxu0 %v3782
          %v3784 = vand.u32 %v3283, 4294901760
          %3785 = vmatmul.f32.gmra.mxu0 %v3784
          %v3786 = vpop.f32.mrf.mxu0
          %v3787 = vadd.f32 %v3736, %v3786
          %3788 = vdwg.mxu0
          %3789 = vmatpush.msra.mxu0 0.0
          %3790 = vmatpush.msra.mxu0 0.0
          %3791 = vmatpush.msra.mxu0 0.0
          %3792 = vmatpush.msra.mxu0 0.0
          %3793 = vmatpush.msra.mxu0 0.0
          %3794 = vmatpush.msra.mxu0 0.0
          %3795 = vmatpush.msra.mxu0 0.0
          %3796 = vmatpush.msra.mxu0 0.0
          %3797 = vmatpush.msra.mxu0 0.0
          %3798 = vmatpush.msra.mxu0 0.0
          %v3799 = vand.u32 %v3249, 4294901760
          %v3800 = vsub.f32 %v3249, %v3799
          %3801 = vmatpush.msra.mxu0 %v3800
          %v3802 = vand.u32 %v3244, 4294901760
          %v3803 = vsub.f32 %v3244, %v3802
          %3804 = vmatpush.msra.mxu0 %v3803
          %v3805 = vand.u32 %v3239, 4294901760
          %v3806 = vsub.f32 %v3239, %v3805
          %3807 = vmatpush.msra.mxu0 %v3806
          %v3808 = vand.u32 %v3234, 4294901760
          %v3809 = vsub.f32 %v3234, %v3808
          %3810 = vmatpush.msra.mxu0 %v3809
          %v3811 = vand.u32 %v3229, 4294901760
          %v3812 = vsub.f32 %v3229, %v3811
          %3813 = vmatpush.msra.mxu0 %v3812
          %v3814 = vand.u32 %v3224, 4294901760
          %v3815 = vsub.f32 %v3224, %v3814
          %3816 = vmatpush.msra.mxu0 %v3815
          %v3817 = vand.u32 %v3283, 4294901760
          %v3818 = vsub.f32 %v3283, %v3817
          %3819 = vmatmul.f32.gmra.mxu0 %v3818
          %v3820 = vpop.f32.mrf.mxu0
          %v3821 = vadd.f32 %v3787, %v3820
          %3822 = vdwg.mxu0
          %3823 = vmatpush.msra.mxu0 0.0
          %3824 = vmatpush.msra.mxu0 0.0
          %3825 = vmatpush.msra.mxu0 0.0
          %3826 = vmatpush.msra.mxu0 0.0
          %3827 = vmatpush.msra.mxu0 0.0
          %3828 = vmatpush.msra.mxu0 0.0
          %3829 = vmatpush.msra.mxu0 0.0
          %3830 = vmatpush.msra.mxu0 0.0
          %3831 = vmatpush.msra.mxu0 0.0
          %3832 = vmatpush.msra.mxu0 0.0
          %v3833 = vand.u32 %v3249, 4294901760
          %3834 = vmatpush.msra.mxu0 %v3833
          %v3835 = vand.u32 %v3244, 4294901760
          %3836 = vmatpush.msra.mxu0 %v3835
          %v3837 = vand.u32 %v3239, 4294901760
          %3838 = vmatpush.msra.mxu0 %v3837
          %v3839 = vand.u32 %v3234, 4294901760
          %3840 = vmatpush.msra.mxu0 %v3839
          %v3841 = vand.u32 %v3229, 4294901760
          %3842 = vmatpush.msra.mxu0 %v3841
          %v3843 = vand.u32 %v3224, 4294901760
          %3844 = vmatpush.msra.mxu0 %v3843
          %v3845 = vand.u32 %v3283, 4294901760
          %v3846 = vsub.f32 %v3283, %v3845
          %v3847 = vand.u32 %v3846, 4294901760
          %3848 = vmatmul.f32.gmra.mxu0 %v3847
          %v3849 = vpop.f32.mrf.mxu0
          %v3850 = vadd.f32 %v3821, %v3849
          %3851 = vdwg.mxu0
          %3852 = vmatpush.msra.mxu0 0.0
          %3853 = vmatpush.msra.mxu0 0.0
          %3854 = vmatpush.msra.mxu0 0.0
          %3855 = vmatpush.msra.mxu0 0.0
          %3856 = vmatpush.msra.mxu0 0.0
          %3857 = vmatpush.msra.mxu0 0.0
          %3858 = vmatpush.msra.mxu0 0.0
          %3859 = vmatpush.msra.mxu0 0.0
          %3860 = vmatpush.msra.mxu0 0.0
          %3861 = vmatpush.msra.mxu0 0.0
          %v3862 = vand.u32 %v3249, 4294901760
          %v3863 = vsub.f32 %v3249, %v3862
          %v3864 = vand.u32 %v3863, 4294901760
          %3865 = vmatpush.msra.mxu0 %v3864
          %v3866 = vand.u32 %v3244, 4294901760
          %v3867 = vsub.f32 %v3244, %v3866
          %v3868 = vand.u32 %v3867, 4294901760
          %3869 = vmatpush.msra.mxu0 %v3868
          %v3870 = vand.u32 %v3239, 4294901760
          %v3871 = vsub.f32 %v3239, %v3870
          %v3872 = vand.u32 %v3871, 4294901760
          %3873 = vmatpush.msra.mxu0 %v3872
          %v3874 = vand.u32 %v3234, 4294901760
          %v3875 = vsub.f32 %v3234, %v3874
          %v3876 = vand.u32 %v3875, 4294901760
          %3877 = vmatpush.msra.mxu0 %v3876
          %v3878 = vand.u32 %v3229, 4294901760
          %v3879 = vsub.f32 %v3229, %v3878
          %v3880 = vand.u32 %v3879, 4294901760
          %3881 = vmatpush.msra.mxu0 %v3880
          %v3882 = vand.u32 %v3224, 4294901760
          %v3883 = vsub.f32 %v3224, %v3882
          %v3884 = vand.u32 %v3883, 4294901760
          %3885 = vmatpush.msra.mxu0 %v3884
          %v3886 = vand.u32 %v3283, 4294901760
          %3887 = vmatmul.f32.gmra.mxu0 %v3886
          %v3888 = vpop.f32.mrf.mxu0
          %v3889 = vadd.f32 %v3850, %v3888
          %3890 = vdwg.mxu0
          %3891 = vmatpush.msra.mxu0 0.0
          %3892 = vmatpush.msra.mxu0 0.0
          %3893 = vmatpush.msra.mxu0 0.0
          %3894 = vmatpush.msra.mxu0 0.0
          %3895 = vmatpush.msra.mxu0 0.0
          %3896 = vmatpush.msra.mxu0 0.0
          %3897 = vmatpush.msra.mxu0 0.0
          %3898 = vmatpush.msra.mxu0 0.0
          %3899 = vmatpush.msra.mxu0 0.0
          %3900 = vmatpush.msra.mxu0 0.0
          %v3901 = vand.u32 %v3249, 4294901760
          %3902 = vmatpush.msra.mxu0 %v3901
          %v3903 = vand.u32 %v3244, 4294901760
          %3904 = vmatpush.msra.mxu0 %v3903
          %v3905 = vand.u32 %v3239, 4294901760
          %3906 = vmatpush.msra.mxu0 %v3905
          %v3907 = vand.u32 %v3234, 4294901760
          %3908 = vmatpush.msra.mxu0 %v3907
          %v3909 = vand.u32 %v3229, 4294901760
          %3910 = vmatpush.msra.mxu0 %v3909
          %v3911 = vand.u32 %v3224, 4294901760
          %3912 = vmatpush.msra.mxu0 %v3911
          %v3913 = vand.u32 %v3283, 4294901760
          %3914 = vmatmul.f32.gmra.mxu0 %v3913
          %v3915 = vpop.f32.mrf.mxu0
          %v3916 = vadd.f32 %v3889, %v3915
          %3917 = vdwg.mxu0
          %3918 = vmatpush.msra.mxu0 0.0
          %3919 = vmatpush.msra.mxu0 0.0
          %3920 = vmatpush.msra.mxu0 0.0
          %3921 = vmatpush.msra.mxu0 0.0
          %3922 = vmatpush.msra.mxu0 0.0
          %3923 = vmatpush.msra.mxu0 0.0
          %3924 = vmatpush.msra.mxu0 0.0
          %3925 = vmatpush.msra.mxu0 0.0
          %3926 = vmatpush.msra.mxu0 0.0
          %3927 = vmatpush.msra.mxu0 0.0
          %v3928 = vand.u32 %v3250, 4294901760
          %3929 = vmatpush.msra.mxu0 %v3928
          %v3930 = vand.u32 %v3245, 4294901760
          %3931 = vmatpush.msra.mxu0 %v3930
          %v3932 = vand.u32 %v3240, 4294901760
          %3933 = vmatpush.msra.mxu0 %v3932
          %v3934 = vand.u32 %v3235, 4294901760
          %3935 = vmatpush.msra.mxu0 %v3934
          %v3936 = vand.u32 %v3230, 4294901760
          %3937 = vmatpush.msra.mxu0 %v3936
          %v3938 = vand.u32 %v3225, 4294901760
          %3939 = vmatpush.msra.mxu0 %v3938
          %v3940 = vand.u32 %v3283, 4294901760
          %v3941 = vsub.f32 %v3283, %v3940
          %v3942 = vand.u32 %v3941, 4294901760
          %v3943 = vsub.f32 %v3941, %v3942
          %v3944 = vand.u32 %v3943, 4294901760
          %3945 = vmatmul.f32.gmra.mxu0 %v3944
          %v3946 = vpop.f32.mrf.mxu0
          %v3947 = vadd.f32 0.0, %v3946
          %3948 = vdwg.mxu0
          %3949 = vmatpush.msra.mxu0 0.0
          %3950 = vmatpush.msra.mxu0 0.0
          %3951 = vmatpush.msra.mxu0 0.0
          %3952 = vmatpush.msra.mxu0 0.0
          %3953 = vmatpush.msra.mxu0 0.0
          %3954 = vmatpush.msra.mxu0 0.0
          %3955 = vmatpush.msra.mxu0 0.0
          %3956 = vmatpush.msra.mxu0 0.0
          %3957 = vmatpush.msra.mxu0 0.0
          %3958 = vmatpush.msra.mxu0 0.0
          %v3959 = vand.u32 %v3250, 4294901760
          %v3960 = vsub.f32 %v3250, %v3959
          %v3961 = vand.u32 %v3960, 4294901760
          %v3962 = vsub.f32 %v3960, %v3961
          %v3963 = vand.u32 %v3962, 4294901760
          %3964 = vmatpush.msra.mxu0 %v3963
          %v3965 = vand.u32 %v3245, 4294901760
          %v3966 = vsub.f32 %v3245, %v3965
          %v3967 = vand.u32 %v3966, 4294901760
          %v3968 = vsub.f32 %v3966, %v3967
          %v3969 = vand.u32 %v3968, 4294901760
          %3970 = vmatpush.msra.mxu0 %v3969
          %v3971 = vand.u32 %v3240, 4294901760
          %v3972 = vsub.f32 %v3240, %v3971
          %v3973 = vand.u32 %v3972, 4294901760
          %v3974 = vsub.f32 %v3972, %v3973
          %v3975 = vand.u32 %v3974, 4294901760
          %3976 = vmatpush.msra.mxu0 %v3975
          %v3977 = vand.u32 %v3235, 4294901760
          %v3978 = vsub.f32 %v3235, %v3977
          %v3979 = vand.u32 %v3978, 4294901760
          %v3980 = vsub.f32 %v3978, %v3979
          %v3981 = vand.u32 %v3980, 4294901760
          %3982 = vmatpush.msra.mxu0 %v3981
          %v3983 = vand.u32 %v3230, 4294901760
          %v3984 = vsub.f32 %v3230, %v3983
          %v3985 = vand.u32 %v3984, 4294901760
          %v3986 = vsub.f32 %v3984, %v3985
          %v3987 = vand.u32 %v3986, 4294901760
          %3988 = vmatpush.msra.mxu0 %v3987
          %v3989 = vand.u32 %v3225, 4294901760
          %v3990 = vsub.f32 %v3225, %v3989
          %v3991 = vand.u32 %v3990, 4294901760
          %v3992 = vsub.f32 %v3990, %v3991
          %v3993 = vand.u32 %v3992, 4294901760
          %3994 = vmatpush.msra.mxu0 %v3993
          %v3995 = vand.u32 %v3283, 4294901760
          %3996 = vmatmul.f32.gmra.mxu0 %v3995
          %v3997 = vpop.f32.mrf.mxu0
          %v3998 = vadd.f32 %v3947, %v3997
          %3999 = vdwg.mxu0
          %4000 = vmatpush.msra.mxu0 0.0
          %4001 = vmatpush.msra.mxu0 0.0
          %4002 = vmatpush.msra.mxu0 0.0
          %4003 = vmatpush.msra.mxu0 0.0
          %4004 = vmatpush.msra.mxu0 0.0
          %4005 = vmatpush.msra.mxu0 0.0
          %4006 = vmatpush.msra.mxu0 0.0
          %4007 = vmatpush.msra.mxu0 0.0
          %4008 = vmatpush.msra.mxu0 0.0
          %4009 = vmatpush.msra.mxu0 0.0
          %v4010 = vand.u32 %v3250, 4294901760
          %v4011 = vsub.f32 %v3250, %v4010
          %4012 = vmatpush.msra.mxu0 %v4011
          %v4013 = vand.u32 %v3245, 4294901760
          %v4014 = vsub.f32 %v3245, %v4013
          %4015 = vmatpush.msra.mxu0 %v4014
          %v4016 = vand.u32 %v3240, 4294901760
          %v4017 = vsub.f32 %v3240, %v4016
          %4018 = vmatpush.msra.mxu0 %v4017
          %v4019 = vand.u32 %v3235, 4294901760
          %v4020 = vsub.f32 %v3235, %v4019
          %4021 = vmatpush.msra.mxu0 %v4020
          %v4022 = vand.u32 %v3230, 4294901760
          %v4023 = vsub.f32 %v3230, %v4022
          %4024 = vmatpush.msra.mxu0 %v4023
          %v4025 = vand.u32 %v3225, 4294901760
          %v4026 = vsub.f32 %v3225, %v4025
          %4027 = vmatpush.msra.mxu0 %v4026
          %v4028 = vand.u32 %v3283, 4294901760
          %v4029 = vsub.f32 %v3283, %v4028
          %4030 = vmatmul.f32.gmra.mxu0 %v4029
          %v4031 = vpop.f32.mrf.mxu0
          %v4032 = vadd.f32 %v3998, %v4031
          %4033 = vdwg.mxu0
          %4034 = vmatpush.msra.mxu0 0.0
          %4035 = vmatpush.msra.mxu0 0.0
          %4036 = vmatpush.msra.mxu0 0.0
          %4037 = vmatpush.msra.mxu0 0.0
          %4038 = vmatpush.msra.mxu0 0.0
          %4039 = vmatpush.msra.mxu0 0.0
          %4040 = vmatpush.msra.mxu0 0.0
          %4041 = vmatpush.msra.mxu0 0.0
          %4042 = vmatpush.msra.mxu0 0.0
          %4043 = vmatpush.msra.mxu0 0.0
          %v4044 = vand.u32 %v3250, 4294901760
          %4045 = vmatpush.msra.mxu0 %v4044
          %v4046 = vand.u32 %v3245, 4294901760
          %4047 = vmatpush.msra.mxu0 %v4046
          %v4048 = vand.u32 %v3240, 4294901760
          %4049 = vmatpush.msra.mxu0 %v4048
          %v4050 = vand.u32 %v3235, 4294901760
          %4051 = vmatpush.msra.mxu0 %v4050
          %v4052 = vand.u32 %v3230, 4294901760
          %4053 = vmatpush.msra.mxu0 %v4052
          %v4054 = vand.u32 %v3225, 4294901760
          %4055 = vmatpush.msra.mxu0 %v4054
          %v4056 = vand.u32 %v3283, 4294901760
          %v4057 = vsub.f32 %v3283, %v4056
          %v4058 = vand.u32 %v4057, 4294901760
          %4059 = vmatmul.f32.gmra.mxu0 %v4058
          %v4060 = vpop.f32.mrf.mxu0
          %v4061 = vadd.f32 %v4032, %v4060
          %4062 = vdwg.mxu0
          %4063 = vmatpush.msra.mxu0 0.0
          %4064 = vmatpush.msra.mxu0 0.0
          %4065 = vmatpush.msra.mxu0 0.0
          %4066 = vmatpush.msra.mxu0 0.0
          %4067 = vmatpush.msra.mxu0 0.0
          %4068 = vmatpush.msra.mxu0 0.0
          %4069 = vmatpush.msra.mxu0 0.0
          %4070 = vmatpush.msra.mxu0 0.0
          %4071 = vmatpush.msra.mxu0 0.0
          %4072 = vmatpush.msra.mxu0 0.0
          %v4073 = vand.u32 %v3250, 4294901760
          %v4074 = vsub.f32 %v3250, %v4073
          %v4075 = vand.u32 %v4074, 4294901760
          %4076 = vmatpush.msra.mxu0 %v4075
          %v4077 = vand.u32 %v3245, 4294901760
          %v4078 = vsub.f32 %v3245, %v4077
          %v4079 = vand.u32 %v4078, 4294901760
          %4080 = vmatpush.msra.mxu0 %v4079
          %v4081 = vand.u32 %v3240, 4294901760
          %v4082 = vsub.f32 %v3240, %v4081
          %v4083 = vand.u32 %v4082, 4294901760
          %4084 = vmatpush.msra.mxu0 %v4083
          %v4085 = vand.u32 %v3235, 4294901760
          %v4086 = vsub.f32 %v3235, %v4085
          %v4087 = vand.u32 %v4086, 4294901760
          %4088 = vmatpush.msra.mxu0 %v4087
          %v4089 = vand.u32 %v3230, 4294901760
          %v4090 = vsub.f32 %v3230, %v4089
          %v4091 = vand.u32 %v4090, 4294901760
          %4092 = vmatpush.msra.mxu0 %v4091
          %v4093 = vand.u32 %v3225, 4294901760
          %v4094 = vsub.f32 %v3225, %v4093
          %v4095 = vand.u32 %v4094, 4294901760
          %4096 = vmatpush.msra.mxu0 %v4095
          %v4097 = vand.u32 %v3283, 4294901760
          %4098 = vmatmul.f32.gmra.mxu0 %v4097
          %v4099 = vpop.f32.mrf.mxu0
          %v4100 = vadd.f32 %v4061, %v4099
          %4101 = vdwg.mxu0
          %4102 = vmatpush.msra.mxu0 0.0
          %4103 = vmatpush.msra.mxu0 0.0
          %4104 = vmatpush.msra.mxu0 0.0
          %4105 = vmatpush.msra.mxu0 0.0
          %4106 = vmatpush.msra.mxu0 0.0
          %4107 = vmatpush.msra.mxu0 0.0
          %4108 = vmatpush.msra.mxu0 0.0
          %4109 = vmatpush.msra.mxu0 0.0
          %4110 = vmatpush.msra.mxu0 0.0
          %4111 = vmatpush.msra.mxu0 0.0
          %v4112 = vand.u32 %v3250, 4294901760
          %4113 = vmatpush.msra.mxu0 %v4112
          %v4114 = vand.u32 %v3245, 4294901760
          %4115 = vmatpush.msra.mxu0 %v4114
          %v4116 = vand.u32 %v3240, 4294901760
          %4117 = vmatpush.msra.mxu0 %v4116
          %v4118 = vand.u32 %v3235, 4294901760
          %4119 = vmatpush.msra.mxu0 %v4118
          %v4120 = vand.u32 %v3230, 4294901760
          %4121 = vmatpush.msra.mxu0 %v4120
          %v4122 = vand.u32 %v3225, 4294901760
          %4123 = vmatpush.msra.mxu0 %v4122
          %v4124 = vand.u32 %v3283, 4294901760
          %4125 = vmatmul.f32.gmra.mxu0 %v4124
          %v4126 = vpop.f32.mrf.mxu0
          %v4127 = vadd.f32 %v4100, %v4126
          %4128 = vdwg.mxu0
          %4129 = vmatpush.msra.mxu0 0.0
          %4130 = vmatpush.msra.mxu0 0.0
          %4131 = vmatpush.msra.mxu0 0.0
          %4132 = vmatpush.msra.mxu0 0.0
          %4133 = vmatpush.msra.mxu0 0.0
          %4134 = vmatpush.msra.mxu0 0.0
          %4135 = vmatpush.msra.mxu0 0.0
          %4136 = vmatpush.msra.mxu0 0.0
          %4137 = vmatpush.msra.mxu0 0.0
          %4138 = vmatpush.msra.mxu0 0.0
          %v4139 = vand.u32 %v3251, 4294901760
          %4140 = vmatpush.msra.mxu0 %v4139
          %v4141 = vand.u32 %v3246, 4294901760
          %4142 = vmatpush.msra.mxu0 %v4141
          %v4143 = vand.u32 %v3241, 4294901760
          %4144 = vmatpush.msra.mxu0 %v4143
          %v4145 = vand.u32 %v3236, 4294901760
          %4146 = vmatpush.msra.mxu0 %v4145
          %v4147 = vand.u32 %v3231, 4294901760
          %4148 = vmatpush.msra.mxu0 %v4147
          %v4149 = vand.u32 %v3226, 4294901760
          %4150 = vmatpush.msra.mxu0 %v4149
          %v4151 = vand.u32 %v3283, 4294901760
          %v4152 = vsub.f32 %v3283, %v4151
          %v4153 = vand.u32 %v4152, 4294901760
          %v4154 = vsub.f32 %v4152, %v4153
          %v4155 = vand.u32 %v4154, 4294901760
          %4156 = vmatmul.f32.gmra.mxu0 %v4155
          %v4157 = vpop.f32.mrf.mxu0
          %v4158 = vadd.f32 0.0, %v4157
          %4159 = vdwg.mxu0
          %4160 = vmatpush.msra.mxu0 0.0
          %4161 = vmatpush.msra.mxu0 0.0
          %4162 = vmatpush.msra.mxu0 0.0
          %4163 = vmatpush.msra.mxu0 0.0
          %4164 = vmatpush.msra.mxu0 0.0
          %4165 = vmatpush.msra.mxu0 0.0
          %4166 = vmatpush.msra.mxu0 0.0
          %4167 = vmatpush.msra.mxu0 0.0
          %4168 = vmatpush.msra.mxu0 0.0
          %4169 = vmatpush.msra.mxu0 0.0
          %v4170 = vand.u32 %v3251, 4294901760
          %v4171 = vsub.f32 %v3251, %v4170
          %v4172 = vand.u32 %v4171, 4294901760
          %v4173 = vsub.f32 %v4171, %v4172
          %v4174 = vand.u32 %v4173, 4294901760
          %4175 = vmatpush.msra.mxu0 %v4174
          %v4176 = vand.u32 %v3246, 4294901760
          %v4177 = vsub.f32 %v3246, %v4176
          %v4178 = vand.u32 %v4177, 4294901760
          %v4179 = vsub.f32 %v4177, %v4178
          %v4180 = vand.u32 %v4179, 4294901760
          %4181 = vmatpush.msra.mxu0 %v4180
          %v4182 = vand.u32 %v3241, 4294901760
          %v4183 = vsub.f32 %v3241, %v4182
          %v4184 = vand.u32 %v4183, 4294901760
          %v4185 = vsub.f32 %v4183, %v4184
          %v4186 = vand.u32 %v4185, 4294901760
          %4187 = vmatpush.msra.mxu0 %v4186
          %v4188 = vand.u32 %v3236, 4294901760
          %v4189 = vsub.f32 %v3236, %v4188
          %v4190 = vand.u32 %v4189, 4294901760
          %v4191 = vsub.f32 %v4189, %v4190
          %v4192 = vand.u32 %v4191, 4294901760
          %4193 = vmatpush.msra.mxu0 %v4192
          %v4194 = vand.u32 %v3231, 4294901760
          %v4195 = vsub.f32 %v3231, %v4194
          %v4196 = vand.u32 %v4195, 4294901760
          %v4197 = vsub.f32 %v4195, %v4196
          %v4198 = vand.u32 %v4197, 4294901760
          %4199 = vmatpush.msra.mxu0 %v4198
          %v4200 = vand.u32 %v3226, 4294901760
          %v4201 = vsub.f32 %v3226, %v4200
          %v4202 = vand.u32 %v4201, 4294901760
          %v4203 = vsub.f32 %v4201, %v4202
          %v4204 = vand.u32 %v4203, 4294901760
          %4205 = vmatpush.msra.mxu0 %v4204
          %v4206 = vand.u32 %v3283, 4294901760
          %4207 = vmatmul.f32.gmra.mxu0 %v4206
          %v4208 = vpop.f32.mrf.mxu0
          %v4209 = vadd.f32 %v4158, %v4208
          %4210 = vdwg.mxu0
          %4211 = vmatpush.msra.mxu0 0.0
          %4212 = vmatpush.msra.mxu0 0.0
          %4213 = vmatpush.msra.mxu0 0.0
          %4214 = vmatpush.msra.mxu0 0.0
          %4215 = vmatpush.msra.mxu0 0.0
          %4216 = vmatpush.msra.mxu0 0.0
          %4217 = vmatpush.msra.mxu0 0.0
          %4218 = vmatpush.msra.mxu0 0.0
          %4219 = vmatpush.msra.mxu0 0.0
          %4220 = vmatpush.msra.mxu0 0.0
          %v4221 = vand.u32 %v3251, 4294901760
          %v4222 = vsub.f32 %v3251, %v4221
          %4223 = vmatpush.msra.mxu0 %v4222
          %v4224 = vand.u32 %v3246, 4294901760
          %v4225 = vsub.f32 %v3246, %v4224
          %4226 = vmatpush.msra.mxu0 %v4225
          %v4227 = vand.u32 %v3241, 4294901760
          %v4228 = vsub.f32 %v3241, %v4227
          %4229 = vmatpush.msra.mxu0 %v4228
          %v4230 = vand.u32 %v3236, 4294901760
          %v4231 = vsub.f32 %v3236, %v4230
          %4232 = vmatpush.msra.mxu0 %v4231
          %v4233 = vand.u32 %v3231, 4294901760
          %v4234 = vsub.f32 %v3231, %v4233
          %4235 = vmatpush.msra.mxu0 %v4234
          %v4236 = vand.u32 %v3226, 4294901760
          %v4237 = vsub.f32 %v3226, %v4236
          %4238 = vmatpush.msra.mxu0 %v4237
          %v4239 = vand.u32 %v3283, 4294901760
          %v4240 = vsub.f32 %v3283, %v4239
          %4241 = vmatmul.f32.gmra.mxu0 %v4240
          %v4242 = vpop.f32.mrf.mxu0
          %v4243 = vadd.f32 %v4209, %v4242
          %4244 = vdwg.mxu0
          %4245 = vmatpush.msra.mxu0 0.0
          %4246 = vmatpush.msra.mxu0 0.0
          %4247 = vmatpush.msra.mxu0 0.0
          %4248 = vmatpush.msra.mxu0 0.0
          %4249 = vmatpush.msra.mxu0 0.0
          %4250 = vmatpush.msra.mxu0 0.0
          %4251 = vmatpush.msra.mxu0 0.0
          %4252 = vmatpush.msra.mxu0 0.0
          %4253 = vmatpush.msra.mxu0 0.0
          %4254 = vmatpush.msra.mxu0 0.0
          %v4255 = vand.u32 %v3251, 4294901760
          %4256 = vmatpush.msra.mxu0 %v4255
          %v4257 = vand.u32 %v3246, 4294901760
          %4258 = vmatpush.msra.mxu0 %v4257
          %v4259 = vand.u32 %v3241, 4294901760
          %4260 = vmatpush.msra.mxu0 %v4259
          %v4261 = vand.u32 %v3236, 4294901760
          %4262 = vmatpush.msra.mxu0 %v4261
          %v4263 = vand.u32 %v3231, 4294901760
          %4264 = vmatpush.msra.mxu0 %v4263
          %v4265 = vand.u32 %v3226, 4294901760
          %4266 = vmatpush.msra.mxu0 %v4265
          %v4267 = vand.u32 %v3283, 4294901760
          %v4268 = vsub.f32 %v3283, %v4267
          %v4269 = vand.u32 %v4268, 4294901760
          %4270 = vmatmul.f32.gmra.mxu0 %v4269
          %v4271 = vpop.f32.mrf.mxu0
          %v4272 = vadd.f32 %v4243, %v4271
          %4273 = vdwg.mxu0
          %4274 = vmatpush.msra.mxu0 0.0
          %4275 = vmatpush.msra.mxu0 0.0
          %4276 = vmatpush.msra.mxu0 0.0
          %4277 = vmatpush.msra.mxu0 0.0
          %4278 = vmatpush.msra.mxu0 0.0
          %4279 = vmatpush.msra.mxu0 0.0
          %4280 = vmatpush.msra.mxu0 0.0
          %4281 = vmatpush.msra.mxu0 0.0
          %4282 = vmatpush.msra.mxu0 0.0
          %4283 = vmatpush.msra.mxu0 0.0
          %v4284 = vand.u32 %v3251, 4294901760
          %v4285 = vsub.f32 %v3251, %v4284
          %v4286 = vand.u32 %v4285, 4294901760
          %4287 = vmatpush.msra.mxu0 %v4286
          %v4288 = vand.u32 %v3246, 4294901760
          %v4289 = vsub.f32 %v3246, %v4288
          %v4290 = vand.u32 %v4289, 4294901760
          %4291 = vmatpush.msra.mxu0 %v4290
          %v4292 = vand.u32 %v3241, 4294901760
          %v4293 = vsub.f32 %v3241, %v4292
          %v4294 = vand.u32 %v4293, 4294901760
          %4295 = vmatpush.msra.mxu0 %v4294
          %v4296 = vand.u32 %v3236, 4294901760
          %v4297 = vsub.f32 %v3236, %v4296
          %v4298 = vand.u32 %v4297, 4294901760
          %4299 = vmatpush.msra.mxu0 %v4298
          %v4300 = vand.u32 %v3231, 4294901760
          %v4301 = vsub.f32 %v3231, %v4300
          %v4302 = vand.u32 %v4301, 4294901760
          %4303 = vmatpush.msra.mxu0 %v4302
          %v4304 = vand.u32 %v3226, 4294901760
          %v4305 = vsub.f32 %v3226, %v4304
          %v4306 = vand.u32 %v4305, 4294901760
          %4307 = vmatpush.msra.mxu0 %v4306
          %v4308 = vand.u32 %v3283, 4294901760
          %4309 = vmatmul.f32.gmra.mxu0 %v4308
          %v4310 = vpop.f32.mrf.mxu0
          %v4311 = vadd.f32 %v4272, %v4310
          %4312 = vdwg.mxu0
          %4313 = vmatpush.msra.mxu0 0.0
          %4314 = vmatpush.msra.mxu0 0.0
          %4315 = vmatpush.msra.mxu0 0.0
          %4316 = vmatpush.msra.mxu0 0.0
          %4317 = vmatpush.msra.mxu0 0.0
          %4318 = vmatpush.msra.mxu0 0.0
          %4319 = vmatpush.msra.mxu0 0.0
          %4320 = vmatpush.msra.mxu0 0.0
          %4321 = vmatpush.msra.mxu0 0.0
          %4322 = vmatpush.msra.mxu0 0.0
          %v4323 = vand.u32 %v3251, 4294901760
          %4324 = vmatpush.msra.mxu0 %v4323
          %v4325 = vand.u32 %v3246, 4294901760
          %4326 = vmatpush.msra.mxu0 %v4325
          %v4327 = vand.u32 %v3241, 4294901760
          %4328 = vmatpush.msra.mxu0 %v4327
          %v4329 = vand.u32 %v3236, 4294901760
          %4330 = vmatpush.msra.mxu0 %v4329
          %v4331 = vand.u32 %v3231, 4294901760
          %4332 = vmatpush.msra.mxu0 %v4331
          %v4333 = vand.u32 %v3226, 4294901760
          %4334 = vmatpush.msra.mxu0 %v4333
          %v4335 = vand.u32 %v3283, 4294901760
          %4336 = vmatmul.f32.gmra.mxu0 %v4335
          %v4337 = vpop.f32.mrf.mxu0
          %v4338 = vadd.f32 %v4311, %v4337
          %4339 = vdwg.mxu0
          %v4340 = vadd.f32 %v2301, %v3494
          %v4341 = vadd.f32 %v2512, %v3705
          %v4342 = vadd.f32 %v2723, %v3916
          %v4343 = vadd.f32 %v2934, %v4127
          %v4344 = vadd.f32 %v3145, %v4338
          %v4345 = vld [vmem:[%s4] sm:$0xff]
          %4347 = vset.pattern.permute.xlu0 0
          %4348 = vperm.xlu0 %4347, %v4345
          %v4349 = vpop.permute.xlu0 %4348
          %v4351 = vadd.f32 %v4340, %v4349
          %v4352 = vadd.f32 %v4341, %v4349
          %v4353 = vadd.f32 %v4342, %v4349
          %v4354 = vadd.f32 %v4343, %v4349
          %v4355 = vadd.f32 %v4344, %v4349
          %4356 = vst [vmem:[%s502] sm:$0xff] %v4351
          %4357 = vst [vmem:[%s502 + $0x8] sm:$0xff] %v4352
          %4358 = vst [vmem:[%s502 + $0x10] sm:$0xff] %v4353
          %4359 = vst [vmem:[%s502 + $0x18] sm:$0xff] %v4354
          %4360 = vst [vmem:[%s502 + $0x20] sm:$0xff] %v4355
        $region98: #{coordconv_forward.1} parent=77 // pred_fallthru
          _
        %s4361 = ssub.s32 %s21, 1
        %p4362 = scmp.gt.s32.totalorder %s4361, 0
        %s4363 = scalar_select %p4362, %s4361, 0
        %s4364 = smul.u32 5, %s4363
        %p4365 = scmp.lt.s32.totalorder %s20, 1
        %s4366 = scalar_select %p4365, %s20, 1
        %p4367 = scmp.lt.s32.totalorder %s4364, 29
        %s4368 = scalar_select %p4367, %s4364, 29
        %s4369 = smul.addr %s4366, 30
        %s4370 = sadd.s32 %s4368, %s4369
        %s4371 = smul.addr %s4370, 8
        %s4372 = scalar_lea.vmem %s5, %s4371
        // Predicated region
        $region99: #{coordconv_forward.1} parent=77 // pred_check
          %p4373 = pneg %p188
        $region100: #{coordconv_forward.1} parent=77 // pred_check_branch
          %4375 = sbr.rel (%p4373) target = $region102
        $region101: #{coordconv_forward.1} parent=77 // pred_region
          %s4376 = ssub.s32 %s21, 1
          %p4377 = scmp.gt.s32.totalorder %s4376, 0
          %s4378 = scalar_select %p4377, %s4376, 0
          %s4379 = smul.u32 5, %s4378
        $region102: #{coordconv_forward.1} parent=77 // pred_fallthru
          _
      $region78: #{coordconv_forward.1} parent=5 // pred_fallthru
        _
      %p4380 = scmp.le.s32.totalorder 2, %s11
      // Predicated region
      $region103: #{coordconv_forward.1} parent=5 // pred_check
        %p4381 = pneg %p4380
      $region104: #{coordconv_forward.1} parent=5 // pred_check_branch
        %4383 = sbr.rel (%p4381) target = $region106
      $region105: #{coordconv_forward.1} parent=5 // pred_region
        %s4384 = ssub.s32 %s11, 2
        // Predicated region
        $region107: #{coordconv_forward.1} parent=105 // pred_check
          %p4385 = pneg %p194
        $region108: #{coordconv_forward.1} parent=105 // pred_check_branch
          %4387 = sbr.rel (%p4385) target = $region110
        $region109: #{coordconv_forward.1} parent=105 // pred_region
          %s4388 = ssub.s32 %s23, 1
          %p4389 = scmp.gt.s32.totalorder %s4388, 0
          %s4390 = scalar_select %p4389, %s4388, 0
          %s4391 = smul.u32 5, %s4390
          %p4392 = scmp.lt.s32.totalorder %s22, 1
          %s4393 = scalar_select %p4392, %s22, 1
          %p4394 = scmp.lt.s32.totalorder %s4391, 29
          %s4395 = scalar_select %p4394, %s4391, 29
          %s4396 = smul.addr %s4393, 30
          %s4397 = sadd.s32 %s4395, %s4396
          %s4398 = smul.addr %s4397, 8
          %s4399 = scalar_lea.vmem %s5, %s4398
        $region110: #{coordconv_forward.1} parent=105 // pred_fallthru
          _
      $region106: #{coordconv_forward.1} parent=5 // pred_fallthru
        _
    $region6: #{coordconv_forward.1} parent=1 // loop_footer
      %s15 = sadd.s32 1, %s11
    $region7: #{coordconv_forward.1} parent=1 // loop_footer_branch
      %10 = sbr.rel target = $region3
    $region8: #{coordconv_forward.1} parent=1 // loop_exit
      _

</llo_original>
